<compile_context>
chip_gen: v5e
topology: v5e:2x2
jax: 0.10.0
libtpu: 0.0.40
codegen_flags: <defaults>
</compile_context>

<pallas_src>
import math

import numpy as np

import jax
import jax.numpy as jnp
from jax.experimental import pallas as pl
from jax.experimental.pallas import tpu as pltpu


# ----------------------------------------------------------------------------
# ConvVAE configuration (small, consistent with the PyTorch module)
# ----------------------------------------------------------------------------
CNN_CHANNELS = [3, 8, 16]
INPUT_SIZE = 16
LATENT_DIM = 8
KERNEL, STRIDE, PAD = 3, 2, 1

MATMUL_DTYPE = jnp.bfloat16      # MXU operand dtype (accumulation stays f32)


def _out_size(size):
    return math.floor((size + 2 * PAD - (KERNEL - 1) - 1) / STRIDE + 1)


OUT_SIZE = INPUT_SIZE
for _ in range(len(CNN_CHANNELS) - 1):
    OUT_SIZE = _out_size(OUT_SIZE)
C_LAST = CNN_CHANNELS[-1]
FLAT = C_LAST * OUT_SIZE * OUT_SIZE


# ----------------------------------------------------------------------------
# Parameter init (PyTorch-layout tensors) and one-time densification
# ----------------------------------------------------------------------------
def init_params(key):
    """Deterministic synthetic parameters (shapes match the nn.Module)."""
    ks = jax.random.split(key, 16)
    p = {}
    idx = 0

    def nrm(k, shape, fan_in):
        return jax.random.normal(k, shape, jnp.float32) / math.sqrt(fan_in)

    # encoder convs: weight (Cout, Cin, k, k)
    for li, (ci, co) in enumerate(zip(CNN_CHANNELS[:-1], CNN_CHANNELS[1:])):
        p[f"enc_w{li}"] = nrm(ks[idx], (co, ci, KERNEL, KERNEL), ci * KERNEL * KERNEL); idx += 1
        p[f"enc_b{li}"] = 0.01 * jax.random.normal(ks[idx], (co,), jnp.float32); idx += 1
    # fc_enc: stored as (in, out) = (FLAT, 2*latent)
    p["fc_enc_w"] = nrm(ks[idx], (FLAT, 2 * LATENT_DIM), FLAT); idx += 1
    p["fc_enc_b"] = 0.01 * jax.random.normal(ks[idx], (2 * LATENT_DIM,), jnp.float32); idx += 1
    # fc_dec: (in, out) = (latent, FLAT)
    p["fc_dec_w"] = nrm(ks[idx], (LATENT_DIM, FLAT), LATENT_DIM); idx += 1
    p["fc_dec_b"] = 0.01 * jax.random.normal(ks[idx], (FLAT,), jnp.float32); idx += 1
    # decoder conv-transposes: PyTorch layout (Cin, Cout, k, k)
    rev = list(reversed(CNN_CHANNELS))
    for li, (ci, co) in enumerate(zip(rev[:-1], rev[1:])):
        p[f"dec_w{li}"] = nrm(ks[idx], (ci, co, KERNEL, KERNEL), ci * KERNEL * KERNEL); idx += 1
        p[f"dec_b{li}"] = 0.01 * jax.random.normal(ks[idx], (co,), jnp.float32); idx += 1
    return p


def _conv2d_matrix(w, H, W, stride, pad):
    """Dense matrix M of a PyTorch Conv2d: y_flat = x_flat @ M.
    x_flat is (ci,h,w) row-major, y_flat is (co,oh,ow) row-major."""
    w = np.asarray(w, np.float32)
    Cout, Cin, KH, KW = w.shape
    OH = (H + 2 * pad - KH) // stride + 1
    OW = (W + 2 * pad - KW) // stride + 1
    M = np.zeros((Cin, H, W, Cout, OH, OW), np.float32)
    for oh in range(OH):
        for ow in range(OW):
            for kh in range(KH):
                for kw in range(KW):
                    h = oh * stride + kh - pad
                    ww = ow * stride + kw - pad
                    if 0 <= h < H and 0 <= ww < W:
                        M[:, h, ww, :, oh, ow] += w[:, :, kh, kw].T   # (Cin, Cout)
    return M.reshape(Cin * H * W, Cout * OH * OW), OH, OW


def _conv_transpose2d_matrix(w, H, W, stride, pad, out_pad):
    """Dense matrix of a PyTorch ConvTranspose2d (weight (Cin, Cout, k, k)):
    y[co,oh,ow] = sum over {h,w,kh,kw : oh = h*s - pad + kh, ow = w*s - pad + kw}
                  of x[ci,h,w] * w[ci,co,kh,kw].  No dilated zero buffers."""
    w = np.asarray(w, np.float32)
    Cin, Cout, KH, KW = w.shape
    OH = (H - 1) * stride - 2 * pad + KH + out_pad
    OW = (W - 1) * stride - 2 * pad + KW + out_pad
    M = np.zeros((Cin, H, W, Cout, OH, OW), np.float32)
    for h in range(H):
        for ww in range(W):
            for kh in range(KH):
                for kw in range(KW):
                    oh = h * stride - pad + kh
                    ow = ww * stride - pad + kw
                    if 0 <= oh < OH and 0 <= ow < OW:
                        M[:, h, ww, :, oh, ow] += w[:, :, kh, kw]      # (Cin, Cout)
    return M.reshape(Cin * H * W, Cout * OH * OW), OH, OW


def prepare_params(params):
    """One-time (init-time) transform of the PyTorch-layout parameters into
    the dense, lane-aligned bf16 matrices + f32 expanded biases consumed by
    the fused kernel.  Runs once; nothing here is on the per-step path."""
    p = {}
    # encoder convs
    H = INPUT_SIZE
    for li in range(len(CNN_CHANNELS) - 1):
        M, OH, OW = _conv2d_matrix(params[f"enc_w{li}"], H, H, STRIDE, PAD)
        b = np.repeat(np.asarray(params[f"enc_b{li}"], np.float32), OH * OW)
        p[f"enc_m{li}"] = jnp.asarray(M, MATMUL_DTYPE)
        p[f"enc_b{li}"] = jnp.asarray(b[None, :], jnp.float32)
        H = OH
    # fc_enc, pre-split into mu / log_var halves (avoids in-kernel lane slicing)
    w = np.asarray(params["fc_enc_w"], np.float32)
    b = np.asarray(params["fc_enc_b"], np.float32)
    p["fc_mu_m"] = jnp.asarray(w[:, :LATENT_DIM], MATMUL_DTYPE)
    p["fc_mu_b"] = jnp.asarray(b[None, :LATENT_DIM], jnp.float32)
    p["fc_lv_m"] = jnp.asarray(w[:, LATENT_DIM:], MATMUL_DTYPE)
    p["fc_lv_b"] = jnp.asarray(b[None, LATENT_DIM:], jnp.float32)
    # fc_dec
    p["fc_dec_m"] = jnp.asarray(np.asarray(params["fc_dec_w"], np.float32), MATMUL_DTYPE)
    p["fc_dec_b"] = jnp.asarray(np.asarray(params["fc_dec_b"], np.float32)[None, :], jnp.float32)
    # decoder transposed convs
    H = OUT_SIZE
    rev = list(reversed(CNN_CHANNELS))
    for li in range(len(rev) - 1):
        M, OH, OW = _conv_transpose2d_matrix(params[f"dec_w{li}"], H, H, STRIDE, PAD, PAD)
        b = np.repeat(np.asarray(params[f"dec_b{li}"], np.float32), OH * OW)
        p[f"dec_m{li}"] = jnp.asarray(M, MATMUL_DTYPE)
        p[f"dec_b{li}"] = jnp.asarray(b[None, :], jnp.float32)
        H = OH
    return p


# ----------------------------------------------------------------------------
# The single fused Pallas kernel
# ----------------------------------------------------------------------------
def _vae_fused_kernel(x_ref, eps_ref,
                      em0_ref, eb0_ref, em1_ref, eb1_ref,
                      mum_ref, mub_ref, lvm_ref, lvb_ref,
                      fdm_ref, fdb_ref,
                      dm0_ref, db0_ref, dm1_ref, db1_ref,
                      recon_ref, mu_ref, logvar_ref):
    f32 = jnp.float32

    def dense(h, m_ref, b_ref):
        # Lane-dense MXU matmul: bf16 operands, f32 accumulation,
        # bias add in f32 on the VPU.
        y = jnp.dot(h.astype(m_ref.dtype), m_ref[...],
                    preferred_element_type=f32)
        return y + b_ref[...]

    # ---- encoder: each Conv2d(+ReLU) is one dense matmul (N = 512 / 256) ----
    h = x_ref[...].astype(f32)                        # (B, 3*16*16)
    h = jnp.maximum(dense(h, em0_ref, eb0_ref), 0.0)  # (B, 8*8*8)
    h = jnp.maximum(dense(h, em1_ref, eb1_ref), 0.0)  # (B, 16*4*4)

    mu = dense(h, mum_ref, mub_ref)                   # (B, LATENT)
    log_var = dense(h, lvm_ref, lvb_ref)              # (B, LATENT)

    # ---- reparameterize (fused: EUP exp + VPU fma) ----
    # TODO(synk): torch.randn_like is replaced by an eps input; use
    # pltpu.prng_seed / pltpu.prng_random_bits for on-device sampling if needed.
    z = mu + eps_ref[...].astype(f32) * jnp.exp(0.5 * log_var)

    # ---- decoder: fc_dec + two ConvTranspose2d as dense matmuls (N = 256/512/768) ----
    d = dense(z, fdm_ref, fdb_ref)                    # (B, 16*4*4)
    d = jnp.maximum(dense(d, dm0_ref, db0_ref), 0.0)  # (B, 8*8*8)
    d = jax.nn.sigmoid(dense(d, dm1_ref, db1_ref))    # (B, 3*16*16)

    recon_ref[...] = d.astype(recon_ref.dtype)
    mu_ref[...] = mu.astype(mu_ref.dtype)
    logvar_ref[...] = log_var.astype(logvar_ref.dtype)


def conv_vae_forward(prepared, x, eps):
    """x: (B, 3, H, W) NCHW.  Returns (reconstruction, mu, log_var)."""
    B = x.shape[0]
    n_flat = CNN_CHANNELS[0] * INPUT_SIZE * INPUT_SIZE
    x_flat = x.reshape(B, n_flat)                     # contiguous reshape (free)

    ins = (x_flat, eps,
           prepared["enc_m0"], prepared["enc_b0"],
           prepared["enc_m1"], prepared["enc_b1"],
           prepared["fc_mu_m"], prepared["fc_mu_b"],
           prepared["fc_lv_m"], prepared["fc_lv_b"],
           prepared["fc_dec_m"], prepared["fc_dec_b"],
           prepared["dec_m0"], prepared["dec_b0"],
           prepared["dec_m1"], prepared["dec_b1"])

    out_shapes = (jax.ShapeDtypeStruct((B, n_flat), jnp.float32),
                  jax.ShapeDtypeStruct((B, LATENT_DIM), jnp.float32),
                  jax.ShapeDtypeStruct((B, LATENT_DIM), jnp.float32))

    # grid=(1,) with full-array blocks: the whole problem (~2.1 MiB bf16
    # weights + tiny activations) is VMEM-resident for the single grid step,
    # so the (8,128) divisibility rule does not apply.
    in_specs = [pl.BlockSpec(a.shape, lambda i: (0, 0)) for a in ins]
    out_specs = tuple(pl.BlockSpec(s.shape, lambda i: (0, 0)) for s in out_shapes)

    recon_flat, mu, log_var = pl.pallas_call(
        _vae_fused_kernel,
        out_shape=out_shapes,
        grid=(1,),
        in_specs=in_specs,
        out_specs=out_specs,
        compiler_params=pltpu.CompilerParams(
            dimension_semantics=("arbitrary",),
            vmem_limit_bytes=32 * 1024 * 1024),
    )(*ins)

    recon = recon_flat.reshape(B, CNN_CHANNELS[0], INPUT_SIZE, INPUT_SIZE)
    return recon, mu, log_var


# ----------------------------------------------------------------------------
# Pure-JAX reference (PyTorch semantics) used only for verification
# ----------------------------------------------------------------------------
def _ref_conv2d(x, w, b, stride, pad):
    B, C, H, W = x.shape
    Cout, _, k, _ = w.shape
    xp = jnp.pad(x, ((0, 0), (0, 0), (pad, pad), (pad, pad)))
    OH = (H + 2 * pad - k) // stride + 1
    OW = (W + 2 * pad - k) // stride + 1
    cols = []
    for dh in range(k):
        for dw in range(k):
            cols.append(xp[:, :, dh:dh + stride * OH:stride,
                              dw:dw + stride * OW:stride])
    patches = jnp.stack(cols, axis=2).reshape(B, C * k * k, OH * OW)
    patches = patches.transpose(0, 2, 1).reshape(B * OH * OW, C * k * k)
    y = patches @ w.reshape(Cout, C * k * k).T + b
    return y.reshape(B, OH, OW, Cout).transpose(0, 3, 1, 2)


def _ref_conv_transpose2d(x, w, b, stride, pad, out_pad):
    B, C, H, W = x.shape
    k = w.shape[2]
    Hd, Wd = (H - 1) * stride + 1, (W - 1) * stride + 1
    xd = jnp.zeros((B, C, Hd, Wd), x.dtype).at[:, :, ::stride, ::stride].set(x)
    pb, pa = k - 1 - pad, k - 1 - pad + out_pad
    xp = jnp.pad(xd, ((0, 0), (0, 0), (pb, pa), (pb, pa)))
    w_eq = jnp.flip(w, axis=(2, 3)).transpose(1, 0, 2, 3)
    return _ref_conv2d(xp, w_eq, b, stride=1, pad=0)


def conv_vae_reference(params, x, eps):
    B = x.shape[0]
    h = x
    for li in range(len(CNN_CHANNELS) - 1):
        h = jax.nn.relu(_ref_conv2d(h, params[f"enc_w{li}"],
                                    params[f"enc_b{li}"], STRIDE, PAD))
    h = h.reshape(B, -1)
    stats = h @ params["fc_enc_w"] + params["fc_enc_b"]
    mu, log_var = stats[:, :LATENT_DIM], stats[:, LATENT_DIM:]
    z = mu + eps * jnp.exp(0.5 * log_var)
    d = (z @ params["fc_dec_w"] + params["fc_dec_b"]).reshape(
        B, C_LAST, OUT_SIZE, OUT_SIZE)
    rev = list(reversed(CNN_CHANNELS))
    for li, co in enumerate(rev[1:]):
        d = _ref_conv_transpose2d(d, params[f"dec_w{li}"], params[f"dec_b{li}"],
                                  STRIDE, PAD, PAD)
        d = jax.nn.sigmoid(d) if co == CNN_CHANNELS[0] else jax.nn.relu(d)
    return d, mu, log_var


# ----------------------------------------------------------------------------
if __name__ == "__main__":
    root = jax.random.PRNGKey(0)
    k_x, k_eps, k_params = jax.random.split(root, 3)

    B = 2
    x = jax.random.uniform(k_x, (B, CNN_CHANNELS[0], INPUT_SIZE, INPUT_SIZE),
                           jnp.float32)
    # eps ~ N(0,1), drawn once (deterministic stand-in for torch.randn_like)
    eps = jax.random.normal(k_eps, (B, LATENT_DIM), jnp.float32)

    params = init_params(k_params)        # PyTorch-layout parameters
    prepared = prepare_params(params)     # one-time dense / lane-aligned form

    fwd = jax.jit(conv_vae_forward)
    recon, mu, log_var = fwd(prepared, x, eps)
    jax.block_until_ready((recon, mu, log_var))

    # shape / sanity checks
    assert recon.shape == x.shape, (recon.shape, x.shape)
    assert mu.shape == (B, LATENT_DIM) and log_var.shape == (B, LATENT_DIM)
    assert bool(jnp.all(jnp.isfinite(recon)))
    assert bool(jnp.all((recon >= 0.0) & (recon <= 1.0)))   # final Sigmoid

    # numerical check vs the f32 pure-JAX reference (generous tolerance
    # because the kernel uses bf16 MXU operands with f32 accumulation).
    r_recon, r_mu, r_lv = jax.jit(conv_vae_reference)(params, x, eps)
    tol = 1e-1
    assert float(jnp.max(jnp.abs(recon - r_recon))) < tol
    assert float(jnp.max(jnp.abs(mu - r_mu))) < tol
    assert float(jnp.max(jnp.abs(log_var - r_lv))) < tol

    print("KERNEL_OK")
</pallas_src>

<mosaic_0001>
module attributes {stable_mosaic.version = 11 : i64} {
  func.func @_vae_fused_kernel(%arg0: i32, %arg1: memref<2x768xf32, #tpu.memory_space<vmem>>, %arg2: memref<2x8xf32, #tpu.memory_space<vmem>>, %arg3: memref<768x512xbf16, #tpu.memory_space<vmem>>, %arg4: memref<1x512xf32, #tpu.memory_space<vmem>>, %arg5: memref<512x256xbf16, #tpu.memory_space<vmem>>, %arg6: memref<1x256xf32, #tpu.memory_space<vmem>>, %arg7: memref<256x8xbf16, #tpu.memory_space<vmem>>, %arg8: memref<1x8xf32, #tpu.memory_space<vmem>>, %arg9: memref<256x8xbf16, #tpu.memory_space<vmem>>, %arg10: memref<1x8xf32, #tpu.memory_space<vmem>>, %arg11: memref<8x256xbf16, #tpu.memory_space<vmem>>, %arg12: memref<1x256xf32, #tpu.memory_space<vmem>>, %arg13: memref<256x512xbf16, #tpu.memory_space<vmem>>, %arg14: memref<1x512xf32, #tpu.memory_space<vmem>>, %arg15: memref<512x768xbf16, #tpu.memory_space<vmem>>, %arg16: memref<1x768xf32, #tpu.memory_space<vmem>>, %arg17: memref<2x768xf32, #tpu.memory_space<vmem>>, %arg18: memref<2x8xf32, #tpu.memory_space<vmem>>, %arg19: memref<2x8xf32, #tpu.memory_space<vmem>>) attributes {dimension_semantics = [#tpu.dimension_semantics<arbitrary>], iteration_bounds = array<i64: 1>, scalar_prefetch = 0 : i64, scratch_operands = 0 : i64, tpu.core_type = #tpu.core_type<tc>, window_params = [{pipeline_mode = #tpu.pipeline_mode<synchronous>, transform_indices = @transform_0, window_bounds = array<i64: 2, 768>}, {pipeline_mode = #tpu.pipeline_mode<synchronous>, transform_indices = @transform_1, window_bounds = array<i64: 2, 8>}, {pipeline_mode = #tpu.pipeline_mode<synchronous>, transform_indices = @transform_2, window_bounds = array<i64: 768, 512>}, {pipeline_mode = #tpu.pipeline_mode<synchronous>, transform_indices = @transform_3, window_bounds = array<i64: 1, 512>}, {pipeline_mode = #tpu.pipeline_mode<synchronous>, transform_indices = @transform_4, window_bounds = array<i64: 512, 256>}, {pipeline_mode = #tpu.pipeline_mode<synchronous>, transform_indices = @transform_5, window_bounds = array<i64: 1, 256>}, {pipeline_mode = #tpu.pipeline_mode<synchronous>, transform_indices = @transform_6, window_bounds = array<i64: 256, 8>}, {pipeline_mode = #tpu.pipeline_mode<synchronous>, transform_indices = @transform_7, window_bounds = array<i64: 1, 8>}, {pipeline_mode = #tpu.pipeline_mode<synchronous>, transform_indices = @transform_8, window_bounds = array<i64: 256, 8>}, {pipeline_mode = #tpu.pipeline_mode<synchronous>, transform_indices = @transform_9, window_bounds = array<i64: 1, 8>}, {pipeline_mode = #tpu.pipeline_mode<synchronous>, transform_indices = @transform_10, window_bounds = array<i64: 8, 256>}, {pipeline_mode = #tpu.pipeline_mode<synchronous>, transform_indices = @transform_11, window_bounds = array<i64: 1, 256>}, {pipeline_mode = #tpu.pipeline_mode<synchronous>, transform_indices = @transform_12, window_bounds = array<i64: 256, 512>}, {pipeline_mode = #tpu.pipeline_mode<synchronous>, transform_indices = @transform_13, window_bounds = array<i64: 1, 512>}, {pipeline_mode = #tpu.pipeline_mode<synchronous>, transform_indices = @transform_14, window_bounds = array<i64: 512, 768>}, {pipeline_mode = #tpu.pipeline_mode<synchronous>, transform_indices = @transform_15, window_bounds = array<i64: 1, 768>}, {pipeline_mode = #tpu.pipeline_mode<synchronous>, transform_indices = @transform_16, window_bounds = array<i64: 2, 768>}, {pipeline_mode = #tpu.pipeline_mode<synchronous>, transform_indices = @transform_17, window_bounds = array<i64: 2, 8>}, {pipeline_mode = #tpu.pipeline_mode<synchronous>, transform_indices = @transform_18, window_bounds = array<i64: 2, 8>}]} {
    %c0 = arith.constant 0 : index
    %c0_0 = arith.constant 0 : index
    %0 = vector.load %arg1[%c0, %c0_0] : memref<2x768xf32, #tpu.memory_space<vmem>>, vector<2x768xf32>
    %1 = arith.truncf %0 : vector<2x768xf32> to vector<2x768xbf16>
    %c0_1 = arith.constant 0 : index
    %c0_2 = arith.constant 0 : index
    %2 = vector.load %arg3[%c0_1, %c0_2] : memref<768x512xbf16, #tpu.memory_space<vmem>>, vector<768x512xbf16>
    %cst = arith.constant dense<0.000000e+00> : vector<2x512xf32>
    %3 = tpu.matmul %1, %2, %cst {dimension_numbers = #tpu.dot_dimension_numbers<[1], [0], [0], [1], [0, 0, 1, 1], [], []>} : vector<2x768xbf16>, vector<768x512xbf16>, vector<2x512xf32> -> vector<2x512xf32>
    %c0_3 = arith.constant 0 : index
    %c0_4 = arith.constant 0 : index
    %4 = vector.load %arg4[%c0_3, %c0_4] : memref<1x512xf32, #tpu.memory_space<vmem>>, vector<1x512xf32>
    %5 = vector.broadcast %4 : vector<1x512xf32> to vector<2x512xf32>
    %6 = arith.addf %3, %5 : vector<2x512xf32>
    %cst_5 = arith.constant 0.000000e+00 : f32
    %7 = vector.broadcast %cst_5 : f32 to vector<2x512xf32>
    %8 = arith.maximumf %6, %7 : vector<2x512xf32>
    %9 = arith.truncf %8 : vector<2x512xf32> to vector<2x512xbf16>
    %c0_6 = arith.constant 0 : index
    %c0_7 = arith.constant 0 : index
    %10 = vector.load %arg5[%c0_6, %c0_7] : memref<512x256xbf16, #tpu.memory_space<vmem>>, vector<512x256xbf16>
    %cst_8 = arith.constant dense<0.000000e+00> : vector<2x256xf32>
    %11 = tpu.matmul %9, %10, %cst_8 {dimension_numbers = #tpu.dot_dimension_numbers<[1], [0], [0], [1], [0, 0, 1, 1], [], []>} : vector<2x512xbf16>, vector<512x256xbf16>, vector<2x256xf32> -> vector<2x256xf32>
    %c0_9 = arith.constant 0 : index
    %c0_10 = arith.constant 0 : index
    %12 = vector.load %arg6[%c0_9, %c0_10] : memref<1x256xf32, #tpu.memory_space<vmem>>, vector<1x256xf32>
    %13 = vector.broadcast %12 : vector<1x256xf32> to vector<2x256xf32>
    %14 = arith.addf %11, %13 : vector<2x256xf32>
    %cst_11 = arith.constant 0.000000e+00 : f32
    %15 = vector.broadcast %cst_11 : f32 to vector<2x256xf32>
    %16 = arith.maximumf %14, %15 : vector<2x256xf32>
    %17 = arith.truncf %16 : vector<2x256xf32> to vector<2x256xbf16>
    %c0_12 = arith.constant 0 : index
    %c0_13 = arith.constant 0 : index
    %18 = vector.load %arg7[%c0_12, %c0_13] : memref<256x8xbf16, #tpu.memory_space<vmem>>, vector<256x8xbf16>
    %cst_14 = arith.constant dense<0.000000e+00> : vector<2x8xf32>
    %19 = tpu.matmul %17, %18, %cst_14 {dimension_numbers = #tpu.dot_dimension_numbers<[1], [0], [0], [1], [0, 0, 1, 1], [], []>} : vector<2x256xbf16>, vector<256x8xbf16>, vector<2x8xf32> -> vector<2x8xf32>
    %c0_15 = arith.constant 0 : index
    %c0_16 = arith.constant 0 : index
    %20 = vector.load %arg8[%c0_15, %c0_16] : memref<1x8xf32, #tpu.memory_space<vmem>>, vector<1x8xf32>
    %21 = vector.broadcast %20 : vector<1x8xf32> to vector<2x8xf32>
    %22 = arith.addf %19, %21 : vector<2x8xf32>
    %23 = arith.truncf %16 : vector<2x256xf32> to vector<2x256xbf16>
    %c0_17 = arith.constant 0 : index
    %c0_18 = arith.constant 0 : index
    %24 = vector.load %arg9[%c0_17, %c0_18] : memref<256x8xbf16, #tpu.memory_space<vmem>>, vector<256x8xbf16>
    %cst_19 = arith.constant dense<0.000000e+00> : vector<2x8xf32>
    %25 = tpu.matmul %23, %24, %cst_19 {dimension_numbers = #tpu.dot_dimension_numbers<[1], [0], [0], [1], [0, 0, 1, 1], [], []>} : vector<2x256xbf16>, vector<256x8xbf16>, vector<2x8xf32> -> vector<2x8xf32>
    %c0_20 = arith.constant 0 : index
    %c0_21 = arith.constant 0 : index
    %26 = vector.load %arg10[%c0_20, %c0_21] : memref<1x8xf32, #tpu.memory_space<vmem>>, vector<1x8xf32>
    %27 = vector.broadcast %26 : vector<1x8xf32> to vector<2x8xf32>
    %28 = arith.addf %25, %27 : vector<2x8xf32>
    %c0_22 = arith.constant 0 : index
    %c0_23 = arith.constant 0 : index
    %29 = vector.load %arg2[%c0_22, %c0_23] : memref<2x8xf32, #tpu.memory_space<vmem>>, vector<2x8xf32>
    %cst_24 = arith.constant 5.000000e-01 : f32
    %30 = vector.broadcast %cst_24 : f32 to vector<2x8xf32>
    %31 = arith.mulf %30, %28 : vector<2x8xf32>
    %32 = math.exp %31 : vector<2x8xf32>
    %33 = arith.mulf %29, %32 : vector<2x8xf32>
    %34 = arith.addf %22, %33 : vector<2x8xf32>
    %35 = arith.truncf %34 : vector<2x8xf32> to vector<2x8xbf16>
    %c0_25 = arith.constant 0 : index
    %c0_26 = arith.constant 0 : index
    %36 = vector.load %arg11[%c0_25, %c0_26] : memref<8x256xbf16, #tpu.memory_space<vmem>>, vector<8x256xbf16>
    %cst_27 = arith.constant dense<0.000000e+00> : vector<2x256xf32>
    %37 = tpu.matmul %35, %36, %cst_27 {dimension_numbers = #tpu.dot_dimension_numbers<[1], [0], [0], [1], [0, 0, 1, 1], [], []>} : vector<2x8xbf16>, vector<8x256xbf16>, vector<2x256xf32> -> vector<2x256xf32>
    %c0_28 = arith.constant 0 : index
    %c0_29 = arith.constant 0 : index
    %38 = vector.load %arg12[%c0_28, %c0_29] : memref<1x256xf32, #tpu.memory_space<vmem>>, vector<1x256xf32>
    %39 = vector.broadcast %38 : vector<1x256xf32> to vector<2x256xf32>
    %40 = arith.addf %37, %39 : vector<2x256xf32>
    %41 = arith.truncf %40 : vector<2x256xf32> to vector<2x256xbf16>
    %c0_30 = arith.constant 0 : index
    %c0_31 = arith.constant 0 : index
    %42 = vector.load %arg13[%c0_30, %c0_31] : memref<256x512xbf16, #tpu.memory_space<vmem>>, vector<256x512xbf16>
    %cst_32 = arith.constant dense<0.000000e+00> : vector<2x512xf32>
    %43 = tpu.matmul %41, %42, %cst_32 {dimension_numbers = #tpu.dot_dimension_numbers<[1], [0], [0], [1], [0, 0, 1, 1], [], []>} : vector<2x256xbf16>, vector<256x512xbf16>, vector<2x512xf32> -> vector<2x512xf32>
    %c0_33 = arith.constant 0 : index
    %c0_34 = arith.constant 0 : index
    %44 = vector.load %arg14[%c0_33, %c0_34] : memref<1x512xf32, #tpu.memory_space<vmem>>, vector<1x512xf32>
    %45 = vector.broadcast %44 : vector<1x512xf32> to vector<2x512xf32>
    %46 = arith.addf %43, %45 : vector<2x512xf32>
    %cst_35 = arith.constant 0.000000e+00 : f32
    %47 = vector.broadcast %cst_35 : f32 to vector<2x512xf32>
    %48 = arith.maximumf %46, %47 : vector<2x512xf32>
    %49 = arith.truncf %48 : vector<2x512xf32> to vector<2x512xbf16>
    %c0_36 = arith.constant 0 : index
    %c0_37 = arith.constant 0 : index
    %50 = vector.load %arg15[%c0_36, %c0_37] : memref<512x768xbf16, #tpu.memory_space<vmem>>, vector<512x768xbf16>
    %cst_38 = arith.constant dense<0.000000e+00> : vector<2x768xf32>
    %51 = tpu.matmul %49, %50, %cst_38 {dimension_numbers = #tpu.dot_dimension_numbers<[1], [0], [0], [1], [0, 0, 1, 1], [], []>} : vector<2x512xbf16>, vector<512x768xbf16>, vector<2x768xf32> -> vector<2x768xf32>
    %c0_39 = arith.constant 0 : index
    %c0_40 = arith.constant 0 : index
    %52 = vector.load %arg16[%c0_39, %c0_40] : memref<1x768xf32, #tpu.memory_space<vmem>>, vector<1x768xf32>
    %53 = vector.broadcast %52 : vector<1x768xf32> to vector<2x768xf32>
    %54 = arith.addf %51, %53 : vector<2x768xf32>
    %55 = arith.negf %54 : vector<2x768xf32>
    %56 = math.exp %55 : vector<2x768xf32>
    %cst_41 = arith.constant 1.000000e+00 : f32
    %57 = vector.broadcast %cst_41 : f32 to vector<2x768xf32>
    %58 = arith.addf %57, %56 : vector<2x768xf32>
    %59 = arith.divf %57, %58 : vector<2x768xf32>
    %c0_42 = arith.constant 0 : index
    %c0_43 = arith.constant 0 : index
    %60 = vector.load %arg17[%c0_42, %c0_43] : memref<2x768xf32, #tpu.memory_space<vmem>>, vector<2x768xf32>
    tpu.vector_store %arg17[%c0_42, %c0_43], %59 {strides = array<i32>} : memref<2x768xf32, #tpu.memory_space<vmem>>, vector<2x768xf32>,
    %c0_44 = arith.constant 0 : index
    %c0_45 = arith.constant 0 : index
    %61 = vector.load %arg18[%c0_44, %c0_45] : memref<2x8xf32, #tpu.memory_space<vmem>>, vector<2x8xf32>
    tpu.vector_store %arg18[%c0_44, %c0_45], %22 {strides = array<i32>} : memref<2x8xf32, #tpu.memory_space<vmem>>, vector<2x8xf32>,
    %c0_46 = arith.constant 0 : index
    %c0_47 = arith.constant 0 : index
    %62 = vector.load %arg19[%c0_46, %c0_47] : memref<2x8xf32, #tpu.memory_space<vmem>>, vector<2x8xf32>
    tpu.vector_store %arg19[%c0_46, %c0_47], %28 {strides = array<i32>} : memref<2x8xf32, #tpu.memory_space<vmem>>, vector<2x8xf32>,
    return
  }
  func.func @transform_0(%arg0: i32) -> (i32, i32) {
    %c0_i32 = arith.constant 0 : i32
    %c0_i32_0 = arith.constant 0 : i32
    %c0_i32_1 = arith.constant 0 : i32
    return %c0_i32, %c0_i32_0 : i32, i32
  }
  func.func @transform_1(%arg0: i32) -> (i32, i32) {
    %c0_i32 = arith.constant 0 : i32
    %c0_i32_0 = arith.constant 0 : i32
    %c0_i32_1 = arith.constant 0 : i32
    return %c0_i32, %c0_i32_0 : i32, i32
  }
  func.func @transform_2(%arg0: i32) -> (i32, i32) {
    %c0_i32 = arith.constant 0 : i32
    %c0_i32_0 = arith.constant 0 : i32
    %c0_i32_1 = arith.constant 0 : i32
    return %c0_i32, %c0_i32_0 : i32, i32
  }
  func.func @transform_3(%arg0: i32) -> (i32, i32) {
    %c0_i32 = arith.constant 0 : i32
    %c0_i32_0 = arith.constant 0 : i32
    %c0_i32_1 = arith.constant 0 : i32
    return %c0_i32, %c0_i32_0 : i32, i32
  }
  func.func @transform_4(%arg0: i32) -> (i32, i32) {
    %c0_i32 = arith.constant 0 : i32
    %c0_i32_0 = arith.constant 0 : i32
    %c0_i32_1 = arith.constant 0 : i32
    return %c0_i32, %c0_i32_0 : i32, i32
  }
  func.func @transform_5(%arg0: i32) -> (i32, i32) {
    %c0_i32 = arith.constant 0 : i32
    %c0_i32_0 = arith.constant 0 : i32
    %c0_i32_1 = arith.constant 0 : i32
    return %c0_i32, %c0_i32_0 : i32, i32
  }
  func.func @transform_6(%arg0: i32) -> (i32, i32) {
    %c0_i32 = arith.constant 0 : i32
    %c0_i32_0 = arith.constant 0 : i32
    %c0_i32_1 = arith.constant 0 : i32
    return %c0_i32, %c0_i32_0 : i32, i32
  }
  func.func @transform_7(%arg0: i32) -> (i32, i32) {
    %c0_i32 = arith.constant 0 : i32
    %c0_i32_0 = arith.constant 0 : i32
    %c0_i32_1 = arith.constant 0 : i32
    return %c0_i32, %c0_i32_0 : i32, i32
  }
  func.func @transform_8(%arg0: i32) -> (i32, i32) {
    %c0_i32 = arith.constant 0 : i32
    %c0_i32_0 = arith.constant 0 : i32
    %c0_i32_1 = arith.constant 0 : i32
    return %c0_i32, %c0_i32_0 : i32, i32
  }
  func.func @transform_9(%arg0: i32) -> (i32, i32) {
    %c0_i32 = arith.constant 0 : i32
    %c0_i32_0 = arith.constant 0 : i32
    %c0_i32_1 = arith.constant 0 : i32
    return %c0_i32, %c0_i32_0 : i32, i32
  }
  func.func @transform_10(%arg0: i32) -> (i32, i32) {
    %c0_i32 = arith.constant 0 : i32
    %c0_i32_0 = arith.constant 0 : i32
    %c0_i32_1 = arith.constant 0 : i32
    return %c0_i32, %c0_i32_0 : i32, i32
  }
  func.func @transform_11(%arg0: i32) -> (i32, i32) {
    %c0_i32 = arith.constant 0 : i32
    %c0_i32_0 = arith.constant 0 : i32
    %c0_i32_1 = arith.constant 0 : i32
    return %c0_i32, %c0_i32_0 : i32, i32
  }
  func.func @transform_12(%arg0: i32) -> (i32, i32) {
    %c0_i32 = arith.constant 0 : i32
    %c0_i32_0 = arith.constant 0 : i32
    %c0_i32_1 = arith.constant 0 : i32
    return %c0_i32, %c0_i32_0 : i32, i32
  }
  func.func @transform_13(%arg0: i32) -> (i32, i32) {
    %c0_i32 = arith.constant 0 : i32
    %c0_i32_0 = arith.constant 0 : i32
    %c0_i32_1 = arith.constant 0 : i32
    return %c0_i32, %c0_i32_0 : i32, i32
  }
  func.func @transform_14(%arg0: i32) -> (i32, i32) {
    %c0_i32 = arith.constant 0 : i32
    %c0_i32_0 = arith.constant 0 : i32
    %c0_i32_1 = arith.constant 0 : i32
    return %c0_i32, %c0_i32_0 : i32, i32
  }
  func.func @transform_15(%arg0: i32) -> (i32, i32) {
    %c0_i32 = arith.constant 0 : i32
    %c0_i32_0 = arith.constant 0 : i32
    %c0_i32_1 = arith.constant 0 : i32
    return %c0_i32, %c0_i32_0 : i32, i32
  }
  func.func @transform_16(%arg0: i32) -> (i32, i32) {
    %c0_i32 = arith.constant 0 : i32
    %c0_i32_0 = arith.constant 0 : i32
    %c0_i32_1 = arith.constant 0 : i32
    return %c0_i32, %c0_i32_0 : i32, i32
  }
  func.func @transform_17(%arg0: i32) -> (i32, i32) {
    %c0_i32 = arith.constant 0 : i32
    %c0_i32_0 = arith.constant 0 : i32
    %c0_i32_1 = arith.constant 0 : i32
    return %c0_i32, %c0_i32_0 : i32, i32
  }
  func.func @transform_18(%arg0: i32) -> (i32, i32) {
    %c0_i32 = arith.constant 0 : i32
    %c0_i32_0 = arith.constant 0 : i32
    %c0_i32_1 = arith.constant 0 : i32
    return %c0_i32, %c0_i32_0 : i32, i32
  }
}

</mosaic_0001>

<llo_original>
// kernel: conv_vae_forward.1
$region0: #{conv_vae_forward.1}
  #allocation0 [shape = 'u32[]', space=smem, size = 0x4, offset = 0x4, fixed_abs, tag = 'smem constant byte address 0x4 - core index']
  #allocation1 [shape = 'u32[72,128]{1,0:T(1,128)}', space=vmem, size = 0x9000, scoped, tag = 'internal scratch']
  %s0 = inlined_call_operand.vmem [shape: f32[2,768], index: 0, kind: input, shape index: {}]
  %s1 = inlined_call_operand.vmem [shape: f32[2,8], index: 1, kind: input, shape index: {}]
  %s2 = inlined_call_operand.hbm [shape: bf16[768,512], index: 2, kind: input, shape index: {}]
  %s3 = inlined_call_operand.vmem [shape: f32[1,512], index: 3, kind: input, shape index: {}]
  %s4 = inlined_call_operand.hbm [shape: bf16[512,256], index: 4, kind: input, shape index: {}]
  %s5 = inlined_call_operand.vmem [shape: f32[1,256], index: 5, kind: input, shape index: {}]
  %s6 = inlined_call_operand.vmem [shape: bf16[256,8], index: 6, kind: input, shape index: {}]
  %s7 = inlined_call_operand.vmem [shape: f32[1,8], index: 7, kind: input, shape index: {}]
  %s8 = inlined_call_operand.vmem [shape: bf16[256,8], index: 8, kind: input, shape index: {}]
  %s9 = inlined_call_operand.vmem [shape: f32[1,8], index: 9, kind: input, shape index: {}]
  %s10 = inlined_call_operand.vmem [shape: bf16[8,256], index: 10, kind: input, shape index: {}]
  %s11 = inlined_call_operand.vmem [shape: f32[1,256], index: 11, kind: input, shape index: {}]
  %s12 = inlined_call_operand.hbm [shape: bf16[256,512], index: 12, kind: input, shape index: {}]
  %s13 = inlined_call_operand.vmem [shape: f32[1,512], index: 13, kind: input, shape index: {}]
  %s14 = inlined_call_operand.hbm [shape: bf16[512,768], index: 14, kind: input, shape index: {}]
  %s15 = inlined_call_operand.vmem [shape: f32[1,768], index: 15, kind: input, shape index: {}]
  %s16 = inlined_call_operand.vmem [shape: f32[2,768], index: 16, kind: output, shape index: {0}]
  %s17 = inlined_call_operand.hbm [shape: f32[2,8], index: 17, kind: output, shape index: {1}]
  %s18 = inlined_call_operand.hbm [shape: f32[2,8], index: 18, kind: output, shape index: {2}]
  %19 = xla_tuple %s16, %s17, %s18
  %s20 = sld [smem:[#allocation0]]
  $region106: #{conv_vae_forward.1} parent=0
    _
  %s22 = ssub.s32 1, %s20
  %s23 = scalar_select 0, %s22, %s20
  $region1: #{conv_vae_forward.1} parent=0
    #allocation2 [shape = 'u8[786432]{0}', space=vmem, size = 0xc0000, scoped, tag = 'input window, operand 2, single buffered']
    #allocation3 [shape = 's32[1]{0}', space=sflag, size = 0x4, scoped, tag = 'scoped memory for conv_vae_forward.1']
    #allocation4 [shape = 's32[1]{0}', space=sflag, size = 0x4, scoped, tag = 'scoped memory for conv_vae_forward.1']
    #allocation5 [shape = 'u8[262144]{0}', space=vmem, size = 0x40000, scoped, tag = 'input window, operand 4, single buffered']
    #allocation6 [shape = 's32[1]{0}', space=sflag, size = 0x4, scoped, tag = 'scoped memory for conv_vae_forward.1']
    #allocation7 [shape = 'u8[262144]{0}', space=vmem, size = 0x40000, scoped, tag = 'input window, operand 12, single buffered']
    #allocation8 [shape = 'u8[786432]{0}', space=vmem, size = 0xc0000, scoped, tag = 'input window, operand 14, single buffered']
    #allocation9 [shape = 's32[1]{0}', space=sflag, size = 0x4, scoped, tag = 'scoped memory for conv_vae_forward.1']
    #allocation10 [shape = 'u8[1024]{0}', space=vmem, size = 0x400, scoped, tag = 'output window, operand 1, single buffered']
    #allocation11 [shape = 'u8[1024]{0}', space=vmem, size = 0x400, scoped, tag = 'output window, operand 2, single buffered']
    #allocation12 [shape = 's32[1]{0}', space=sflag, size = 0x4, scoped, tag = 'scoped memory for conv_vae_forward.1']
    %24 = vsyncpa [#allocation3], 0
    %25 = vsyncpa [#allocation6], 0
    %26 = vsyncpa [#allocation9], 0
    %27 = vsyncpa [#allocation4], 0
    %28 = vsyncpa [#allocation12], 0
    // Predicated region
    $region2: #{conv_vae_forward.1} parent=1 // pred_check
      _
    $region3: #{conv_vae_forward.1} parent=1 // pred_check_branch
      %30 = sbr.rel (0) target = $region5
    $region4: #{conv_vae_forward.1} parent=1 // pred_region
      _
    $region5: #{conv_vae_forward.1} parent=1 // pred_fallthru
      _
    // Predicated region
    $region6: #{conv_vae_forward.1} parent=1 // pred_check
      _
    $region7: #{conv_vae_forward.1} parent=1 // pred_check_branch
      %32 = sbr.rel (0) target = $region9
    $region8: #{conv_vae_forward.1} parent=1 // pred_region
      _
    $region9: #{conv_vae_forward.1} parent=1 // pred_fallthru
      _
    // Predicated region
    $region10: #{conv_vae_forward.1} parent=1 // pred_check
      _
    $region11: #{conv_vae_forward.1} parent=1 // pred_check_branch
      %34 = sbr.rel (0) target = $region13
    $region12: #{conv_vae_forward.1} parent=1 // pred_region
      %36 = vsyncadd [#allocation3], 0
      %s37 = sshll.u32 %s2, 4
      %s38 = int_to_ptr.hbm [resolvable:$true] %s37
      %s39 = sshll.u32 [#allocation2], 4
      %s40 = int_to_ptr.vmem [resolvable:$true] %s39
      %45 = dma.hbm_to_vmem [thread:$0]  %s38, 24576, %s40, [#allocation3], 256, 256, 16
    $region13: #{conv_vae_forward.1} parent=1 // pred_fallthru
      _
    // Predicated region
    $region14: #{conv_vae_forward.1} parent=1 // pred_check
      _
    $region15: #{conv_vae_forward.1} parent=1 // pred_check_branch
      %47 = sbr.rel (0) target = $region17
    $region16: #{conv_vae_forward.1} parent=1 // pred_region
      _
    $region17: #{conv_vae_forward.1} parent=1 // pred_fallthru
      _
    // Predicated region
    $region18: #{conv_vae_forward.1} parent=1 // pred_check
      _
    $region19: #{conv_vae_forward.1} parent=1 // pred_check_branch
      %49 = sbr.rel (0) target = $region21
    $region20: #{conv_vae_forward.1} parent=1 // pred_region
      %51 = vsyncadd [#allocation6], 0
      %s52 = sshll.u32 %s4, 4
      %s53 = int_to_ptr.hbm [resolvable:$true] %s52
      %s54 = sshll.u32 [#allocation5], 4
      %s55 = int_to_ptr.vmem [resolvable:$true] %s54
      %60 = dma.hbm_to_vmem [thread:$0]  %s53, 8192, %s55, [#allocation6], 128, 128, 8
    $region21: #{conv_vae_forward.1} parent=1 // pred_fallthru
      _
    // Predicated region
    $region22: #{conv_vae_forward.1} parent=1 // pred_check
      _
    $region23: #{conv_vae_forward.1} parent=1 // pred_check_branch
      %62 = sbr.rel (0) target = $region25
    $region24: #{conv_vae_forward.1} parent=1 // pred_region
      _
    $region25: #{conv_vae_forward.1} parent=1 // pred_fallthru
      _
    // Predicated region
    $region26: #{conv_vae_forward.1} parent=1 // pred_check
      _
    $region27: #{conv_vae_forward.1} parent=1 // pred_check_branch
      %64 = sbr.rel (0) target = $region29
    $region28: #{conv_vae_forward.1} parent=1 // pred_region
      _
    $region29: #{conv_vae_forward.1} parent=1 // pred_fallthru
      _
    // Predicated region
    $region30: #{conv_vae_forward.1} parent=1 // pred_check
      _
    $region31: #{conv_vae_forward.1} parent=1 // pred_check_branch
      %66 = sbr.rel (0) target = $region33
    $region32: #{conv_vae_forward.1} parent=1 // pred_region
      _
    $region33: #{conv_vae_forward.1} parent=1 // pred_fallthru
      _
    // Predicated region
    $region34: #{conv_vae_forward.1} parent=1 // pred_check
      _
    $region35: #{conv_vae_forward.1} parent=1 // pred_check_branch
      %68 = sbr.rel (0) target = $region37
    $region36: #{conv_vae_forward.1} parent=1 // pred_region
      _
    $region37: #{conv_vae_forward.1} parent=1 // pred_fallthru
      _
    // Predicated region
    $region38: #{conv_vae_forward.1} parent=1 // pred_check
      _
    $region39: #{conv_vae_forward.1} parent=1 // pred_check_branch
      %70 = sbr.rel (0) target = $region41
    $region40: #{conv_vae_forward.1} parent=1 // pred_region
      _
    $region41: #{conv_vae_forward.1} parent=1 // pred_fallthru
      _
    // Predicated region
    $region42: #{conv_vae_forward.1} parent=1 // pred_check
      _
    $region43: #{conv_vae_forward.1} parent=1 // pred_check_branch
      %72 = sbr.rel (0) target = $region45
    $region44: #{conv_vae_forward.1} parent=1 // pred_region
      _
    $region45: #{conv_vae_forward.1} parent=1 // pred_fallthru
      _
    // Predicated region
    $region46: #{conv_vae_forward.1} parent=1 // pred_check
      _
    $region47: #{conv_vae_forward.1} parent=1 // pred_check_branch
      %74 = sbr.rel (0) target = $region49
    $region48: #{conv_vae_forward.1} parent=1 // pred_region
      _
    $region49: #{conv_vae_forward.1} parent=1 // pred_fallthru
      _
    // Predicated region
    $region50: #{conv_vae_forward.1} parent=1 // pred_check
      _
    $region51: #{conv_vae_forward.1} parent=1 // pred_check_branch
      %76 = sbr.rel (0) target = $region53
    $region52: #{conv_vae_forward.1} parent=1 // pred_region
      %78 = vsyncadd [#allocation6], 0
      %s79 = sshll.u32 %s12, 4
      %s80 = int_to_ptr.hbm [resolvable:$true] %s79
      %s81 = sshll.u32 [#allocation7], 4
      %s82 = int_to_ptr.vmem [resolvable:$true] %s81
      %87 = dma.hbm_to_vmem [thread:$0]  %s80, 8192, %s82, [#allocation6], 256, 256, 16
    $region53: #{conv_vae_forward.1} parent=1 // pred_fallthru
      _
    // Predicated region
    $region54: #{conv_vae_forward.1} parent=1 // pred_check
      _
    $region55: #{conv_vae_forward.1} parent=1 // pred_check_branch
      %89 = sbr.rel (0) target = $region57
    $region56: #{conv_vae_forward.1} parent=1 // pred_region
      _
    $region57: #{conv_vae_forward.1} parent=1 // pred_fallthru
      _
    // Predicated region
    $region58: #{conv_vae_forward.1} parent=1 // pred_check
      _
    $region59: #{conv_vae_forward.1} parent=1 // pred_check_branch
      %91 = sbr.rel (0) target = $region61
    $region60: #{conv_vae_forward.1} parent=1 // pred_region
      %93 = vsyncadd [#allocation9], 0
      %s94 = sshll.u32 %s14, 4
      %s95 = int_to_ptr.hbm [resolvable:$true] %s94
      %s96 = sshll.u32 [#allocation8], 4
      %s97 = int_to_ptr.vmem [resolvable:$true] %s96
      %102 = dma.hbm_to_vmem [thread:$0]  %s95, 24576, %s97, [#allocation9], 384, 384, 24
    $region61: #{conv_vae_forward.1} parent=1 // pred_fallthru
      _
    // Predicated region
    $region62: #{conv_vae_forward.1} parent=1 // pred_check
      _
    $region63: #{conv_vae_forward.1} parent=1 // pred_check_branch
      %104 = sbr.rel (0) target = $region65
    $region64: #{conv_vae_forward.1} parent=1 // pred_region
      _
    $region65: #{conv_vae_forward.1} parent=1 // pred_fallthru
      _
    // Predicated region
    $region66: #{conv_vae_forward.1} parent=1 // pred_check
      _
    $region67: #{conv_vae_forward.1} parent=1 // pred_check_branch
      %106 = sbr.rel (0) target = $region69
    $region68: #{conv_vae_forward.1} parent=1 // pred_region
      %108 = dma.done [#allocation3], 24576
    $region69: #{conv_vae_forward.1} parent=1 // pred_fallthru
      _
    // Predicated region
    $region70: #{conv_vae_forward.1} parent=1 // pred_check
      _
    $region71: #{conv_vae_forward.1} parent=1 // pred_check_branch
      %110 = sbr.rel (0) target = $region73
    $region72: #{conv_vae_forward.1} parent=1 // pred_region
      %112 = dma.done [#allocation6], 8192
    $region73: #{conv_vae_forward.1} parent=1 // pred_fallthru
      _
    // Predicated region
    $region74: #{conv_vae_forward.1} parent=1 // pred_check
      _
    $region75: #{conv_vae_forward.1} parent=1 // pred_check_branch
      %114 = sbr.rel (0) target = $region77
    $region76: #{conv_vae_forward.1} parent=1 // pred_region
      %116 = dma.done [#allocation6], 8192
    $region77: #{conv_vae_forward.1} parent=1 // pred_fallthru
      _
    // Predicated region
    $region78: #{conv_vae_forward.1} parent=1 // pred_check
      _
    $region79: #{conv_vae_forward.1} parent=1 // pred_check_branch
      %118 = sbr.rel (0) target = $region81
    $region80: #{conv_vae_forward.1} parent=1 // pred_region
      %120 = dma.done [#allocation9], 24576
    $region81: #{conv_vae_forward.1} parent=1 // pred_fallthru
      _
    %v122 = vld [vmem:[%s0] sm:$0xff]
    %v123 = vld [vmem:[%s0 + $0x8] sm:$0xf]
    %126 = vst [vmem:[#allocation1] ss:$4 sm:$0xff] %v122
    %s127 = scalar_lea.vmem [#allocation1], 32
    %128 = vst [vmem:[%s127] ss:$4 sm:$0xff] %v123
    %v129 = vld.sshfl [vmem:[#allocation1] sm:$0xff pattern:$0x73625140]
    %v130 = vld.sshfl [vmem:[#allocation1 + $0x8] sm:$0xff pattern:$0x73625140]
    %v131 = vld.sshfl [vmem:[#allocation1 + $0x10] sm:$0xff pattern:$0x73625140]
    %v132 = vld.sshfl [vmem:[#allocation1 + $0x18] sm:$0xff pattern:$0x73625140]
    %v133 = vld.sshfl [vmem:[#allocation1 + $0x20] sm:$0xff pattern:$0x73625140]
    %v134 = vld.sshfl [vmem:[#allocation1 + $0x28] sm:$0xff pattern:$0x73625140]
    %v141 = vpack.c.bf16 %v129, %v129
    %v142 = vpack.c.bf16 %v130, %v130
    %v143 = vpack.c.bf16 %v131, %v131
    %v144 = vpack.c.bf16 %v132, %v132
    %v145 = vpack.c.bf16 %v133, %v133
    %v146 = vpack.c.bf16 %v134, %v134
    %v147 = vld [vmem:[#allocation2] sm:$0xff]
    %v148 = vld [vmem:[#allocation2 + $0x8] sm:$0xff]
    %v149 = vld [vmem:[#allocation2 + $0x10] sm:$0xff]
    %v150 = vld [vmem:[#allocation2 + $0x18] sm:$0xff]
    %v151 = vld [vmem:[#allocation2 + $0x20] sm:$0xff]
    %v152 = vld [vmem:[#allocation2 + $0x28] sm:$0xff]
    %v153 = vld [vmem:[#allocation2 + $0x30] sm:$0xff]
    %v154 = vld [vmem:[#allocation2 + $0x38] sm:$0xff]
    %v155 = vld [vmem:[#allocation2 + $0x40] sm:$0xff]
    %v156 = vld [vmem:[#allocation2 + $0x48] sm:$0xff]
    %v157 = vld [vmem:[#allocation2 + $0x50] sm:$0xff]
    %v158 = vld [vmem:[#allocation2 + $0x58] sm:$0xff]
    %v159 = vld [vmem:[#allocation2 + $0x60] sm:$0xff]
    %v160 = vld [vmem:[#allocation2 + $0x68] sm:$0xff]
    %v161 = vld [vmem:[#allocation2 + $0x70] sm:$0xff]
    %v162 = vld [vmem:[#allocation2 + $0x78] sm:$0xff]
    %v163 = vld [vmem:[#allocation2 + $0x80] sm:$0xff]
    %v164 = vld [vmem:[#allocation2 + $0x88] sm:$0xff]
    %v165 = vld [vmem:[#allocation2 + $0x90] sm:$0xff]
    %v166 = vld [vmem:[#allocation2 + $0x98] sm:$0xff]
    %v167 = vld [vmem:[#allocation2 + $0xa0] sm:$0xff]
    %v168 = vld [vmem:[#allocation2 + $0xa8] sm:$0xff]
    %v169 = vld [vmem:[#allocation2 + $0xb0] sm:$0xff]
    %v170 = vld [vmem:[#allocation2 + $0xb8] sm:$0xff]
    %v171 = vld [vmem:[#allocation2 + $0xc0] sm:$0xff]
    %v172 = vld [vmem:[#allocation2 + $0xc8] sm:$0xff]
    %v173 = vld [vmem:[#allocation2 + $0xd0] sm:$0xff]
    %v174 = vld [vmem:[#allocation2 + $0xd8] sm:$0xff]
    %v175 = vld [vmem:[#allocation2 + $0xe0] sm:$0xff]
    %v176 = vld [vmem:[#allocation2 + $0xe8] sm:$0xff]
    %v177 = vld [vmem:[#allocation2 + $0xf0] sm:$0xff]
    %v178 = vld [vmem:[#allocation2 + $0xf8] sm:$0xff]
    %v179 = vld [vmem:[#allocation2 + $0x100] sm:$0xff]
    %v180 = vld [vmem:[#allocation2 + $0x108] sm:$0xff]
    %v181 = vld [vmem:[#allocation2 + $0x110] sm:$0xff]
    %v182 = vld [vmem:[#allocation2 + $0x118] sm:$0xff]
    %v183 = vld [vmem:[#allocation2 + $0x120] sm:$0xff]
    %v184 = vld [vmem:[#allocation2 + $0x128] sm:$0xff]
    %v185 = vld [vmem:[#allocation2 + $0x130] sm:$0xff]
    %v186 = vld [vmem:[#allocation2 + $0x138] sm:$0xff]
    %v187 = vld [vmem:[#allocation2 + $0x140] sm:$0xff]
    %v188 = vld [vmem:[#allocation2 + $0x148] sm:$0xff]
    %v189 = vld [vmem:[#allocation2 + $0x150] sm:$0xff]
    %v190 = vld [vmem:[#allocation2 + $0x158] sm:$0xff]
    %v191 = vld [vmem:[#allocation2 + $0x160] sm:$0xff]
    %v192 = vld [vmem:[#allocation2 + $0x168] sm:$0xff]
    %v193 = vld [vmem:[#allocation2 + $0x170] sm:$0xff]
    %v194 = vld [vmem:[#allocation2 + $0x178] sm:$0xff]
    %v195 = vld [vmem:[#allocation2 + $0x180] sm:$0xff]
    %v196 = vld [vmem:[#allocation2 + $0x188] sm:$0xff]
    %v197 = vld [vmem:[#allocation2 + $0x190] sm:$0xff]
    %v198 = vld [vmem:[#allocation2 + $0x198] sm:$0xff]
    %v199 = vld [vmem:[#allocation2 + $0x1a0] sm:$0xff]
    %v200 = vld [vmem:[#allocation2 + $0x1a8] sm:$0xff]
    %v201 = vld [vmem:[#allocation2 + $0x1b0] sm:$0xff]
    %v202 = vld [vmem:[#allocation2 + $0x1b8] sm:$0xff]
    %v203 = vld [vmem:[#allocation2 + $0x1c0] sm:$0xff]
    %v204 = vld [vmem:[#allocation2 + $0x1c8] sm:$0xff]
    %v205 = vld [vmem:[#allocation2 + $0x1d0] sm:$0xff]
    %v206 = vld [vmem:[#allocation2 + $0x1d8] sm:$0xff]
    %v207 = vld [vmem:[#allocation2 + $0x1e0] sm:$0xff]
    %v208 = vld [vmem:[#allocation2 + $0x1e8] sm:$0xff]
    %v209 = vld [vmem:[#allocation2 + $0x1f0] sm:$0xff]
    %v210 = vld [vmem:[#allocation2 + $0x1f8] sm:$0xff]
    %v211 = vld [vmem:[#allocation2 + $0x200] sm:$0xff]
    %v212 = vld [vmem:[#allocation2 + $0x208] sm:$0xff]
    %v213 = vld [vmem:[#allocation2 + $0x210] sm:$0xff]
    %v214 = vld [vmem:[#allocation2 + $0x218] sm:$0xff]
    %v215 = vld [vmem:[#allocation2 + $0x220] sm:$0xff]
    %v216 = vld [vmem:[#allocation2 + $0x228] sm:$0xff]
    %v217 = vld [vmem:[#allocation2 + $0x230] sm:$0xff]
    %v218 = vld [vmem:[#allocation2 + $0x238] sm:$0xff]
    %v219 = vld [vmem:[#allocation2 + $0x240] sm:$0xff]
    %v220 = vld [vmem:[#allocation2 + $0x248] sm:$0xff]
    %v221 = vld [vmem:[#allocation2 + $0x250] sm:$0xff]
    %v222 = vld [vmem:[#allocation2 + $0x258] sm:$0xff]
    %v223 = vld [vmem:[#allocation2 + $0x260] sm:$0xff]
    %v224 = vld [vmem:[#allocation2 + $0x268] sm:$0xff]
    %v225 = vld [vmem:[#allocation2 + $0x270] sm:$0xff]
    %v226 = vld [vmem:[#allocation2 + $0x278] sm:$0xff]
    %v227 = vld [vmem:[#allocation2 + $0x280] sm:$0xff]
    %v228 = vld [vmem:[#allocation2 + $0x288] sm:$0xff]
    %v229 = vld [vmem:[#allocation2 + $0x290] sm:$0xff]
    %v230 = vld [vmem:[#allocation2 + $0x298] sm:$0xff]
    %v231 = vld [vmem:[#allocation2 + $0x2a0] sm:$0xff]
    %v232 = vld [vmem:[#allocation2 + $0x2a8] sm:$0xff]
    %v233 = vld [vmem:[#allocation2 + $0x2b0] sm:$0xff]
    %v234 = vld [vmem:[#allocation2 + $0x2b8] sm:$0xff]
    %v235 = vld [vmem:[#allocation2 + $0x2c0] sm:$0xff]
    %v236 = vld [vmem:[#allocation2 + $0x2c8] sm:$0xff]
    %v237 = vld [vmem:[#allocation2 + $0x2d0] sm:$0xff]
    %v238 = vld [vmem:[#allocation2 + $0x2d8] sm:$0xff]
    %v239 = vld [vmem:[#allocation2 + $0x2e0] sm:$0xff]
    %v240 = vld [vmem:[#allocation2 + $0x2e8] sm:$0xff]
    %v241 = vld [vmem:[#allocation2 + $0x2f0] sm:$0xff]
    %v242 = vld [vmem:[#allocation2 + $0x2f8] sm:$0xff]
    %v243 = vld [vmem:[#allocation2 + $0x300] sm:$0xff]
    %v244 = vld [vmem:[#allocation2 + $0x308] sm:$0xff]
    %v245 = vld [vmem:[#allocation2 + $0x310] sm:$0xff]
    %v246 = vld [vmem:[#allocation2 + $0x318] sm:$0xff]
    %v247 = vld [vmem:[#allocation2 + $0x320] sm:$0xff]
    %v248 = vld [vmem:[#allocation2 + $0x328] sm:$0xff]
    %v249 = vld [vmem:[#allocation2 + $0x330] sm:$0xff]
    %v250 = vld [vmem:[#allocation2 + $0x338] sm:$0xff]
    %v251 = vld [vmem:[#allocation2 + $0x340] sm:$0xff]
    %v252 = vld [vmem:[#allocation2 + $0x348] sm:$0xff]
    %v253 = vld [vmem:[#allocation2 + $0x350] sm:$0xff]
    %v254 = vld [vmem:[#allocation2 + $0x358] sm:$0xff]
    %v255 = vld [vmem:[#allocation2 + $0x360] sm:$0xff]
    %v256 = vld [vmem:[#allocation2 + $0x368] sm:$0xff]
    %v257 = vld [vmem:[#allocation2 + $0x370] sm:$0xff]
    %v258 = vld [vmem:[#allocation2 + $0x378] sm:$0xff]
    %v259 = vld [vmem:[#allocation2 + $0x380] sm:$0xff]
    %v260 = vld [vmem:[#allocation2 + $0x388] sm:$0xff]
    %v261 = vld [vmem:[#allocation2 + $0x390] sm:$0xff]
    %v262 = vld [vmem:[#allocation2 + $0x398] sm:$0xff]
    %v263 = vld [vmem:[#allocation2 + $0x3a0] sm:$0xff]
    %v264 = vld [vmem:[#allocation2 + $0x3a8] sm:$0xff]
    %v265 = vld [vmem:[#allocation2 + $0x3b0] sm:$0xff]
    %v266 = vld [vmem:[#allocation2 + $0x3b8] sm:$0xff]
    %v267 = vld [vmem:[#allocation2 + $0x3c0] sm:$0xff]
    %v268 = vld [vmem:[#allocation2 + $0x3c8] sm:$0xff]
    %v269 = vld [vmem:[#allocation2 + $0x3d0] sm:$0xff]
    %v270 = vld [vmem:[#allocation2 + $0x3d8] sm:$0xff]
    %v271 = vld [vmem:[#allocation2 + $0x3e0] sm:$0xff]
    %v272 = vld [vmem:[#allocation2 + $0x3e8] sm:$0xff]
    %v273 = vld [vmem:[#allocation2 + $0x3f0] sm:$0xff]
    %v274 = vld [vmem:[#allocation2 + $0x3f8] sm:$0xff]
    %v275 = vld [vmem:[#allocation2 + $0x400] sm:$0xff]
    %v276 = vld [vmem:[#allocation2 + $0x408] sm:$0xff]
    %v277 = vld [vmem:[#allocation2 + $0x410] sm:$0xff]
    %v278 = vld [vmem:[#allocation2 + $0x418] sm:$0xff]
    %v279 = vld [vmem:[#allocation2 + $0x420] sm:$0xff]
    %v280 = vld [vmem:[#allocation2 + $0x428] sm:$0xff]
    %v281 = vld [vmem:[#allocation2 + $0x430] sm:$0xff]
    %v282 = vld [vmem:[#allocation2 + $0x438] sm:$0xff]
    %v283 = vld [vmem:[#allocation2 + $0x440] sm:$0xff]
    %v284 = vld [vmem:[#allocation2 + $0x448] sm:$0xff]
    %v285 = vld [vmem:[#allocation2 + $0x450] sm:$0xff]
    %v286 = vld [vmem:[#allocation2 + $0x458] sm:$0xff]
    %v287 = vld [vmem:[#allocation2 + $0x460] sm:$0xff]
    %v288 = vld [vmem:[#allocation2 + $0x468] sm:$0xff]
    %v289 = vld [vmem:[#allocation2 + $0x470] sm:$0xff]
    %v290 = vld [vmem:[#allocation2 + $0x478] sm:$0xff]
    %v291 = vld [vmem:[#allocation2 + $0x480] sm:$0xff]
    %v292 = vld [vmem:[#allocation2 + $0x488] sm:$0xff]
    %v293 = vld [vmem:[#allocation2 + $0x490] sm:$0xff]
    %v294 = vld [vmem:[#allocation2 + $0x498] sm:$0xff]
    %v295 = vld [vmem:[#allocation2 + $0x4a0] sm:$0xff]
    %v296 = vld [vmem:[#allocation2 + $0x4a8] sm:$0xff]
    %v297 = vld [vmem:[#allocation2 + $0x4b0] sm:$0xff]
    %v298 = vld [vmem:[#allocation2 + $0x4b8] sm:$0xff]
    %v299 = vld [vmem:[#allocation2 + $0x4c0] sm:$0xff]
    %v300 = vld [vmem:[#allocation2 + $0x4c8] sm:$0xff]
    %v301 = vld [vmem:[#allocation2 + $0x4d0] sm:$0xff]
    %v302 = vld [vmem:[#allocation2 + $0x4d8] sm:$0xff]
    %v303 = vld [vmem:[#allocation2 + $0x4e0] sm:$0xff]
    %v304 = vld [vmem:[#allocation2 + $0x4e8] sm:$0xff]
    %v305 = vld [vmem:[#allocation2 + $0x4f0] sm:$0xff]
    %v306 = vld [vmem:[#allocation2 + $0x4f8] sm:$0xff]
    %v307 = vld [vmem:[#allocation2 + $0x500] sm:$0xff]
    %v308 = vld [vmem:[#allocation2 + $0x508] sm:$0xff]
    %v309 = vld [vmem:[#allocation2 + $0x510] sm:$0xff]
    %v310 = vld [vmem:[#allocation2 + $0x518] sm:$0xff]
    %v311 = vld [vmem:[#allocation2 + $0x520] sm:$0xff]
    %v312 = vld [vmem:[#allocation2 + $0x528] sm:$0xff]
    %v313 = vld [vmem:[#allocation2 + $0x530] sm:$0xff]
    %v314 = vld [vmem:[#allocation2 + $0x538] sm:$0xff]
    %v315 = vld [vmem:[#allocation2 + $0x540] sm:$0xff]
    %v316 = vld [vmem:[#allocation2 + $0x548] sm:$0xff]
    %v317 = vld [vmem:[#allocation2 + $0x550] sm:$0xff]
    %v318 = vld [vmem:[#allocation2 + $0x558] sm:$0xff]
    %v319 = vld [vmem:[#allocation2 + $0x560] sm:$0xff]
    %v320 = vld [vmem:[#allocation2 + $0x568] sm:$0xff]
    %v321 = vld [vmem:[#allocation2 + $0x570] sm:$0xff]
    %v322 = vld [vmem:[#allocation2 + $0x578] sm:$0xff]
    %v323 = vld [vmem:[#allocation2 + $0x580] sm:$0xff]
    %v324 = vld [vmem:[#allocation2 + $0x588] sm:$0xff]
    %v325 = vld [vmem:[#allocation2 + $0x590] sm:$0xff]
    %v326 = vld [vmem:[#allocation2 + $0x598] sm:$0xff]
    %v327 = vld [vmem:[#allocation2 + $0x5a0] sm:$0xff]
    %v328 = vld [vmem:[#allocation2 + $0x5a8] sm:$0xff]
    %v329 = vld [vmem:[#allocation2 + $0x5b0] sm:$0xff]
    %v330 = vld [vmem:[#allocation2 + $0x5b8] sm:$0xff]
    %v331 = vld [vmem:[#allocation2 + $0x5c0] sm:$0xff]
    %v332 = vld [vmem:[#allocation2 + $0x5c8] sm:$0xff]
    %v333 = vld [vmem:[#allocation2 + $0x5d0] sm:$0xff]
    %v334 = vld [vmem:[#allocation2 + $0x5d8] sm:$0xff]
    %v335 = vld [vmem:[#allocation2 + $0x5e0] sm:$0xff]
    %v336 = vld [vmem:[#allocation2 + $0x5e8] sm:$0xff]
    %v337 = vld [vmem:[#allocation2 + $0x5f0] sm:$0xff]
    %v338 = vld [vmem:[#allocation2 + $0x5f8] sm:$0xff]
    %v339 = vld [vmem:[%s3] sm:$0xf]
    %v341 = vperm.slane %v339, 0
    %v342 = vperm.slane %v339, 1
    %v343 = vperm.slane %v339, 2
    %v344 = vperm.slane %v339, 3
    %v541 = vunpack.c.l.b16 %v147
    %v542 = vunpack.c.h.b16 %v147
    %v543 = vunpack.c.l.b16 %v148
    %v544 = vunpack.c.h.b16 %v148
    %v545 = vunpack.c.l.b16 %v149
    %v546 = vunpack.c.h.b16 %v149
    %v547 = vunpack.c.l.b16 %v150
    %v548 = vunpack.c.h.b16 %v150
    %v549 = vunpack.c.l.b16 %v151
    %v550 = vunpack.c.h.b16 %v151
    %v551 = vunpack.c.l.b16 %v152
    %v552 = vunpack.c.h.b16 %v152
    %v553 = vunpack.c.l.b16 %v153
    %v554 = vunpack.c.h.b16 %v153
    %v555 = vunpack.c.l.b16 %v154
    %v556 = vunpack.c.h.b16 %v154
    %v557 = vunpack.c.l.b16 %v155
    %v558 = vunpack.c.h.b16 %v155
    %v559 = vunpack.c.l.b16 %v156
    %v560 = vunpack.c.h.b16 %v156
    %v561 = vunpack.c.l.b16 %v157
    %v562 = vunpack.c.h.b16 %v157
    %v563 = vunpack.c.l.b16 %v158
    %v564 = vunpack.c.h.b16 %v158
    %v565 = vunpack.c.l.b16 %v159
    %v566 = vunpack.c.h.b16 %v159
    %v567 = vunpack.c.l.b16 %v160
    %v568 = vunpack.c.h.b16 %v160
    %v569 = vunpack.c.l.b16 %v161
    %v570 = vunpack.c.h.b16 %v161
    %v571 = vunpack.c.l.b16 %v162
    %v572 = vunpack.c.h.b16 %v162
    %v573 = vunpack.c.l.b16 %v163
    %v574 = vunpack.c.h.b16 %v163
    %v575 = vunpack.c.l.b16 %v164
    %v576 = vunpack.c.h.b16 %v164
    %v577 = vunpack.c.l.b16 %v165
    %v578 = vunpack.c.h.b16 %v165
    %v579 = vunpack.c.l.b16 %v166
    %v580 = vunpack.c.h.b16 %v166
    %v581 = vunpack.c.l.b16 %v167
    %v582 = vunpack.c.h.b16 %v167
    %v583 = vunpack.c.l.b16 %v168
    %v584 = vunpack.c.h.b16 %v168
    %v585 = vunpack.c.l.b16 %v169
    %v586 = vunpack.c.h.b16 %v169
    %v587 = vunpack.c.l.b16 %v170
    %v588 = vunpack.c.h.b16 %v170
    %v589 = vunpack.c.l.b16 %v171
    %v590 = vunpack.c.h.b16 %v171
    %v591 = vunpack.c.l.b16 %v172
    %v592 = vunpack.c.h.b16 %v172
    %v593 = vunpack.c.l.b16 %v173
    %v594 = vunpack.c.h.b16 %v173
    %v595 = vunpack.c.l.b16 %v174
    %v596 = vunpack.c.h.b16 %v174
    %v597 = vunpack.c.l.b16 %v175
    %v598 = vunpack.c.h.b16 %v175
    %v599 = vunpack.c.l.b16 %v176
    %v600 = vunpack.c.h.b16 %v176
    %v601 = vunpack.c.l.b16 %v177
    %v602 = vunpack.c.h.b16 %v177
    %v603 = vunpack.c.l.b16 %v178
    %v604 = vunpack.c.h.b16 %v178
    %v605 = vunpack.c.l.b16 %v179
    %v606 = vunpack.c.h.b16 %v179
    %v607 = vunpack.c.l.b16 %v180
    %v608 = vunpack.c.h.b16 %v180
    %v609 = vunpack.c.l.b16 %v181
    %v610 = vunpack.c.h.b16 %v181
    %v611 = vunpack.c.l.b16 %v182
    %v612 = vunpack.c.h.b16 %v182
    %v613 = vunpack.c.l.b16 %v183
    %v614 = vunpack.c.h.b16 %v183
    %v615 = vunpack.c.l.b16 %v184
    %v616 = vunpack.c.h.b16 %v184
    %v617 = vunpack.c.l.b16 %v185
    %v618 = vunpack.c.h.b16 %v185
    %v619 = vunpack.c.l.b16 %v186
    %v620 = vunpack.c.h.b16 %v186
    %v621 = vunpack.c.l.b16 %v187
    %v622 = vunpack.c.h.b16 %v187
    %v623 = vunpack.c.l.b16 %v188
    %v624 = vunpack.c.h.b16 %v188
    %v625 = vunpack.c.l.b16 %v189
    %v626 = vunpack.c.h.b16 %v189
    %v627 = vunpack.c.l.b16 %v190
    %v628 = vunpack.c.h.b16 %v190
    %v629 = vunpack.c.l.b16 %v191
    %v630 = vunpack.c.h.b16 %v191
    %v631 = vunpack.c.l.b16 %v192
    %v632 = vunpack.c.h.b16 %v192
    %v633 = vunpack.c.l.b16 %v193
    %v634 = vunpack.c.h.b16 %v193
    %v635 = vunpack.c.l.b16 %v194
    %v636 = vunpack.c.h.b16 %v194
    %v637 = vunpack.c.l.b16 %v195
    %v638 = vunpack.c.h.b16 %v195
    %v639 = vunpack.c.l.b16 %v196
    %v640 = vunpack.c.h.b16 %v196
    %v641 = vunpack.c.l.b16 %v197
    %v642 = vunpack.c.h.b16 %v197
    %v643 = vunpack.c.l.b16 %v198
    %v644 = vunpack.c.h.b16 %v198
    %v645 = vunpack.c.l.b16 %v199
    %v646 = vunpack.c.h.b16 %v199
    %v647 = vunpack.c.l.b16 %v200
    %v648 = vunpack.c.h.b16 %v200
    %v649 = vunpack.c.l.b16 %v201
    %v650 = vunpack.c.h.b16 %v201
    %v651 = vunpack.c.l.b16 %v202
    %v652 = vunpack.c.h.b16 %v202
    %v653 = vunpack.c.l.b16 %v203
    %v654 = vunpack.c.h.b16 %v203
    %v655 = vunpack.c.l.b16 %v204
    %v656 = vunpack.c.h.b16 %v204
    %v657 = vunpack.c.l.b16 %v205
    %v658 = vunpack.c.h.b16 %v205
    %v659 = vunpack.c.l.b16 %v206
    %v660 = vunpack.c.h.b16 %v206
    %v661 = vunpack.c.l.b16 %v207
    %v662 = vunpack.c.h.b16 %v207
    %v663 = vunpack.c.l.b16 %v208
    %v664 = vunpack.c.h.b16 %v208
    %v665 = vunpack.c.l.b16 %v209
    %v666 = vunpack.c.h.b16 %v209
    %v667 = vunpack.c.l.b16 %v210
    %v668 = vunpack.c.h.b16 %v210
    %v669 = vunpack.c.l.b16 %v211
    %v670 = vunpack.c.h.b16 %v211
    %v671 = vunpack.c.l.b16 %v212
    %v672 = vunpack.c.h.b16 %v212
    %v673 = vunpack.c.l.b16 %v213
    %v674 = vunpack.c.h.b16 %v213
    %v675 = vunpack.c.l.b16 %v214
    %v676 = vunpack.c.h.b16 %v214
    %v677 = vunpack.c.l.b16 %v215
    %v678 = vunpack.c.h.b16 %v215
    %v679 = vunpack.c.l.b16 %v216
    %v680 = vunpack.c.h.b16 %v216
    %v681 = vunpack.c.l.b16 %v217
    %v682 = vunpack.c.h.b16 %v217
    %v683 = vunpack.c.l.b16 %v218
    %v684 = vunpack.c.h.b16 %v218
    %v685 = vunpack.c.l.b16 %v219
    %v686 = vunpack.c.h.b16 %v219
    %v687 = vunpack.c.l.b16 %v220
    %v688 = vunpack.c.h.b16 %v220
    %v689 = vunpack.c.l.b16 %v221
    %v690 = vunpack.c.h.b16 %v221
    %v691 = vunpack.c.l.b16 %v222
    %v692 = vunpack.c.h.b16 %v222
    %v693 = vunpack.c.l.b16 %v223
    %v694 = vunpack.c.h.b16 %v223
    %v695 = vunpack.c.l.b16 %v224
    %v696 = vunpack.c.h.b16 %v224
    %v697 = vunpack.c.l.b16 %v225
    %v698 = vunpack.c.h.b16 %v225
    %v699 = vunpack.c.l.b16 %v226
    %v700 = vunpack.c.h.b16 %v226
    %v701 = vunpack.c.l.b16 %v227
    %v702 = vunpack.c.h.b16 %v227
    %v703 = vunpack.c.l.b16 %v228
    %v704 = vunpack.c.h.b16 %v228
    %v705 = vunpack.c.l.b16 %v229
    %v706 = vunpack.c.h.b16 %v229
    %v707 = vunpack.c.l.b16 %v230
    %v708 = vunpack.c.h.b16 %v230
    %v709 = vunpack.c.l.b16 %v231
    %v710 = vunpack.c.h.b16 %v231
    %v711 = vunpack.c.l.b16 %v232
    %v712 = vunpack.c.h.b16 %v232
    %v713 = vunpack.c.l.b16 %v233
    %v714 = vunpack.c.h.b16 %v233
    %v715 = vunpack.c.l.b16 %v234
    %v716 = vunpack.c.h.b16 %v234
    %v717 = vunpack.c.l.b16 %v235
    %v718 = vunpack.c.h.b16 %v235
    %v719 = vunpack.c.l.b16 %v236
    %v720 = vunpack.c.h.b16 %v236
    %v721 = vunpack.c.l.b16 %v237
    %v722 = vunpack.c.h.b16 %v237
    %v723 = vunpack.c.l.b16 %v238
    %v724 = vunpack.c.h.b16 %v238
    %v725 = vunpack.c.l.b16 %v239
    %v726 = vunpack.c.h.b16 %v239
    %v727 = vunpack.c.l.b16 %v240
    %v728 = vunpack.c.h.b16 %v240
    %v729 = vunpack.c.l.b16 %v241
    %v730 = vunpack.c.h.b16 %v241
    %v731 = vunpack.c.l.b16 %v242
    %v732 = vunpack.c.h.b16 %v242
    %v733 = vunpack.c.l.b16 %v243
    %v734 = vunpack.c.h.b16 %v243
    %v735 = vunpack.c.l.b16 %v244
    %v736 = vunpack.c.h.b16 %v244
    %v737 = vunpack.c.l.b16 %v245
    %v738 = vunpack.c.h.b16 %v245
    %v739 = vunpack.c.l.b16 %v246
    %v740 = vunpack.c.h.b16 %v246
    %v741 = vunpack.c.l.b16 %v247
    %v742 = vunpack.c.h.b16 %v247
    %v743 = vunpack.c.l.b16 %v248
    %v744 = vunpack.c.h.b16 %v248
    %v745 = vunpack.c.l.b16 %v249
    %v746 = vunpack.c.h.b16 %v249
    %v747 = vunpack.c.l.b16 %v250
    %v748 = vunpack.c.h.b16 %v250
    %v749 = vunpack.c.l.b16 %v251
    %v750 = vunpack.c.h.b16 %v251
    %v751 = vunpack.c.l.b16 %v252
    %v752 = vunpack.c.h.b16 %v252
    %v753 = vunpack.c.l.b16 %v253
    %v754 = vunpack.c.h.b16 %v253
    %v755 = vunpack.c.l.b16 %v254
    %v756 = vunpack.c.h.b16 %v254
    %v757 = vunpack.c.l.b16 %v255
    %v758 = vunpack.c.h.b16 %v255
    %v759 = vunpack.c.l.b16 %v256
    %v760 = vunpack.c.h.b16 %v256
    %v761 = vunpack.c.l.b16 %v257
    %v762 = vunpack.c.h.b16 %v257
    %v763 = vunpack.c.l.b16 %v258
    %v764 = vunpack.c.h.b16 %v258
    %v765 = vunpack.c.l.b16 %v259
    %v766 = vunpack.c.h.b16 %v259
    %v767 = vunpack.c.l.b16 %v260
    %v768 = vunpack.c.h.b16 %v260
    %v769 = vunpack.c.l.b16 %v261
    %v770 = vunpack.c.h.b16 %v261
    %v771 = vunpack.c.l.b16 %v262
    %v772 = vunpack.c.h.b16 %v262
    %v773 = vunpack.c.l.b16 %v263
    %v774 = vunpack.c.h.b16 %v263
    %v775 = vunpack.c.l.b16 %v264
    %v776 = vunpack.c.h.b16 %v264
    %v777 = vunpack.c.l.b16 %v265
    %v778 = vunpack.c.h.b16 %v265
    %v779 = vunpack.c.l.b16 %v266
    %v780 = vunpack.c.h.b16 %v266
    %v781 = vunpack.c.l.b16 %v267
    %v782 = vunpack.c.h.b16 %v267
    %v783 = vunpack.c.l.b16 %v268
    %v784 = vunpack.c.h.b16 %v268
    %v785 = vunpack.c.l.b16 %v269
    %v786 = vunpack.c.h.b16 %v269
    %v787 = vunpack.c.l.b16 %v270
    %v788 = vunpack.c.h.b16 %v270
    %v789 = vunpack.c.l.b16 %v271
    %v790 = vunpack.c.h.b16 %v271
    %v791 = vunpack.c.l.b16 %v272
    %v792 = vunpack.c.h.b16 %v272
    %v793 = vunpack.c.l.b16 %v273
    %v794 = vunpack.c.h.b16 %v273
    %v795 = vunpack.c.l.b16 %v274
    %v796 = vunpack.c.h.b16 %v274
    %v797 = vunpack.c.l.b16 %v275
    %v798 = vunpack.c.h.b16 %v275
    %v799 = vunpack.c.l.b16 %v276
    %v800 = vunpack.c.h.b16 %v276
    %v801 = vunpack.c.l.b16 %v277
    %v802 = vunpack.c.h.b16 %v277
    %v803 = vunpack.c.l.b16 %v278
    %v804 = vunpack.c.h.b16 %v278
    %v805 = vunpack.c.l.b16 %v279
    %v806 = vunpack.c.h.b16 %v279
    %v807 = vunpack.c.l.b16 %v280
    %v808 = vunpack.c.h.b16 %v280
    %v809 = vunpack.c.l.b16 %v281
    %v810 = vunpack.c.h.b16 %v281
    %v811 = vunpack.c.l.b16 %v282
    %v812 = vunpack.c.h.b16 %v282
    %v813 = vunpack.c.l.b16 %v283
    %v814 = vunpack.c.h.b16 %v283
    %v815 = vunpack.c.l.b16 %v284
    %v816 = vunpack.c.h.b16 %v284
    %v817 = vunpack.c.l.b16 %v285
    %v818 = vunpack.c.h.b16 %v285
    %v819 = vunpack.c.l.b16 %v286
    %v820 = vunpack.c.h.b16 %v286
    %v821 = vunpack.c.l.b16 %v287
    %v822 = vunpack.c.h.b16 %v287
    %v823 = vunpack.c.l.b16 %v288
    %v824 = vunpack.c.h.b16 %v288
    %v825 = vunpack.c.l.b16 %v289
    %v826 = vunpack.c.h.b16 %v289
    %v827 = vunpack.c.l.b16 %v290
    %v828 = vunpack.c.h.b16 %v290
    %v829 = vunpack.c.l.b16 %v291
    %v830 = vunpack.c.h.b16 %v291
    %v831 = vunpack.c.l.b16 %v292
    %v832 = vunpack.c.h.b16 %v292
    %v833 = vunpack.c.l.b16 %v293
    %v834 = vunpack.c.h.b16 %v293
    %v835 = vunpack.c.l.b16 %v294
    %v836 = vunpack.c.h.b16 %v294
    %v837 = vunpack.c.l.b16 %v295
    %v838 = vunpack.c.h.b16 %v295
    %v839 = vunpack.c.l.b16 %v296
    %v840 = vunpack.c.h.b16 %v296
    %v841 = vunpack.c.l.b16 %v297
    %v842 = vunpack.c.h.b16 %v297
    %v843 = vunpack.c.l.b16 %v298
    %v844 = vunpack.c.h.b16 %v298
    %v845 = vunpack.c.l.b16 %v299
    %v846 = vunpack.c.h.b16 %v299
    %v847 = vunpack.c.l.b16 %v300
    %v848 = vunpack.c.h.b16 %v300
    %v849 = vunpack.c.l.b16 %v301
    %v850 = vunpack.c.h.b16 %v301
    %v851 = vunpack.c.l.b16 %v302
    %v852 = vunpack.c.h.b16 %v302
    %v853 = vunpack.c.l.b16 %v303
    %v854 = vunpack.c.h.b16 %v303
    %v855 = vunpack.c.l.b16 %v304
    %v856 = vunpack.c.h.b16 %v304
    %v857 = vunpack.c.l.b16 %v305
    %v858 = vunpack.c.h.b16 %v305
    %v859 = vunpack.c.l.b16 %v306
    %v860 = vunpack.c.h.b16 %v306
    %v861 = vunpack.c.l.b16 %v307
    %v862 = vunpack.c.h.b16 %v307
    %v863 = vunpack.c.l.b16 %v308
    %v864 = vunpack.c.h.b16 %v308
    %v865 = vunpack.c.l.b16 %v309
    %v866 = vunpack.c.h.b16 %v309
    %v867 = vunpack.c.l.b16 %v310
    %v868 = vunpack.c.h.b16 %v310
    %v869 = vunpack.c.l.b16 %v311
    %v870 = vunpack.c.h.b16 %v311
    %v871 = vunpack.c.l.b16 %v312
    %v872 = vunpack.c.h.b16 %v312
    %v873 = vunpack.c.l.b16 %v313
    %v874 = vunpack.c.h.b16 %v313
    %v875 = vunpack.c.l.b16 %v314
    %v876 = vunpack.c.h.b16 %v314
    %v877 = vunpack.c.l.b16 %v315
    %v878 = vunpack.c.h.b16 %v315
    %v879 = vunpack.c.l.b16 %v316
    %v880 = vunpack.c.h.b16 %v316
    %v881 = vunpack.c.l.b16 %v317
    %v882 = vunpack.c.h.b16 %v317
    %v883 = vunpack.c.l.b16 %v318
    %v884 = vunpack.c.h.b16 %v318
    %v885 = vunpack.c.l.b16 %v319
    %v886 = vunpack.c.h.b16 %v319
    %v887 = vunpack.c.l.b16 %v320
    %v888 = vunpack.c.h.b16 %v320
    %v889 = vunpack.c.l.b16 %v321
    %v890 = vunpack.c.h.b16 %v321
    %v891 = vunpack.c.l.b16 %v322
    %v892 = vunpack.c.h.b16 %v322
    %v893 = vunpack.c.l.b16 %v323
    %v894 = vunpack.c.h.b16 %v323
    %v895 = vunpack.c.l.b16 %v324
    %v896 = vunpack.c.h.b16 %v324
    %v897 = vunpack.c.l.b16 %v325
    %v898 = vunpack.c.h.b16 %v325
    %v899 = vunpack.c.l.b16 %v326
    %v900 = vunpack.c.h.b16 %v326
    %v901 = vunpack.c.l.b16 %v327
    %v902 = vunpack.c.h.b16 %v327
    %v903 = vunpack.c.l.b16 %v328
    %v904 = vunpack.c.h.b16 %v328
    %v905 = vunpack.c.l.b16 %v329
    %v906 = vunpack.c.h.b16 %v329
    %v907 = vunpack.c.l.b16 %v330
    %v908 = vunpack.c.h.b16 %v330
    %v909 = vunpack.c.l.b16 %v331
    %v910 = vunpack.c.h.b16 %v331
    %v911 = vunpack.c.l.b16 %v332
    %v912 = vunpack.c.h.b16 %v332
    %v913 = vunpack.c.l.b16 %v333
    %v914 = vunpack.c.h.b16 %v333
    %v915 = vunpack.c.l.b16 %v334
    %v916 = vunpack.c.h.b16 %v334
    %v917 = vunpack.c.l.b16 %v335
    %v918 = vunpack.c.h.b16 %v335
    %v919 = vunpack.c.l.b16 %v336
    %v920 = vunpack.c.h.b16 %v336
    %v921 = vunpack.c.l.b16 %v337
    %v922 = vunpack.c.h.b16 %v337
    %v923 = vunpack.c.l.b16 %v338
    %v924 = vunpack.c.h.b16 %v338
    %v925 = vpack.c.b16 %v545, %v541
    %v926 = vpack.c.b16 %v546, %v542
    %v927 = vpack.c.b16 %v547, %v543
    %v928 = vpack.c.b16 %v548, %v544
    %v929 = vpack.c.b16 %v553, %v549
    %v930 = vpack.c.b16 %v554, %v550
    %v931 = vpack.c.b16 %v555, %v551
    %v932 = vpack.c.b16 %v556, %v552
    %v933 = vpack.c.b16 %v561, %v557
    %v934 = vpack.c.b16 %v562, %v558
    %v935 = vpack.c.b16 %v563, %v559
    %v936 = vpack.c.b16 %v564, %v560
    %v937 = vpack.c.b16 %v569, %v565
    %v938 = vpack.c.b16 %v570, %v566
    %v939 = vpack.c.b16 %v571, %v567
    %v940 = vpack.c.b16 %v572, %v568
    %v941 = vpack.c.b16 %v577, %v573
    %v942 = vpack.c.b16 %v578, %v574
    %v943 = vpack.c.b16 %v579, %v575
    %v944 = vpack.c.b16 %v580, %v576
    %v945 = vpack.c.b16 %v585, %v581
    %v946 = vpack.c.b16 %v586, %v582
    %v947 = vpack.c.b16 %v587, %v583
    %v948 = vpack.c.b16 %v588, %v584
    %v949 = vpack.c.b16 %v593, %v589
    %v950 = vpack.c.b16 %v594, %v590
    %v951 = vpack.c.b16 %v595, %v591
    %v952 = vpack.c.b16 %v596, %v592
    %v953 = vpack.c.b16 %v601, %v597
    %v954 = vpack.c.b16 %v602, %v598
    %v955 = vpack.c.b16 %v603, %v599
    %v956 = vpack.c.b16 %v604, %v600
    %v957 = vpack.c.b16 %v609, %v605
    %v958 = vpack.c.b16 %v610, %v606
    %v959 = vpack.c.b16 %v611, %v607
    %v960 = vpack.c.b16 %v612, %v608
    %v961 = vpack.c.b16 %v617, %v613
    %v962 = vpack.c.b16 %v618, %v614
    %v963 = vpack.c.b16 %v619, %v615
    %v964 = vpack.c.b16 %v620, %v616
    %v965 = vpack.c.b16 %v625, %v621
    %v966 = vpack.c.b16 %v626, %v622
    %v967 = vpack.c.b16 %v627, %v623
    %v968 = vpack.c.b16 %v628, %v624
    %v969 = vpack.c.b16 %v633, %v629
    %v970 = vpack.c.b16 %v634, %v630
    %v971 = vpack.c.b16 %v635, %v631
    %v972 = vpack.c.b16 %v636, %v632
    %v973 = vpack.c.b16 %v641, %v637
    %v974 = vpack.c.b16 %v642, %v638
    %v975 = vpack.c.b16 %v643, %v639
    %v976 = vpack.c.b16 %v644, %v640
    %v977 = vpack.c.b16 %v649, %v645
    %v978 = vpack.c.b16 %v650, %v646
    %v979 = vpack.c.b16 %v651, %v647
    %v980 = vpack.c.b16 %v652, %v648
    %v981 = vpack.c.b16 %v657, %v653
    %v982 = vpack.c.b16 %v658, %v654
    %v983 = vpack.c.b16 %v659, %v655
    %v984 = vpack.c.b16 %v660, %v656
    %v985 = vpack.c.b16 %v665, %v661
    %v986 = vpack.c.b16 %v666, %v662
    %v987 = vpack.c.b16 %v667, %v663
    %v988 = vpack.c.b16 %v668, %v664
    %v989 = vpack.c.b16 %v673, %v669
    %v990 = vpack.c.b16 %v674, %v670
    %v991 = vpack.c.b16 %v675, %v671
    %v992 = vpack.c.b16 %v676, %v672
    %v993 = vpack.c.b16 %v681, %v677
    %v994 = vpack.c.b16 %v682, %v678
    %v995 = vpack.c.b16 %v683, %v679
    %v996 = vpack.c.b16 %v684, %v680
    %v997 = vpack.c.b16 %v689, %v685
    %v998 = vpack.c.b16 %v690, %v686
    %v999 = vpack.c.b16 %v691, %v687
    %v1000 = vpack.c.b16 %v692, %v688
    %v1001 = vpack.c.b16 %v697, %v693
    %v1002 = vpack.c.b16 %v698, %v694
    %v1003 = vpack.c.b16 %v699, %v695
    %v1004 = vpack.c.b16 %v700, %v696
    %v1005 = vpack.c.b16 %v705, %v701
    %v1006 = vpack.c.b16 %v706, %v702
    %v1007 = vpack.c.b16 %v707, %v703
    %v1008 = vpack.c.b16 %v708, %v704
    %v1009 = vpack.c.b16 %v713, %v709
    %v1010 = vpack.c.b16 %v714, %v710
    %v1011 = vpack.c.b16 %v715, %v711
    %v1012 = vpack.c.b16 %v716, %v712
    %v1013 = vpack.c.b16 %v721, %v717
    %v1014 = vpack.c.b16 %v722, %v718
    %v1015 = vpack.c.b16 %v723, %v719
    %v1016 = vpack.c.b16 %v724, %v720
    %v1017 = vpack.c.b16 %v729, %v725
    %v1018 = vpack.c.b16 %v730, %v726
    %v1019 = vpack.c.b16 %v731, %v727
    %v1020 = vpack.c.b16 %v732, %v728
    %v1021 = vpack.c.b16 %v737, %v733
    %v1022 = vpack.c.b16 %v738, %v734
    %v1023 = vpack.c.b16 %v739, %v735
    %v1024 = vpack.c.b16 %v740, %v736
    %v1025 = vpack.c.b16 %v745, %v741
    %v1026 = vpack.c.b16 %v746, %v742
    %v1027 = vpack.c.b16 %v747, %v743
    %v1028 = vpack.c.b16 %v748, %v744
    %v1029 = vpack.c.b16 %v753, %v749
    %v1030 = vpack.c.b16 %v754, %v750
    %v1031 = vpack.c.b16 %v755, %v751
    %v1032 = vpack.c.b16 %v756, %v752
    %v1033 = vpack.c.b16 %v761, %v757
    %v1034 = vpack.c.b16 %v762, %v758
    %v1035 = vpack.c.b16 %v763, %v759
    %v1036 = vpack.c.b16 %v764, %v760
    %v1037 = vpack.c.b16 %v769, %v765
    %v1038 = vpack.c.b16 %v770, %v766
    %v1039 = vpack.c.b16 %v771, %v767
    %v1040 = vpack.c.b16 %v772, %v768
    %v1041 = vpack.c.b16 %v777, %v773
    %v1042 = vpack.c.b16 %v778, %v774
    %v1043 = vpack.c.b16 %v779, %v775
    %v1044 = vpack.c.b16 %v780, %v776
    %v1045 = vpack.c.b16 %v785, %v781
    %v1046 = vpack.c.b16 %v786, %v782
    %v1047 = vpack.c.b16 %v787, %v783
    %v1048 = vpack.c.b16 %v788, %v784
    %v1049 = vpack.c.b16 %v793, %v789
    %v1050 = vpack.c.b16 %v794, %v790
    %v1051 = vpack.c.b16 %v795, %v791
    %v1052 = vpack.c.b16 %v796, %v792
    %v1053 = vpack.c.b16 %v801, %v797
    %v1054 = vpack.c.b16 %v802, %v798
    %v1055 = vpack.c.b16 %v803, %v799
    %v1056 = vpack.c.b16 %v804, %v800
    %v1057 = vpack.c.b16 %v809, %v805
    %v1058 = vpack.c.b16 %v810, %v806
    %v1059 = vpack.c.b16 %v811, %v807
    %v1060 = vpack.c.b16 %v812, %v808
    %v1061 = vpack.c.b16 %v817, %v813
    %v1062 = vpack.c.b16 %v818, %v814
    %v1063 = vpack.c.b16 %v819, %v815
    %v1064 = vpack.c.b16 %v820, %v816
    %v1065 = vpack.c.b16 %v825, %v821
    %v1066 = vpack.c.b16 %v826, %v822
    %v1067 = vpack.c.b16 %v827, %v823
    %v1068 = vpack.c.b16 %v828, %v824
    %v1069 = vpack.c.b16 %v833, %v829
    %v1070 = vpack.c.b16 %v834, %v830
    %v1071 = vpack.c.b16 %v835, %v831
    %v1072 = vpack.c.b16 %v836, %v832
    %v1073 = vpack.c.b16 %v841, %v837
    %v1074 = vpack.c.b16 %v842, %v838
    %v1075 = vpack.c.b16 %v843, %v839
    %v1076 = vpack.c.b16 %v844, %v840
    %v1077 = vpack.c.b16 %v849, %v845
    %v1078 = vpack.c.b16 %v850, %v846
    %v1079 = vpack.c.b16 %v851, %v847
    %v1080 = vpack.c.b16 %v852, %v848
    %v1081 = vpack.c.b16 %v857, %v853
    %v1082 = vpack.c.b16 %v858, %v854
    %v1083 = vpack.c.b16 %v859, %v855
    %v1084 = vpack.c.b16 %v860, %v856
    %v1085 = vpack.c.b16 %v865, %v861
    %v1086 = vpack.c.b16 %v866, %v862
    %v1087 = vpack.c.b16 %v867, %v863
    %v1088 = vpack.c.b16 %v868, %v864
    %v1089 = vpack.c.b16 %v873, %v869
    %v1090 = vpack.c.b16 %v874, %v870
    %v1091 = vpack.c.b16 %v875, %v871
    %v1092 = vpack.c.b16 %v876, %v872
    %v1093 = vpack.c.b16 %v881, %v877
    %v1094 = vpack.c.b16 %v882, %v878
    %v1095 = vpack.c.b16 %v883, %v879
    %v1096 = vpack.c.b16 %v884, %v880
    %v1097 = vpack.c.b16 %v889, %v885
    %v1098 = vpack.c.b16 %v890, %v886
    %v1099 = vpack.c.b16 %v891, %v887
    %v1100 = vpack.c.b16 %v892, %v888
    %v1101 = vpack.c.b16 %v897, %v893
    %v1102 = vpack.c.b16 %v898, %v894
    %v1103 = vpack.c.b16 %v899, %v895
    %v1104 = vpack.c.b16 %v900, %v896
    %v1105 = vpack.c.b16 %v905, %v901
    %v1106 = vpack.c.b16 %v906, %v902
    %v1107 = vpack.c.b16 %v907, %v903
    %v1108 = vpack.c.b16 %v908, %v904
    %v1109 = vpack.c.b16 %v913, %v909
    %v1110 = vpack.c.b16 %v914, %v910
    %v1111 = vpack.c.b16 %v915, %v911
    %v1112 = vpack.c.b16 %v916, %v912
    %v1113 = vpack.c.b16 %v921, %v917
    %v1114 = vpack.c.b16 %v922, %v918
    %v1115 = vpack.c.b16 %v923, %v919
    %v1116 = vpack.c.b16 %v924, %v920
    %1309 = vmatpush.bf16.msra.mxu0 %v953
    %1310 = vmatpush.bf16.msra.mxu0 %v949
    %1311 = vmatpush.bf16.msra.mxu0 %v945
    %1312 = vmatpush.bf16.msra.mxu0 %v941
    %1313 = vmatpush.bf16.msra.mxu0 %v937
    %1314 = vmatpush.bf16.msra.mxu0 %v933
    %1315 = vmatpush.bf16.msra.mxu0 %v929
    %1316 = vmatpush.bf16.msra.mxu0 %v925
    %1317 = vmatmul.bf16.gmra.mxu0 %v141
    %v1318 = vpop.f32.mrf.mxu0
    %v1319 = vadd.f32 %v341, %v1318
    %v1320 = vpop.f32.mrf.mxu0
    %1321 = vdwg.mxu0
    %1322 = vmatpush.bf16.msra.mxu0 %v985
    %1323 = vmatpush.bf16.msra.mxu0 %v981
    %1324 = vmatpush.bf16.msra.mxu0 %v977
    %1325 = vmatpush.bf16.msra.mxu0 %v973
    %1326 = vmatpush.bf16.msra.mxu0 %v969
    %1327 = vmatpush.bf16.msra.mxu0 %v965
    %1328 = vmatpush.bf16.msra.mxu0 %v961
    %1329 = vmatpush.bf16.msra.mxu0 %v957
    %1330 = vmatmul.bf16.gmra.mxu0 %v142
    %v1331 = vpop.f32.mrf.mxu0
    %v1332 = vadd.f32 %v1319, %v1331
    %v1333 = vpop.f32.mrf.mxu0
    %1334 = vdwg.mxu0
    %1335 = vmatpush.bf16.msra.mxu0 %v1017
    %1336 = vmatpush.bf16.msra.mxu0 %v1013
    %1337 = vmatpush.bf16.msra.mxu0 %v1009
    %1338 = vmatpush.bf16.msra.mxu0 %v1005
    %1339 = vmatpush.bf16.msra.mxu0 %v1001
    %1340 = vmatpush.bf16.msra.mxu0 %v997
    %1341 = vmatpush.bf16.msra.mxu0 %v993
    %1342 = vmatpush.bf16.msra.mxu0 %v989
    %1343 = vmatmul.bf16.gmra.mxu0 %v143
    %v1344 = vpop.f32.mrf.mxu0
    %v1345 = vadd.f32 %v1332, %v1344
    %v1346 = vpop.f32.mrf.mxu0
    %1347 = vdwg.mxu0
    %1348 = vmatpush.bf16.msra.mxu0 %v1049
    %1349 = vmatpush.bf16.msra.mxu0 %v1045
    %1350 = vmatpush.bf16.msra.mxu0 %v1041
    %1351 = vmatpush.bf16.msra.mxu0 %v1037
    %1352 = vmatpush.bf16.msra.mxu0 %v1033
    %1353 = vmatpush.bf16.msra.mxu0 %v1029
    %1354 = vmatpush.bf16.msra.mxu0 %v1025
    %1355 = vmatpush.bf16.msra.mxu0 %v1021
    %1356 = vmatmul.bf16.gmra.mxu0 %v144
    %v1357 = vpop.f32.mrf.mxu0
    %v1358 = vadd.f32 %v1345, %v1357
    %v1359 = vpop.f32.mrf.mxu0
    %1360 = vdwg.mxu0
    %1361 = vmatpush.bf16.msra.mxu0 %v1081
    %1362 = vmatpush.bf16.msra.mxu0 %v1077
    %1363 = vmatpush.bf16.msra.mxu0 %v1073
    %1364 = vmatpush.bf16.msra.mxu0 %v1069
    %1365 = vmatpush.bf16.msra.mxu0 %v1065
    %1366 = vmatpush.bf16.msra.mxu0 %v1061
    %1367 = vmatpush.bf16.msra.mxu0 %v1057
    %1368 = vmatpush.bf16.msra.mxu0 %v1053
    %1369 = vmatmul.bf16.gmra.mxu0 %v145
    %v1370 = vpop.f32.mrf.mxu0
    %v1371 = vadd.f32 %v1358, %v1370
    %v1372 = vpop.f32.mrf.mxu0
    %1373 = vdwg.mxu0
    %1374 = vmatpush.bf16.msra.mxu0 %v1113
    %1375 = vmatpush.bf16.msra.mxu0 %v1109
    %1376 = vmatpush.bf16.msra.mxu0 %v1105
    %1377 = vmatpush.bf16.msra.mxu0 %v1101
    %1378 = vmatpush.bf16.msra.mxu0 %v1097
    %1379 = vmatpush.bf16.msra.mxu0 %v1093
    %1380 = vmatpush.bf16.msra.mxu0 %v1089
    %1381 = vmatpush.bf16.msra.mxu0 %v1085
    %1382 = vmatmul.bf16.gmra.mxu0 %v146
    %v1383 = vpop.f32.mrf.mxu0
    %v1384 = vadd.f32 %v1371, %v1383
    %v1385 = vpop.f32.mrf.mxu0
    %1386 = vdwg.mxu0
    %1387 = vmatpush.bf16.msra.mxu0 %v954
    %1388 = vmatpush.bf16.msra.mxu0 %v950
    %1389 = vmatpush.bf16.msra.mxu0 %v946
    %1390 = vmatpush.bf16.msra.mxu0 %v942
    %1391 = vmatpush.bf16.msra.mxu0 %v938
    %1392 = vmatpush.bf16.msra.mxu0 %v934
    %1393 = vmatpush.bf16.msra.mxu0 %v930
    %1394 = vmatpush.bf16.msra.mxu0 %v926
    %1395 = vmatmul.bf16.gmra.mxu0 %v141
    %v1396 = vpop.f32.mrf.mxu0
    %v1397 = vadd.f32 %v342, %v1396
    %v1398 = vpop.f32.mrf.mxu0
    %1399 = vdwg.mxu0
    %1400 = vmatpush.bf16.msra.mxu0 %v986
    %1401 = vmatpush.bf16.msra.mxu0 %v982
    %1402 = vmatpush.bf16.msra.mxu0 %v978
    %1403 = vmatpush.bf16.msra.mxu0 %v974
    %1404 = vmatpush.bf16.msra.mxu0 %v970
    %1405 = vmatpush.bf16.msra.mxu0 %v966
    %1406 = vmatpush.bf16.msra.mxu0 %v962
    %1407 = vmatpush.bf16.msra.mxu0 %v958
    %1408 = vmatmul.bf16.gmra.mxu0 %v142
    %v1409 = vpop.f32.mrf.mxu0
    %v1410 = vadd.f32 %v1397, %v1409
    %v1411 = vpop.f32.mrf.mxu0
    %1412 = vdwg.mxu0
    %1413 = vmatpush.bf16.msra.mxu0 %v1018
    %1414 = vmatpush.bf16.msra.mxu0 %v1014
    %1415 = vmatpush.bf16.msra.mxu0 %v1010
    %1416 = vmatpush.bf16.msra.mxu0 %v1006
    %1417 = vmatpush.bf16.msra.mxu0 %v1002
    %1418 = vmatpush.bf16.msra.mxu0 %v998
    %1419 = vmatpush.bf16.msra.mxu0 %v994
    %1420 = vmatpush.bf16.msra.mxu0 %v990
    %1421 = vmatmul.bf16.gmra.mxu0 %v143
    %v1422 = vpop.f32.mrf.mxu0
    %v1423 = vadd.f32 %v1410, %v1422
    %v1424 = vpop.f32.mrf.mxu0
    %1425 = vdwg.mxu0
    %1426 = vmatpush.bf16.msra.mxu0 %v1050
    %1427 = vmatpush.bf16.msra.mxu0 %v1046
    %1428 = vmatpush.bf16.msra.mxu0 %v1042
    %1429 = vmatpush.bf16.msra.mxu0 %v1038
    %1430 = vmatpush.bf16.msra.mxu0 %v1034
    %1431 = vmatpush.bf16.msra.mxu0 %v1030
    %1432 = vmatpush.bf16.msra.mxu0 %v1026
    %1433 = vmatpush.bf16.msra.mxu0 %v1022
    %1434 = vmatmul.bf16.gmra.mxu0 %v144
    %v1435 = vpop.f32.mrf.mxu0
    %v1436 = vadd.f32 %v1423, %v1435
    %v1437 = vpop.f32.mrf.mxu0
    %1438 = vdwg.mxu0
    %1439 = vmatpush.bf16.msra.mxu0 %v1082
    %1440 = vmatpush.bf16.msra.mxu0 %v1078
    %1441 = vmatpush.bf16.msra.mxu0 %v1074
    %1442 = vmatpush.bf16.msra.mxu0 %v1070
    %1443 = vmatpush.bf16.msra.mxu0 %v1066
    %1444 = vmatpush.bf16.msra.mxu0 %v1062
    %1445 = vmatpush.bf16.msra.mxu0 %v1058
    %1446 = vmatpush.bf16.msra.mxu0 %v1054
    %1447 = vmatmul.bf16.gmra.mxu0 %v145
    %v1448 = vpop.f32.mrf.mxu0
    %v1449 = vadd.f32 %v1436, %v1448
    %v1450 = vpop.f32.mrf.mxu0
    %1451 = vdwg.mxu0
    %1452 = vmatpush.bf16.msra.mxu0 %v1114
    %1453 = vmatpush.bf16.msra.mxu0 %v1110
    %1454 = vmatpush.bf16.msra.mxu0 %v1106
    %1455 = vmatpush.bf16.msra.mxu0 %v1102
    %1456 = vmatpush.bf16.msra.mxu0 %v1098
    %1457 = vmatpush.bf16.msra.mxu0 %v1094
    %1458 = vmatpush.bf16.msra.mxu0 %v1090
    %1459 = vmatpush.bf16.msra.mxu0 %v1086
    %1460 = vmatmul.bf16.gmra.mxu0 %v146
    %v1461 = vpop.f32.mrf.mxu0
    %v1462 = vadd.f32 %v1449, %v1461
    %v1463 = vpop.f32.mrf.mxu0
    %1464 = vdwg.mxu0
    %1465 = vmatpush.bf16.msra.mxu0 %v955
    %1466 = vmatpush.bf16.msra.mxu0 %v951
    %1467 = vmatpush.bf16.msra.mxu0 %v947
    %1468 = vmatpush.bf16.msra.mxu0 %v943
    %1469 = vmatpush.bf16.msra.mxu0 %v939
    %1470 = vmatpush.bf16.msra.mxu0 %v935
    %1471 = vmatpush.bf16.msra.mxu0 %v931
    %1472 = vmatpush.bf16.msra.mxu0 %v927
    %1473 = vmatmul.bf16.gmra.mxu0 %v141
    %v1474 = vpop.f32.mrf.mxu0
    %v1475 = vadd.f32 %v343, %v1474
    %v1476 = vpop.f32.mrf.mxu0
    %1477 = vdwg.mxu0
    %1478 = vmatpush.bf16.msra.mxu0 %v987
    %1479 = vmatpush.bf16.msra.mxu0 %v983
    %1480 = vmatpush.bf16.msra.mxu0 %v979
    %1481 = vmatpush.bf16.msra.mxu0 %v975
    %1482 = vmatpush.bf16.msra.mxu0 %v971
    %1483 = vmatpush.bf16.msra.mxu0 %v967
    %1484 = vmatpush.bf16.msra.mxu0 %v963
    %1485 = vmatpush.bf16.msra.mxu0 %v959
    %1486 = vmatmul.bf16.gmra.mxu0 %v142
    %v1487 = vpop.f32.mrf.mxu0
    %v1488 = vadd.f32 %v1475, %v1487
    %v1489 = vpop.f32.mrf.mxu0
    %1490 = vdwg.mxu0
    %1491 = vmatpush.bf16.msra.mxu0 %v1019
    %1492 = vmatpush.bf16.msra.mxu0 %v1015
    %1493 = vmatpush.bf16.msra.mxu0 %v1011
    %1494 = vmatpush.bf16.msra.mxu0 %v1007
    %1495 = vmatpush.bf16.msra.mxu0 %v1003
    %1496 = vmatpush.bf16.msra.mxu0 %v999
    %1497 = vmatpush.bf16.msra.mxu0 %v995
    %1498 = vmatpush.bf16.msra.mxu0 %v991
    %1499 = vmatmul.bf16.gmra.mxu0 %v143
    %v1500 = vpop.f32.mrf.mxu0
    %v1501 = vadd.f32 %v1488, %v1500
    %v1502 = vpop.f32.mrf.mxu0
    %1503 = vdwg.mxu0
    %1504 = vmatpush.bf16.msra.mxu0 %v1051
    %1505 = vmatpush.bf16.msra.mxu0 %v1047
    %1506 = vmatpush.bf16.msra.mxu0 %v1043
    %1507 = vmatpush.bf16.msra.mxu0 %v1039
    %1508 = vmatpush.bf16.msra.mxu0 %v1035
    %1509 = vmatpush.bf16.msra.mxu0 %v1031
    %1510 = vmatpush.bf16.msra.mxu0 %v1027
    %1511 = vmatpush.bf16.msra.mxu0 %v1023
    %1512 = vmatmul.bf16.gmra.mxu0 %v144
    %v1513 = vpop.f32.mrf.mxu0
    %v1514 = vadd.f32 %v1501, %v1513
    %v1515 = vpop.f32.mrf.mxu0
    %1516 = vdwg.mxu0
    %1517 = vmatpush.bf16.msra.mxu0 %v1083
    %1518 = vmatpush.bf16.msra.mxu0 %v1079
    %1519 = vmatpush.bf16.msra.mxu0 %v1075
    %1520 = vmatpush.bf16.msra.mxu0 %v1071
    %1521 = vmatpush.bf16.msra.mxu0 %v1067
    %1522 = vmatpush.bf16.msra.mxu0 %v1063
    %1523 = vmatpush.bf16.msra.mxu0 %v1059
    %1524 = vmatpush.bf16.msra.mxu0 %v1055
    %1525 = vmatmul.bf16.gmra.mxu0 %v145
    %v1526 = vpop.f32.mrf.mxu0
    %v1527 = vadd.f32 %v1514, %v1526
    %v1528 = vpop.f32.mrf.mxu0
    %1529 = vdwg.mxu0
    %1530 = vmatpush.bf16.msra.mxu0 %v1115
    %1531 = vmatpush.bf16.msra.mxu0 %v1111
    %1532 = vmatpush.bf16.msra.mxu0 %v1107
    %1533 = vmatpush.bf16.msra.mxu0 %v1103
    %1534 = vmatpush.bf16.msra.mxu0 %v1099
    %1535 = vmatpush.bf16.msra.mxu0 %v1095
    %1536 = vmatpush.bf16.msra.mxu0 %v1091
    %1537 = vmatpush.bf16.msra.mxu0 %v1087
    %1538 = vmatmul.bf16.gmra.mxu0 %v146
    %v1539 = vpop.f32.mrf.mxu0
    %v1540 = vadd.f32 %v1527, %v1539
    %v1541 = vpop.f32.mrf.mxu0
    %1542 = vdwg.mxu0
    %1543 = vmatpush.bf16.msra.mxu0 %v956
    %1544 = vmatpush.bf16.msra.mxu0 %v952
    %1545 = vmatpush.bf16.msra.mxu0 %v948
    %1546 = vmatpush.bf16.msra.mxu0 %v944
    %1547 = vmatpush.bf16.msra.mxu0 %v940
    %1548 = vmatpush.bf16.msra.mxu0 %v936
    %1549 = vmatpush.bf16.msra.mxu0 %v932
    %1550 = vmatpush.bf16.msra.mxu0 %v928
    %1551 = vmatmul.bf16.gmra.mxu0 %v141
    %v1552 = vpop.f32.mrf.mxu0
    %v1553 = vadd.f32 %v344, %v1552
    %v1554 = vpop.f32.mrf.mxu0
    %1555 = vdwg.mxu0
    %1556 = vmatpush.bf16.msra.mxu0 %v988
    %1557 = vmatpush.bf16.msra.mxu0 %v984
    %1558 = vmatpush.bf16.msra.mxu0 %v980
    %1559 = vmatpush.bf16.msra.mxu0 %v976
    %1560 = vmatpush.bf16.msra.mxu0 %v972
    %1561 = vmatpush.bf16.msra.mxu0 %v968
    %1562 = vmatpush.bf16.msra.mxu0 %v964
    %1563 = vmatpush.bf16.msra.mxu0 %v960
    %1564 = vmatmul.bf16.gmra.mxu0 %v142
    %v1565 = vpop.f32.mrf.mxu0
    %v1566 = vadd.f32 %v1553, %v1565
    %v1567 = vpop.f32.mrf.mxu0
    %1568 = vdwg.mxu0
    %1569 = vmatpush.bf16.msra.mxu0 %v1020
    %1570 = vmatpush.bf16.msra.mxu0 %v1016
    %1571 = vmatpush.bf16.msra.mxu0 %v1012
    %1572 = vmatpush.bf16.msra.mxu0 %v1008
    %1573 = vmatpush.bf16.msra.mxu0 %v1004
    %1574 = vmatpush.bf16.msra.mxu0 %v1000
    %1575 = vmatpush.bf16.msra.mxu0 %v996
    %1576 = vmatpush.bf16.msra.mxu0 %v992
    %1577 = vmatmul.bf16.gmra.mxu0 %v143
    %v1578 = vpop.f32.mrf.mxu0
    %v1579 = vadd.f32 %v1566, %v1578
    %v1580 = vpop.f32.mrf.mxu0
    %1581 = vdwg.mxu0
    %1582 = vmatpush.bf16.msra.mxu0 %v1052
    %1583 = vmatpush.bf16.msra.mxu0 %v1048
    %1584 = vmatpush.bf16.msra.mxu0 %v1044
    %1585 = vmatpush.bf16.msra.mxu0 %v1040
    %1586 = vmatpush.bf16.msra.mxu0 %v1036
    %1587 = vmatpush.bf16.msra.mxu0 %v1032
    %1588 = vmatpush.bf16.msra.mxu0 %v1028
    %1589 = vmatpush.bf16.msra.mxu0 %v1024
    %1590 = vmatmul.bf16.gmra.mxu0 %v144
    %v1591 = vpop.f32.mrf.mxu0
    %v1592 = vadd.f32 %v1579, %v1591
    %v1593 = vpop.f32.mrf.mxu0
    %1594 = vdwg.mxu0
    %1595 = vmatpush.bf16.msra.mxu0 %v1084
    %1596 = vmatpush.bf16.msra.mxu0 %v1080
    %1597 = vmatpush.bf16.msra.mxu0 %v1076
    %1598 = vmatpush.bf16.msra.mxu0 %v1072
    %1599 = vmatpush.bf16.msra.mxu0 %v1068
    %1600 = vmatpush.bf16.msra.mxu0 %v1064
    %1601 = vmatpush.bf16.msra.mxu0 %v1060
    %1602 = vmatpush.bf16.msra.mxu0 %v1056
    %1603 = vmatmul.bf16.gmra.mxu0 %v145
    %v1604 = vpop.f32.mrf.mxu0
    %v1605 = vadd.f32 %v1592, %v1604
    %v1606 = vpop.f32.mrf.mxu0
    %1607 = vdwg.mxu0
    %1608 = vmatpush.bf16.msra.mxu0 %v1116
    %1609 = vmatpush.bf16.msra.mxu0 %v1112
    %1610 = vmatpush.bf16.msra.mxu0 %v1108
    %1611 = vmatpush.bf16.msra.mxu0 %v1104
    %1612 = vmatpush.bf16.msra.mxu0 %v1100
    %1613 = vmatpush.bf16.msra.mxu0 %v1096
    %1614 = vmatpush.bf16.msra.mxu0 %v1092
    %1615 = vmatpush.bf16.msra.mxu0 %v1088
    %1616 = vmatmul.bf16.gmra.mxu0 %v146
    %v1617 = vpop.f32.mrf.mxu0
    %v1618 = vadd.f32 %v1605, %v1617
    %v1619 = vpop.f32.mrf.mxu0
    %1620 = vdwg.mxu0
    %v1621 = vmax.f32 %v1384, 0.0
    %v1622 = vmax.f32 %v1462, 0.0
    %v1623 = vmax.f32 %v1540, 0.0
    %v1624 = vmax.f32 %v1618, 0.0
    %v1625 = vpack.c.bf16 %v1621, %v1621
    %v1626 = vpack.c.bf16 %v1622, %v1622
    %v1627 = vpack.c.bf16 %v1623, %v1623
    %v1628 = vpack.c.bf16 %v1624, %v1624
    %v1629 = vld [vmem:[#allocation5] sm:$0xff]
    %v1630 = vld [vmem:[#allocation5 + $0x8] sm:$0xff]
    %v1631 = vld [vmem:[#allocation5 + $0x10] sm:$0xff]
    %v1632 = vld [vmem:[#allocation5 + $0x18] sm:$0xff]
    %v1633 = vld [vmem:[#allocation5 + $0x20] sm:$0xff]
    %v1634 = vld [vmem:[#allocation5 + $0x28] sm:$0xff]
    %v1635 = vld [vmem:[#allocation5 + $0x30] sm:$0xff]
    %v1636 = vld [vmem:[#allocation5 + $0x38] sm:$0xff]
    %v1637 = vld [vmem:[#allocation5 + $0x40] sm:$0xff]
    %v1638 = vld [vmem:[#allocation5 + $0x48] sm:$0xff]
    %v1639 = vld [vmem:[#allocation5 + $0x50] sm:$0xff]
    %v1640 = vld [vmem:[#allocation5 + $0x58] sm:$0xff]
    %v1641 = vld [vmem:[#allocation5 + $0x60] sm:$0xff]
    %v1642 = vld [vmem:[#allocation5 + $0x68] sm:$0xff]
    %v1643 = vld [vmem:[#allocation5 + $0x70] sm:$0xff]
    %v1644 = vld [vmem:[#allocation5 + $0x78] sm:$0xff]
    %v1645 = vld [vmem:[#allocation5 + $0x80] sm:$0xff]
    %v1646 = vld [vmem:[#allocation5 + $0x88] sm:$0xff]
    %v1647 = vld [vmem:[#allocation5 + $0x90] sm:$0xff]
    %v1648 = vld [vmem:[#allocation5 + $0x98] sm:$0xff]
    %v1649 = vld [vmem:[#allocation5 + $0xa0] sm:$0xff]
    %v1650 = vld [vmem:[#allocation5 + $0xa8] sm:$0xff]
    %v1651 = vld [vmem:[#allocation5 + $0xb0] sm:$0xff]
    %v1652 = vld [vmem:[#allocation5 + $0xb8] sm:$0xff]
    %v1653 = vld [vmem:[#allocation5 + $0xc0] sm:$0xff]
    %v1654 = vld [vmem:[#allocation5 + $0xc8] sm:$0xff]
    %v1655 = vld [vmem:[#allocation5 + $0xd0] sm:$0xff]
    %v1656 = vld [vmem:[#allocation5 + $0xd8] sm:$0xff]
    %v1657 = vld [vmem:[#allocation5 + $0xe0] sm:$0xff]
    %v1658 = vld [vmem:[#allocation5 + $0xe8] sm:$0xff]
    %v1659 = vld [vmem:[#allocation5 + $0xf0] sm:$0xff]
    %v1660 = vld [vmem:[#allocation5 + $0xf8] sm:$0xff]
    %v1661 = vld [vmem:[#allocation5 + $0x100] sm:$0xff]
    %v1662 = vld [vmem:[#allocation5 + $0x108] sm:$0xff]
    %v1663 = vld [vmem:[#allocation5 + $0x110] sm:$0xff]
    %v1664 = vld [vmem:[#allocation5 + $0x118] sm:$0xff]
    %v1665 = vld [vmem:[#allocation5 + $0x120] sm:$0xff]
    %v1666 = vld [vmem:[#allocation5 + $0x128] sm:$0xff]
    %v1667 = vld [vmem:[#allocation5 + $0x130] sm:$0xff]
    %v1668 = vld [vmem:[#allocation5 + $0x138] sm:$0xff]
    %v1669 = vld [vmem:[#allocation5 + $0x140] sm:$0xff]
    %v1670 = vld [vmem:[#allocation5 + $0x148] sm:$0xff]
    %v1671 = vld [vmem:[#allocation5 + $0x150] sm:$0xff]
    %v1672 = vld [vmem:[#allocation5 + $0x158] sm:$0xff]
    %v1673 = vld [vmem:[#allocation5 + $0x160] sm:$0xff]
    %v1674 = vld [vmem:[#allocation5 + $0x168] sm:$0xff]
    %v1675 = vld [vmem:[#allocation5 + $0x170] sm:$0xff]
    %v1676 = vld [vmem:[#allocation5 + $0x178] sm:$0xff]
    %v1677 = vld [vmem:[#allocation5 + $0x180] sm:$0xff]
    %v1678 = vld [vmem:[#allocation5 + $0x188] sm:$0xff]
    %v1679 = vld [vmem:[#allocation5 + $0x190] sm:$0xff]
    %v1680 = vld [vmem:[#allocation5 + $0x198] sm:$0xff]
    %v1681 = vld [vmem:[#allocation5 + $0x1a0] sm:$0xff]
    %v1682 = vld [vmem:[#allocation5 + $0x1a8] sm:$0xff]
    %v1683 = vld [vmem:[#allocation5 + $0x1b0] sm:$0xff]
    %v1684 = vld [vmem:[#allocation5 + $0x1b8] sm:$0xff]
    %v1685 = vld [vmem:[#allocation5 + $0x1c0] sm:$0xff]
    %v1686 = vld [vmem:[#allocation5 + $0x1c8] sm:$0xff]
    %v1687 = vld [vmem:[#allocation5 + $0x1d0] sm:$0xff]
    %v1688 = vld [vmem:[#allocation5 + $0x1d8] sm:$0xff]
    %v1689 = vld [vmem:[#allocation5 + $0x1e0] sm:$0xff]
    %v1690 = vld [vmem:[#allocation5 + $0x1e8] sm:$0xff]
    %v1691 = vld [vmem:[#allocation5 + $0x1f0] sm:$0xff]
    %v1692 = vld [vmem:[#allocation5 + $0x1f8] sm:$0xff]
    %v1693 = vld [vmem:[%s5] sm:$0x3]
    %v1695 = vperm.slane %v1693, 0
    %v1696 = vperm.slane %v1693, 1
    %v1763 = vunpack.c.l.b16 %v1629
    %v1764 = vunpack.c.h.b16 %v1629
    %v1765 = vunpack.c.l.b16 %v1630
    %v1766 = vunpack.c.h.b16 %v1630
    %v1767 = vunpack.c.l.b16 %v1631
    %v1768 = vunpack.c.h.b16 %v1631
    %v1769 = vunpack.c.l.b16 %v1632
    %v1770 = vunpack.c.h.b16 %v1632
    %v1771 = vunpack.c.l.b16 %v1633
    %v1772 = vunpack.c.h.b16 %v1633
    %v1773 = vunpack.c.l.b16 %v1634
    %v1774 = vunpack.c.h.b16 %v1634
    %v1775 = vunpack.c.l.b16 %v1635
    %v1776 = vunpack.c.h.b16 %v1635
    %v1777 = vunpack.c.l.b16 %v1636
    %v1778 = vunpack.c.h.b16 %v1636
    %v1779 = vunpack.c.l.b16 %v1637
    %v1780 = vunpack.c.h.b16 %v1637
    %v1781 = vunpack.c.l.b16 %v1638
    %v1782 = vunpack.c.h.b16 %v1638
    %v1783 = vunpack.c.l.b16 %v1639
    %v1784 = vunpack.c.h.b16 %v1639
    %v1785 = vunpack.c.l.b16 %v1640
    %v1786 = vunpack.c.h.b16 %v1640
    %v1787 = vunpack.c.l.b16 %v1641
    %v1788 = vunpack.c.h.b16 %v1641
    %v1789 = vunpack.c.l.b16 %v1642
    %v1790 = vunpack.c.h.b16 %v1642
    %v1791 = vunpack.c.l.b16 %v1643
    %v1792 = vunpack.c.h.b16 %v1643
    %v1793 = vunpack.c.l.b16 %v1644
    %v1794 = vunpack.c.h.b16 %v1644
    %v1795 = vunpack.c.l.b16 %v1645
    %v1796 = vunpack.c.h.b16 %v1645
    %v1797 = vunpack.c.l.b16 %v1646
    %v1798 = vunpack.c.h.b16 %v1646
    %v1799 = vunpack.c.l.b16 %v1647
    %v1800 = vunpack.c.h.b16 %v1647
    %v1801 = vunpack.c.l.b16 %v1648
    %v1802 = vunpack.c.h.b16 %v1648
    %v1803 = vunpack.c.l.b16 %v1649
    %v1804 = vunpack.c.h.b16 %v1649
    %v1805 = vunpack.c.l.b16 %v1650
    %v1806 = vunpack.c.h.b16 %v1650
    %v1807 = vunpack.c.l.b16 %v1651
    %v1808 = vunpack.c.h.b16 %v1651
    %v1809 = vunpack.c.l.b16 %v1652
    %v1810 = vunpack.c.h.b16 %v1652
    %v1811 = vunpack.c.l.b16 %v1653
    %v1812 = vunpack.c.h.b16 %v1653
    %v1813 = vunpack.c.l.b16 %v1654
    %v1814 = vunpack.c.h.b16 %v1654
    %v1815 = vunpack.c.l.b16 %v1655
    %v1816 = vunpack.c.h.b16 %v1655
    %v1817 = vunpack.c.l.b16 %v1656
    %v1818 = vunpack.c.h.b16 %v1656
    %v1819 = vunpack.c.l.b16 %v1657
    %v1820 = vunpack.c.h.b16 %v1657
    %v1821 = vunpack.c.l.b16 %v1658
    %v1822 = vunpack.c.h.b16 %v1658
    %v1823 = vunpack.c.l.b16 %v1659
    %v1824 = vunpack.c.h.b16 %v1659
    %v1825 = vunpack.c.l.b16 %v1660
    %v1826 = vunpack.c.h.b16 %v1660
    %v1827 = vunpack.c.l.b16 %v1661
    %v1828 = vunpack.c.h.b16 %v1661
    %v1829 = vunpack.c.l.b16 %v1662
    %v1830 = vunpack.c.h.b16 %v1662
    %v1831 = vunpack.c.l.b16 %v1663
    %v1832 = vunpack.c.h.b16 %v1663
    %v1833 = vunpack.c.l.b16 %v1664
    %v1834 = vunpack.c.h.b16 %v1664
    %v1835 = vunpack.c.l.b16 %v1665
    %v1836 = vunpack.c.h.b16 %v1665
    %v1837 = vunpack.c.l.b16 %v1666
    %v1838 = vunpack.c.h.b16 %v1666
    %v1839 = vunpack.c.l.b16 %v1667
    %v1840 = vunpack.c.h.b16 %v1667
    %v1841 = vunpack.c.l.b16 %v1668
    %v1842 = vunpack.c.h.b16 %v1668
    %v1843 = vunpack.c.l.b16 %v1669
    %v1844 = vunpack.c.h.b16 %v1669
    %v1845 = vunpack.c.l.b16 %v1670
    %v1846 = vunpack.c.h.b16 %v1670
    %v1847 = vunpack.c.l.b16 %v1671
    %v1848 = vunpack.c.h.b16 %v1671
    %v1849 = vunpack.c.l.b16 %v1672
    %v1850 = vunpack.c.h.b16 %v1672
    %v1851 = vunpack.c.l.b16 %v1673
    %v1852 = vunpack.c.h.b16 %v1673
    %v1853 = vunpack.c.l.b16 %v1674
    %v1854 = vunpack.c.h.b16 %v1674
    %v1855 = vunpack.c.l.b16 %v1675
    %v1856 = vunpack.c.h.b16 %v1675
    %v1857 = vunpack.c.l.b16 %v1676
    %v1858 = vunpack.c.h.b16 %v1676
    %v1859 = vunpack.c.l.b16 %v1677
    %v1860 = vunpack.c.h.b16 %v1677
    %v1861 = vunpack.c.l.b16 %v1678
    %v1862 = vunpack.c.h.b16 %v1678
    %v1863 = vunpack.c.l.b16 %v1679
    %v1864 = vunpack.c.h.b16 %v1679
    %v1865 = vunpack.c.l.b16 %v1680
    %v1866 = vunpack.c.h.b16 %v1680
    %v1867 = vunpack.c.l.b16 %v1681
    %v1868 = vunpack.c.h.b16 %v1681
    %v1869 = vunpack.c.l.b16 %v1682
    %v1870 = vunpack.c.h.b16 %v1682
    %v1871 = vunpack.c.l.b16 %v1683
    %v1872 = vunpack.c.h.b16 %v1683
    %v1873 = vunpack.c.l.b16 %v1684
    %v1874 = vunpack.c.h.b16 %v1684
    %v1875 = vunpack.c.l.b16 %v1685
    %v1876 = vunpack.c.h.b16 %v1685
    %v1877 = vunpack.c.l.b16 %v1686
    %v1878 = vunpack.c.h.b16 %v1686
    %v1879 = vunpack.c.l.b16 %v1687
    %v1880 = vunpack.c.h.b16 %v1687
    %v1881 = vunpack.c.l.b16 %v1688
    %v1882 = vunpack.c.h.b16 %v1688
    %v1883 = vunpack.c.l.b16 %v1689
    %v1884 = vunpack.c.h.b16 %v1689
    %v1885 = vunpack.c.l.b16 %v1690
    %v1886 = vunpack.c.h.b16 %v1690
    %v1887 = vunpack.c.l.b16 %v1691
    %v1888 = vunpack.c.h.b16 %v1691
    %v1889 = vunpack.c.l.b16 %v1692
    %v1890 = vunpack.c.h.b16 %v1692
    %v1891 = vpack.c.b16 %v1765, %v1763
    %v1892 = vpack.c.b16 %v1766, %v1764
    %v1893 = vpack.c.b16 %v1769, %v1767
    %v1894 = vpack.c.b16 %v1770, %v1768
    %v1895 = vpack.c.b16 %v1773, %v1771
    %v1896 = vpack.c.b16 %v1774, %v1772
    %v1897 = vpack.c.b16 %v1777, %v1775
    %v1898 = vpack.c.b16 %v1778, %v1776
    %v1899 = vpack.c.b16 %v1781, %v1779
    %v1900 = vpack.c.b16 %v1782, %v1780
    %v1901 = vpack.c.b16 %v1785, %v1783
    %v1902 = vpack.c.b16 %v1786, %v1784
    %v1903 = vpack.c.b16 %v1789, %v1787
    %v1904 = vpack.c.b16 %v1790, %v1788
    %v1905 = vpack.c.b16 %v1793, %v1791
    %v1906 = vpack.c.b16 %v1794, %v1792
    %v1907 = vpack.c.b16 %v1797, %v1795
    %v1908 = vpack.c.b16 %v1798, %v1796
    %v1909 = vpack.c.b16 %v1801, %v1799
    %v1910 = vpack.c.b16 %v1802, %v1800
    %v1911 = vpack.c.b16 %v1805, %v1803
    %v1912 = vpack.c.b16 %v1806, %v1804
    %v1913 = vpack.c.b16 %v1809, %v1807
    %v1914 = vpack.c.b16 %v1810, %v1808
    %v1915 = vpack.c.b16 %v1813, %v1811
    %v1916 = vpack.c.b16 %v1814, %v1812
    %v1917 = vpack.c.b16 %v1817, %v1815
    %v1918 = vpack.c.b16 %v1818, %v1816
    %v1919 = vpack.c.b16 %v1821, %v1819
    %v1920 = vpack.c.b16 %v1822, %v1820
    %v1921 = vpack.c.b16 %v1825, %v1823
    %v1922 = vpack.c.b16 %v1826, %v1824
    %v1923 = vpack.c.b16 %v1829, %v1827
    %v1924 = vpack.c.b16 %v1830, %v1828
    %v1925 = vpack.c.b16 %v1833, %v1831
    %v1926 = vpack.c.b16 %v1834, %v1832
    %v1927 = vpack.c.b16 %v1837, %v1835
    %v1928 = vpack.c.b16 %v1838, %v1836
    %v1929 = vpack.c.b16 %v1841, %v1839
    %v1930 = vpack.c.b16 %v1842, %v1840
    %v1931 = vpack.c.b16 %v1845, %v1843
    %v1932 = vpack.c.b16 %v1846, %v1844
    %v1933 = vpack.c.b16 %v1849, %v1847
    %v1934 = vpack.c.b16 %v1850, %v1848
    %v1935 = vpack.c.b16 %v1853, %v1851
    %v1936 = vpack.c.b16 %v1854, %v1852
    %v1937 = vpack.c.b16 %v1857, %v1855
    %v1938 = vpack.c.b16 %v1858, %v1856
    %v1939 = vpack.c.b16 %v1861, %v1859
    %v1940 = vpack.c.b16 %v1862, %v1860
    %v1941 = vpack.c.b16 %v1865, %v1863
    %v1942 = vpack.c.b16 %v1866, %v1864
    %v1943 = vpack.c.b16 %v1869, %v1867
    %v1944 = vpack.c.b16 %v1870, %v1868
    %v1945 = vpack.c.b16 %v1873, %v1871
    %v1946 = vpack.c.b16 %v1874, %v1872
    %v1947 = vpack.c.b16 %v1877, %v1875
    %v1948 = vpack.c.b16 %v1878, %v1876
    %v1949 = vpack.c.b16 %v1881, %v1879
    %v1950 = vpack.c.b16 %v1882, %v1880
    %v1951 = vpack.c.b16 %v1885, %v1883
    %v1952 = vpack.c.b16 %v1886, %v1884
    %v1953 = vpack.c.b16 %v1889, %v1887
    %v1954 = vpack.c.b16 %v1890, %v1888
    %2019 = vmatpush.bf16.msra.mxu0 %v1905
    %2020 = vmatpush.bf16.msra.mxu0 %v1903
    %2021 = vmatpush.bf16.msra.mxu0 %v1901
    %2022 = vmatpush.bf16.msra.mxu0 %v1899
    %2023 = vmatpush.bf16.msra.mxu0 %v1897
    %2024 = vmatpush.bf16.msra.mxu0 %v1895
    %2025 = vmatpush.bf16.msra.mxu0 %v1893
    %2026 = vmatpush.bf16.msra.mxu0 %v1891
    %2027 = vmatmul.bf16.gmra.mxu0 %v1625
    %v2028 = vpop.f32.mrf.mxu0
    %v2029 = vadd.f32 %v1695, %v2028
    %v2030 = vpop.f32.mrf.mxu0
    %2031 = vdwg.mxu0
    %2032 = vmatpush.bf16.msra.mxu0 %v1921
    %2033 = vmatpush.bf16.msra.mxu0 %v1919
    %2034 = vmatpush.bf16.msra.mxu0 %v1917
    %2035 = vmatpush.bf16.msra.mxu0 %v1915
    %2036 = vmatpush.bf16.msra.mxu0 %v1913
    %2037 = vmatpush.bf16.msra.mxu0 %v1911
    %2038 = vmatpush.bf16.msra.mxu0 %v1909
    %2039 = vmatpush.bf16.msra.mxu0 %v1907
    %2040 = vmatmul.bf16.gmra.mxu0 %v1626
    %v2041 = vpop.f32.mrf.mxu0
    %v2042 = vadd.f32 %v2029, %v2041
    %v2043 = vpop.f32.mrf.mxu0
    %2044 = vdwg.mxu0
    %2045 = vmatpush.bf16.msra.mxu0 %v1937
    %2046 = vmatpush.bf16.msra.mxu0 %v1935
    %2047 = vmatpush.bf16.msra.mxu0 %v1933
    %2048 = vmatpush.bf16.msra.mxu0 %v1931
    %2049 = vmatpush.bf16.msra.mxu0 %v1929
    %2050 = vmatpush.bf16.msra.mxu0 %v1927
    %2051 = vmatpush.bf16.msra.mxu0 %v1925
    %2052 = vmatpush.bf16.msra.mxu0 %v1923
    %2053 = vmatmul.bf16.gmra.mxu0 %v1627
    %v2054 = vpop.f32.mrf.mxu0
    %v2055 = vadd.f32 %v2042, %v2054
    %v2056 = vpop.f32.mrf.mxu0
    %2057 = vdwg.mxu0
    %2058 = vmatpush.bf16.msra.mxu0 %v1953
    %2059 = vmatpush.bf16.msra.mxu0 %v1951
    %2060 = vmatpush.bf16.msra.mxu0 %v1949
    %2061 = vmatpush.bf16.msra.mxu0 %v1947
    %2062 = vmatpush.bf16.msra.mxu0 %v1945
    %2063 = vmatpush.bf16.msra.mxu0 %v1943
    %2064 = vmatpush.bf16.msra.mxu0 %v1941
    %2065 = vmatpush.bf16.msra.mxu0 %v1939
    %2066 = vmatmul.bf16.gmra.mxu0 %v1628
    %v2067 = vpop.f32.mrf.mxu0
    %v2068 = vadd.f32 %v2055, %v2067
    %v2069 = vpop.f32.mrf.mxu0
    %2070 = vdwg.mxu0
    %2071 = vmatpush.bf16.msra.mxu0 %v1906
    %2072 = vmatpush.bf16.msra.mxu0 %v1904
    %2073 = vmatpush.bf16.msra.mxu0 %v1902
    %2074 = vmatpush.bf16.msra.mxu0 %v1900
    %2075 = vmatpush.bf16.msra.mxu0 %v1898
    %2076 = vmatpush.bf16.msra.mxu0 %v1896
    %2077 = vmatpush.bf16.msra.mxu0 %v1894
    %2078 = vmatpush.bf16.msra.mxu0 %v1892
    %2079 = vmatmul.bf16.gmra.mxu0 %v1625
    %v2080 = vpop.f32.mrf.mxu0
    %v2081 = vadd.f32 %v1696, %v2080
    %v2082 = vpop.f32.mrf.mxu0
    %2083 = vdwg.mxu0
    %2084 = vmatpush.bf16.msra.mxu0 %v1922
    %2085 = vmatpush.bf16.msra.mxu0 %v1920
    %2086 = vmatpush.bf16.msra.mxu0 %v1918
    %2087 = vmatpush.bf16.msra.mxu0 %v1916
    %2088 = vmatpush.bf16.msra.mxu0 %v1914
    %2089 = vmatpush.bf16.msra.mxu0 %v1912
    %2090 = vmatpush.bf16.msra.mxu0 %v1910
    %2091 = vmatpush.bf16.msra.mxu0 %v1908
    %2092 = vmatmul.bf16.gmra.mxu0 %v1626
    %v2093 = vpop.f32.mrf.mxu0
    %v2094 = vadd.f32 %v2081, %v2093
    %v2095 = vpop.f32.mrf.mxu0
    %2096 = vdwg.mxu0
    %2097 = vmatpush.bf16.msra.mxu0 %v1938
    %2098 = vmatpush.bf16.msra.mxu0 %v1936
    %2099 = vmatpush.bf16.msra.mxu0 %v1934
    %2100 = vmatpush.bf16.msra.mxu0 %v1932
    %2101 = vmatpush.bf16.msra.mxu0 %v1930
    %2102 = vmatpush.bf16.msra.mxu0 %v1928
    %2103 = vmatpush.bf16.msra.mxu0 %v1926
    %2104 = vmatpush.bf16.msra.mxu0 %v1924
    %2105 = vmatmul.bf16.gmra.mxu0 %v1627
    %v2106 = vpop.f32.mrf.mxu0
    %v2107 = vadd.f32 %v2094, %v2106
    %v2108 = vpop.f32.mrf.mxu0
    %2109 = vdwg.mxu0
    %2110 = vmatpush.bf16.msra.mxu0 %v1954
    %2111 = vmatpush.bf16.msra.mxu0 %v1952
    %2112 = vmatpush.bf16.msra.mxu0 %v1950
    %2113 = vmatpush.bf16.msra.mxu0 %v1948
    %2114 = vmatpush.bf16.msra.mxu0 %v1946
    %2115 = vmatpush.bf16.msra.mxu0 %v1944
    %2116 = vmatpush.bf16.msra.mxu0 %v1942
    %2117 = vmatpush.bf16.msra.mxu0 %v1940
    %2118 = vmatmul.bf16.gmra.mxu0 %v1628
    %v2119 = vpop.f32.mrf.mxu0
    %v2120 = vadd.f32 %v2107, %v2119
    %v2121 = vpop.f32.mrf.mxu0
    %2122 = vdwg.mxu0
    %v2123 = vmax.f32 %v2068, 0.0
    %v2124 = vmax.f32 %v2120, 0.0
    %v2125 = vpack.c.bf16 %v2123, %v2123
    %v2126 = vpack.c.bf16 %v2124, %v2124
    %v2127 = vld [vmem:[%s6] sm:$0xf]
    %v2128 = vld [vmem:[%s6 + $0x4] sm:$0xf]
    %v2129 = vld [vmem:[%s6 + $0x8] sm:$0xf]
    %v2130 = vld [vmem:[%s6 + $0xc] sm:$0xf]
    %v2131 = vld [vmem:[%s6 + $0x10] sm:$0xf]
    %v2132 = vld [vmem:[%s6 + $0x14] sm:$0xf]
    %v2133 = vld [vmem:[%s6 + $0x18] sm:$0xf]
    %v2134 = vld [vmem:[%s6 + $0x1c] sm:$0xf]
    %v2135 = vld [vmem:[%s6 + $0x20] sm:$0xf]
    %v2136 = vld [vmem:[%s6 + $0x24] sm:$0xf]
    %v2137 = vld [vmem:[%s6 + $0x28] sm:$0xf]
    %v2138 = vld [vmem:[%s6 + $0x2c] sm:$0xf]
    %v2139 = vld [vmem:[%s6 + $0x30] sm:$0xf]
    %v2140 = vld [vmem:[%s6 + $0x34] sm:$0xf]
    %v2141 = vld [vmem:[%s6 + $0x38] sm:$0xf]
    %v2142 = vld [vmem:[%s6 + $0x3c] sm:$0xf]
    %v2143 = vld [vmem:[%s6 + $0x40] sm:$0xf]
    %v2144 = vld [vmem:[%s6 + $0x44] sm:$0xf]
    %v2145 = vld [vmem:[%s6 + $0x48] sm:$0xf]
    %v2146 = vld [vmem:[%s6 + $0x4c] sm:$0xf]
    %v2147 = vld [vmem:[%s6 + $0x50] sm:$0xf]
    %v2148 = vld [vmem:[%s6 + $0x54] sm:$0xf]
    %v2149 = vld [vmem:[%s6 + $0x58] sm:$0xf]
    %v2150 = vld [vmem:[%s6 + $0x5c] sm:$0xf]
    %v2151 = vld [vmem:[%s6 + $0x60] sm:$0xf]
    %v2152 = vld [vmem:[%s6 + $0x64] sm:$0xf]
    %v2153 = vld [vmem:[%s6 + $0x68] sm:$0xf]
    %v2154 = vld [vmem:[%s6 + $0x6c] sm:$0xf]
    %v2155 = vld [vmem:[%s6 + $0x70] sm:$0xf]
    %v2156 = vld [vmem:[%s6 + $0x74] sm:$0xf]
    %v2157 = vld [vmem:[%s6 + $0x78] sm:$0xf]
    %v2158 = vld [vmem:[%s6 + $0x7c] sm:$0xf]
    %v2159 = vld [vmem:[%s7] sm:$0x1]
    %v2161 = vperm.slane %v2159, 0
    %v2195 = vunpack.c.l.b16 %v2127
    %v2196 = vunpack.c.l.b16 %v2128
    %v2197 = vunpack.c.l.b16 %v2129
    %v2198 = vunpack.c.l.b16 %v2130
    %v2199 = vunpack.c.l.b16 %v2131
    %v2200 = vunpack.c.l.b16 %v2132
    %v2201 = vunpack.c.l.b16 %v2133
    %v2202 = vunpack.c.l.b16 %v2134
    %v2203 = vunpack.c.l.b16 %v2135
    %v2204 = vunpack.c.l.b16 %v2136
    %v2205 = vunpack.c.l.b16 %v2137
    %v2206 = vunpack.c.l.b16 %v2138
    %v2207 = vunpack.c.l.b16 %v2139
    %v2208 = vunpack.c.l.b16 %v2140
    %v2209 = vunpack.c.l.b16 %v2141
    %v2210 = vunpack.c.l.b16 %v2142
    %v2211 = vunpack.c.l.b16 %v2143
    %v2212 = vunpack.c.l.b16 %v2144
    %v2213 = vunpack.c.l.b16 %v2145
    %v2214 = vunpack.c.l.b16 %v2146
    %v2215 = vunpack.c.l.b16 %v2147
    %v2216 = vunpack.c.l.b16 %v2148
    %v2217 = vunpack.c.l.b16 %v2149
    %v2218 = vunpack.c.l.b16 %v2150
    %v2219 = vunpack.c.l.b16 %v2151
    %v2220 = vunpack.c.l.b16 %v2152
    %v2221 = vunpack.c.l.b16 %v2153
    %v2222 = vunpack.c.l.b16 %v2154
    %v2223 = vunpack.c.l.b16 %v2155
    %v2224 = vunpack.c.l.b16 %v2156
    %v2225 = vunpack.c.l.b16 %v2157
    %v2226 = vunpack.c.l.b16 %v2158
    %v2227 = vpack.c.b16 %v2196, %v2195
    %v2228 = vpack.c.b16 %v2198, %v2197
    %v2229 = vpack.c.b16 %v2200, %v2199
    %v2230 = vpack.c.b16 %v2202, %v2201
    %v2231 = vpack.c.b16 %v2204, %v2203
    %v2232 = vpack.c.b16 %v2206, %v2205
    %v2233 = vpack.c.b16 %v2208, %v2207
    %v2234 = vpack.c.b16 %v2210, %v2209
    %v2235 = vpack.c.b16 %v2212, %v2211
    %v2236 = vpack.c.b16 %v2214, %v2213
    %v2237 = vpack.c.b16 %v2216, %v2215
    %v2238 = vpack.c.b16 %v2218, %v2217
    %v2239 = vpack.c.b16 %v2220, %v2219
    %v2240 = vpack.c.b16 %v2222, %v2221
    %v2241 = vpack.c.b16 %v2224, %v2223
    %v2242 = vpack.c.b16 %v2226, %v2225
    %2259 = vmatpush.bf16.msra.mxu0 %v2234
    %2260 = vmatpush.bf16.msra.mxu0 %v2233
    %2261 = vmatpush.bf16.msra.mxu0 %v2232
    %2262 = vmatpush.bf16.msra.mxu0 %v2231
    %2263 = vmatpush.bf16.msra.mxu0 %v2230
    %2264 = vmatpush.bf16.msra.mxu0 %v2229
    %2265 = vmatpush.bf16.msra.mxu0 %v2228
    %2266 = vmatpush.bf16.msra.mxu0 %v2227
    %2267 = vmatmul.bf16.gmra.mxu0 %v2125
    %v2268 = vpop.f32.mrf.mxu0
    %v2269 = vadd.f32 %v2161, %v2268
    %v2270 = vpop.f32.mrf.mxu0
    %2271 = vdwg.mxu0
    %2272 = vmatpush.bf16.msra.mxu0 %v2242
    %2273 = vmatpush.bf16.msra.mxu0 %v2241
    %2274 = vmatpush.bf16.msra.mxu0 %v2240
    %2275 = vmatpush.bf16.msra.mxu0 %v2239
    %2276 = vmatpush.bf16.msra.mxu0 %v2238
    %2277 = vmatpush.bf16.msra.mxu0 %v2237
    %2278 = vmatpush.bf16.msra.mxu0 %v2236
    %2279 = vmatpush.bf16.msra.mxu0 %v2235
    %2280 = vmatmul.bf16.gmra.mxu0 %v2126
    %v2281 = vpop.f32.mrf.mxu0
    %v2282 = vadd.f32 %v2269, %v2281
    %v2283 = vpop.f32.mrf.mxu0
    %2284 = vdwg.mxu0
    %v2285 = vld [vmem:[%s8] sm:$0xf]
    %v2286 = vld [vmem:[%s8 + $0x4] sm:$0xf]
    %v2287 = vld [vmem:[%s8 + $0x8] sm:$0xf]
    %v2288 = vld [vmem:[%s8 + $0xc] sm:$0xf]
    %v2289 = vld [vmem:[%s8 + $0x10] sm:$0xf]
    %v2290 = vld [vmem:[%s8 + $0x14] sm:$0xf]
    %v2291 = vld [vmem:[%s8 + $0x18] sm:$0xf]
    %v2292 = vld [vmem:[%s8 + $0x1c] sm:$0xf]
    %v2293 = vld [vmem:[%s8 + $0x20] sm:$0xf]
    %v2294 = vld [vmem:[%s8 + $0x24] sm:$0xf]
    %v2295 = vld [vmem:[%s8 + $0x28] sm:$0xf]
    %v2296 = vld [vmem:[%s8 + $0x2c] sm:$0xf]
    %v2297 = vld [vmem:[%s8 + $0x30] sm:$0xf]
    %v2298 = vld [vmem:[%s8 + $0x34] sm:$0xf]
    %v2299 = vld [vmem:[%s8 + $0x38] sm:$0xf]
    %v2300 = vld [vmem:[%s8 + $0x3c] sm:$0xf]
    %v2301 = vld [vmem:[%s8 + $0x40] sm:$0xf]
    %v2302 = vld [vmem:[%s8 + $0x44] sm:$0xf]
    %v2303 = vld [vmem:[%s8 + $0x48] sm:$0xf]
    %v2304 = vld [vmem:[%s8 + $0x4c] sm:$0xf]
    %v2305 = vld [vmem:[%s8 + $0x50] sm:$0xf]
    %v2306 = vld [vmem:[%s8 + $0x54] sm:$0xf]
    %v2307 = vld [vmem:[%s8 + $0x58] sm:$0xf]
    %v2308 = vld [vmem:[%s8 + $0x5c] sm:$0xf]
    %v2309 = vld [vmem:[%s8 + $0x60] sm:$0xf]
    %v2310 = vld [vmem:[%s8 + $0x64] sm:$0xf]
    %v2311 = vld [vmem:[%s8 + $0x68] sm:$0xf]
    %v2312 = vld [vmem:[%s8 + $0x6c] sm:$0xf]
    %v2313 = vld [vmem:[%s8 + $0x70] sm:$0xf]
    %v2314 = vld [vmem:[%s8 + $0x74] sm:$0xf]
    %v2315 = vld [vmem:[%s8 + $0x78] sm:$0xf]
    %v2316 = vld [vmem:[%s8 + $0x7c] sm:$0xf]
    %v2317 = vld [vmem:[%s9] sm:$0x1]
    %v2319 = vperm.slane %v2317, 0
    %v2353 = vunpack.c.l.b16 %v2285
    %v2354 = vunpack.c.l.b16 %v2286
    %v2355 = vunpack.c.l.b16 %v2287
    %v2356 = vunpack.c.l.b16 %v2288
    %v2357 = vunpack.c.l.b16 %v2289
    %v2358 = vunpack.c.l.b16 %v2290
    %v2359 = vunpack.c.l.b16 %v2291
    %v2360 = vunpack.c.l.b16 %v2292
    %v2361 = vunpack.c.l.b16 %v2293
    %v2362 = vunpack.c.l.b16 %v2294
    %v2363 = vunpack.c.l.b16 %v2295
    %v2364 = vunpack.c.l.b16 %v2296
    %v2365 = vunpack.c.l.b16 %v2297
    %v2366 = vunpack.c.l.b16 %v2298
    %v2367 = vunpack.c.l.b16 %v2299
    %v2368 = vunpack.c.l.b16 %v2300
    %v2369 = vunpack.c.l.b16 %v2301
    %v2370 = vunpack.c.l.b16 %v2302
    %v2371 = vunpack.c.l.b16 %v2303
    %v2372 = vunpack.c.l.b16 %v2304
    %v2373 = vunpack.c.l.b16 %v2305
    %v2374 = vunpack.c.l.b16 %v2306
    %v2375 = vunpack.c.l.b16 %v2307
    %v2376 = vunpack.c.l.b16 %v2308
    %v2377 = vunpack.c.l.b16 %v2309
    %v2378 = vunpack.c.l.b16 %v2310
    %v2379 = vunpack.c.l.b16 %v2311
    %v2380 = vunpack.c.l.b16 %v2312
    %v2381 = vunpack.c.l.b16 %v2313
    %v2382 = vunpack.c.l.b16 %v2314
    %v2383 = vunpack.c.l.b16 %v2315
    %v2384 = vunpack.c.l.b16 %v2316
    %v2385 = vpack.c.b16 %v2354, %v2353
    %v2386 = vpack.c.b16 %v2356, %v2355
    %v2387 = vpack.c.b16 %v2358, %v2357
    %v2388 = vpack.c.b16 %v2360, %v2359
    %v2389 = vpack.c.b16 %v2362, %v2361
    %v2390 = vpack.c.b16 %v2364, %v2363
    %v2391 = vpack.c.b16 %v2366, %v2365
    %v2392 = vpack.c.b16 %v2368, %v2367
    %v2393 = vpack.c.b16 %v2370, %v2369
    %v2394 = vpack.c.b16 %v2372, %v2371
    %v2395 = vpack.c.b16 %v2374, %v2373
    %v2396 = vpack.c.b16 %v2376, %v2375
    %v2397 = vpack.c.b16 %v2378, %v2377
    %v2398 = vpack.c.b16 %v2380, %v2379
    %v2399 = vpack.c.b16 %v2382, %v2381
    %v2400 = vpack.c.b16 %v2384, %v2383
    %2417 = vmatpush.bf16.msra.mxu0 %v2392
    %2418 = vmatpush.bf16.msra.mxu0 %v2391
    %2419 = vmatpush.bf16.msra.mxu0 %v2390
    %2420 = vmatpush.bf16.msra.mxu0 %v2389
    %2421 = vmatpush.bf16.msra.mxu0 %v2388
    %2422 = vmatpush.bf16.msra.mxu0 %v2387
    %2423 = vmatpush.bf16.msra.mxu0 %v2386
    %2424 = vmatpush.bf16.msra.mxu0 %v2385
    %2425 = vmatmul.bf16.gmra.mxu0 %v2125
    %v2426 = vpop.f32.mrf.mxu0
    %v2427 = vadd.f32 %v2319, %v2426
    %v2428 = vpop.f32.mrf.mxu0
    %2429 = vdwg.mxu0
    %2430 = vmatpush.bf16.msra.mxu0 %v2400
    %2431 = vmatpush.bf16.msra.mxu0 %v2399
    %2432 = vmatpush.bf16.msra.mxu0 %v2398
    %2433 = vmatpush.bf16.msra.mxu0 %v2397
    %2434 = vmatpush.bf16.msra.mxu0 %v2396
    %2435 = vmatpush.bf16.msra.mxu0 %v2395
    %2436 = vmatpush.bf16.msra.mxu0 %v2394
    %2437 = vmatpush.bf16.msra.mxu0 %v2393
    %2438 = vmatmul.bf16.gmra.mxu0 %v2126
    %v2439 = vpop.f32.mrf.mxu0
    %v2440 = vadd.f32 %v2427, %v2439
    %v2441 = vpop.f32.mrf.mxu0
    %2442 = vdwg.mxu0
    %v2443 = vld [vmem:[%s1] sm:$0x3]
    %v2444 = vmul.f32 %v2440, 0.5
    %v2445 = vmul.f32 %v2444, 1.442695
    %v2446 = vpow.pop %v2445
    %v2447 = vmul.f32 %v2443, %v2446
    %v2448 = vadd.f32 %v2282, %v2447
    %v2449 = vpack.c.bf16 %v2448, %v2448
    %v2450 = vld [vmem:[%s10] sm:$0xff]
    %v2451 = vld [vmem:[%s11] sm:$0x3]
    %v2453 = vperm.slane %v2451, 0
    %v2454 = vperm.slane %v2451, 1
    %v2458 = vunpack.c.l.b16 %v2450
    %v2459 = vunpack.c.h.b16 %v2450
    %v2460 = vpack.c.b16 %v2458, %v2458
    %v2461 = vpack.c.b16 %v2459, %v2459
    %vm2462 = vcmask 64512
    %v2464 = vsel %vm2462, %v2449, 0
    %vm2466 = vcmask 1043456
    %v2468 = vsel %vm2466, %v2460, 0
    %v2471 = vsel %vm2466, %v2461, 0
    %2473 = vmatpush.bf16.msra.mxu0 0
    %2474 = vmatpush.bf16.msra.mxu0 0
    %2475 = vmatpush.bf16.msra.mxu0 0
    %2476 = vmatpush.bf16.msra.mxu0 0
    %2477 = vmatpush.bf16.msra.mxu0 0
    %2478 = vmatpush.bf16.msra.mxu0 0
    %2479 = vmatpush.bf16.msra.mxu0 0
    %2480 = vmatpush.bf16.msra.mxu0 %v2468
    %2481 = vmatmul.bf16.gmra.mxu0 %v2464
    %v2482 = vpop.f32.mrf.mxu0
    %v2483 = vadd.f32 %v2453, %v2482
    %v2484 = vpop.f32.mrf.mxu0
    %2485 = vdwg.mxu0
    %2486 = vmatpush.bf16.msra.mxu0 0
    %2487 = vmatpush.bf16.msra.mxu0 0
    %2488 = vmatpush.bf16.msra.mxu0 0
    %2489 = vmatpush.bf16.msra.mxu0 0
    %2490 = vmatpush.bf16.msra.mxu0 0
    %2491 = vmatpush.bf16.msra.mxu0 0
    %2492 = vmatpush.bf16.msra.mxu0 0
    %2493 = vmatpush.bf16.msra.mxu0 %v2471
    %2494 = vmatmul.bf16.gmra.mxu0 %v2464
    %v2495 = vpop.f32.mrf.mxu0
    %v2496 = vadd.f32 %v2454, %v2495
    %v2497 = vpop.f32.mrf.mxu0
    %2498 = vdwg.mxu0
    %v2499 = vpack.c.bf16 %v2483, %v2483
    %v2500 = vpack.c.bf16 %v2496, %v2496
    %v2501 = vld [vmem:[#allocation7] sm:$0xff]
    %v2502 = vld [vmem:[#allocation7 + $0x8] sm:$0xff]
    %v2503 = vld [vmem:[#allocation7 + $0x10] sm:$0xff]
    %v2504 = vld [vmem:[#allocation7 + $0x18] sm:$0xff]
    %v2505 = vld [vmem:[#allocation7 + $0x20] sm:$0xff]
    %v2506 = vld [vmem:[#allocation7 + $0x28] sm:$0xff]
    %v2507 = vld [vmem:[#allocation7 + $0x30] sm:$0xff]
    %v2508 = vld [vmem:[#allocation7 + $0x38] sm:$0xff]
    %v2509 = vld [vmem:[#allocation7 + $0x40] sm:$0xff]
    %v2510 = vld [vmem:[#allocation7 + $0x48] sm:$0xff]
    %v2511 = vld [vmem:[#allocation7 + $0x50] sm:$0xff]
    %v2512 = vld [vmem:[#allocation7 + $0x58] sm:$0xff]
    %v2513 = vld [vmem:[#allocation7 + $0x60] sm:$0xff]
    %v2514 = vld [vmem:[#allocation7 + $0x68] sm:$0xff]
    %v2515 = vld [vmem:[#allocation7 + $0x70] sm:$0xff]
    %v2516 = vld [vmem:[#allocation7 + $0x78] sm:$0xff]
    %v2517 = vld [vmem:[#allocation7 + $0x80] sm:$0xff]
    %v2518 = vld [vmem:[#allocation7 + $0x88] sm:$0xff]
    %v2519 = vld [vmem:[#allocation7 + $0x90] sm:$0xff]
    %v2520 = vld [vmem:[#allocation7 + $0x98] sm:$0xff]
    %v2521 = vld [vmem:[#allocation7 + $0xa0] sm:$0xff]
    %v2522 = vld [vmem:[#allocation7 + $0xa8] sm:$0xff]
    %v2523 = vld [vmem:[#allocation7 + $0xb0] sm:$0xff]
    %v2524 = vld [vmem:[#allocation7 + $0xb8] sm:$0xff]
    %v2525 = vld [vmem:[#allocation7 + $0xc0] sm:$0xff]
    %v2526 = vld [vmem:[#allocation7 + $0xc8] sm:$0xff]
    %v2527 = vld [vmem:[#allocation7 + $0xd0] sm:$0xff]
    %v2528 = vld [vmem:[#allocation7 + $0xd8] sm:$0xff]
    %v2529 = vld [vmem:[#allocation7 + $0xe0] sm:$0xff]
    %v2530 = vld [vmem:[#allocation7 + $0xe8] sm:$0xff]
    %v2531 = vld [vmem:[#allocation7 + $0xf0] sm:$0xff]
    %v2532 = vld [vmem:[#allocation7 + $0xf8] sm:$0xff]
    %v2533 = vld [vmem:[#allocation7 + $0x100] sm:$0xff]
    %v2534 = vld [vmem:[#allocation7 + $0x108] sm:$0xff]
    %v2535 = vld [vmem:[#allocation7 + $0x110] sm:$0xff]
    %v2536 = vld [vmem:[#allocation7 + $0x118] sm:$0xff]
    %v2537 = vld [vmem:[#allocation7 + $0x120] sm:$0xff]
    %v2538 = vld [vmem:[#allocation7 + $0x128] sm:$0xff]
    %v2539 = vld [vmem:[#allocation7 + $0x130] sm:$0xff]
    %v2540 = vld [vmem:[#allocation7 + $0x138] sm:$0xff]
    %v2541 = vld [vmem:[#allocation7 + $0x140] sm:$0xff]
    %v2542 = vld [vmem:[#allocation7 + $0x148] sm:$0xff]
    %v2543 = vld [vmem:[#allocation7 + $0x150] sm:$0xff]
    %v2544 = vld [vmem:[#allocation7 + $0x158] sm:$0xff]
    %v2545 = vld [vmem:[#allocation7 + $0x160] sm:$0xff]
    %v2546 = vld [vmem:[#allocation7 + $0x168] sm:$0xff]
    %v2547 = vld [vmem:[#allocation7 + $0x170] sm:$0xff]
    %v2548 = vld [vmem:[#allocation7 + $0x178] sm:$0xff]
    %v2549 = vld [vmem:[#allocation7 + $0x180] sm:$0xff]
    %v2550 = vld [vmem:[#allocation7 + $0x188] sm:$0xff]
    %v2551 = vld [vmem:[#allocation7 + $0x190] sm:$0xff]
    %v2552 = vld [vmem:[#allocation7 + $0x198] sm:$0xff]
    %v2553 = vld [vmem:[#allocation7 + $0x1a0] sm:$0xff]
    %v2554 = vld [vmem:[#allocation7 + $0x1a8] sm:$0xff]
    %v2555 = vld [vmem:[#allocation7 + $0x1b0] sm:$0xff]
    %v2556 = vld [vmem:[#allocation7 + $0x1b8] sm:$0xff]
    %v2557 = vld [vmem:[#allocation7 + $0x1c0] sm:$0xff]
    %v2558 = vld [vmem:[#allocation7 + $0x1c8] sm:$0xff]
    %v2559 = vld [vmem:[#allocation7 + $0x1d0] sm:$0xff]
    %v2560 = vld [vmem:[#allocation7 + $0x1d8] sm:$0xff]
    %v2561 = vld [vmem:[#allocation7 + $0x1e0] sm:$0xff]
    %v2562 = vld [vmem:[#allocation7 + $0x1e8] sm:$0xff]
    %v2563 = vld [vmem:[#allocation7 + $0x1f0] sm:$0xff]
    %v2564 = vld [vmem:[#allocation7 + $0x1f8] sm:$0xff]
    %v2565 = vld [vmem:[%s13] sm:$0xf]
    %v2567 = vperm.slane %v2565, 0
    %v2568 = vperm.slane %v2565, 1
    %v2569 = vperm.slane %v2565, 2
    %v2570 = vperm.slane %v2565, 3
    %v2639 = vunpack.c.l.b16 %v2501
    %v2640 = vunpack.c.h.b16 %v2501
    %v2641 = vunpack.c.l.b16 %v2502
    %v2642 = vunpack.c.h.b16 %v2502
    %v2643 = vunpack.c.l.b16 %v2503
    %v2644 = vunpack.c.h.b16 %v2503
    %v2645 = vunpack.c.l.b16 %v2504
    %v2646 = vunpack.c.h.b16 %v2504
    %v2647 = vunpack.c.l.b16 %v2505
    %v2648 = vunpack.c.h.b16 %v2505
    %v2649 = vunpack.c.l.b16 %v2506
    %v2650 = vunpack.c.h.b16 %v2506
    %v2651 = vunpack.c.l.b16 %v2507
    %v2652 = vunpack.c.h.b16 %v2507
    %v2653 = vunpack.c.l.b16 %v2508
    %v2654 = vunpack.c.h.b16 %v2508
    %v2655 = vunpack.c.l.b16 %v2509
    %v2656 = vunpack.c.h.b16 %v2509
    %v2657 = vunpack.c.l.b16 %v2510
    %v2658 = vunpack.c.h.b16 %v2510
    %v2659 = vunpack.c.l.b16 %v2511
    %v2660 = vunpack.c.h.b16 %v2511
    %v2661 = vunpack.c.l.b16 %v2512
    %v2662 = vunpack.c.h.b16 %v2512
    %v2663 = vunpack.c.l.b16 %v2513
    %v2664 = vunpack.c.h.b16 %v2513
    %v2665 = vunpack.c.l.b16 %v2514
    %v2666 = vunpack.c.h.b16 %v2514
    %v2667 = vunpack.c.l.b16 %v2515
    %v2668 = vunpack.c.h.b16 %v2515
    %v2669 = vunpack.c.l.b16 %v2516
    %v2670 = vunpack.c.h.b16 %v2516
    %v2671 = vunpack.c.l.b16 %v2517
    %v2672 = vunpack.c.h.b16 %v2517
    %v2673 = vunpack.c.l.b16 %v2518
    %v2674 = vunpack.c.h.b16 %v2518
    %v2675 = vunpack.c.l.b16 %v2519
    %v2676 = vunpack.c.h.b16 %v2519
    %v2677 = vunpack.c.l.b16 %v2520
    %v2678 = vunpack.c.h.b16 %v2520
    %v2679 = vunpack.c.l.b16 %v2521
    %v2680 = vunpack.c.h.b16 %v2521
    %v2681 = vunpack.c.l.b16 %v2522
    %v2682 = vunpack.c.h.b16 %v2522
    %v2683 = vunpack.c.l.b16 %v2523
    %v2684 = vunpack.c.h.b16 %v2523
    %v2685 = vunpack.c.l.b16 %v2524
    %v2686 = vunpack.c.h.b16 %v2524
    %v2687 = vunpack.c.l.b16 %v2525
    %v2688 = vunpack.c.h.b16 %v2525
    %v2689 = vunpack.c.l.b16 %v2526
    %v2690 = vunpack.c.h.b16 %v2526
    %v2691 = vunpack.c.l.b16 %v2527
    %v2692 = vunpack.c.h.b16 %v2527
    %v2693 = vunpack.c.l.b16 %v2528
    %v2694 = vunpack.c.h.b16 %v2528
    %v2695 = vunpack.c.l.b16 %v2529
    %v2696 = vunpack.c.h.b16 %v2529
    %v2697 = vunpack.c.l.b16 %v2530
    %v2698 = vunpack.c.h.b16 %v2530
    %v2699 = vunpack.c.l.b16 %v2531
    %v2700 = vunpack.c.h.b16 %v2531
    %v2701 = vunpack.c.l.b16 %v2532
    %v2702 = vunpack.c.h.b16 %v2532
    %v2703 = vunpack.c.l.b16 %v2533
    %v2704 = vunpack.c.h.b16 %v2533
    %v2705 = vunpack.c.l.b16 %v2534
    %v2706 = vunpack.c.h.b16 %v2534
    %v2707 = vunpack.c.l.b16 %v2535
    %v2708 = vunpack.c.h.b16 %v2535
    %v2709 = vunpack.c.l.b16 %v2536
    %v2710 = vunpack.c.h.b16 %v2536
    %v2711 = vunpack.c.l.b16 %v2537
    %v2712 = vunpack.c.h.b16 %v2537
    %v2713 = vunpack.c.l.b16 %v2538
    %v2714 = vunpack.c.h.b16 %v2538
    %v2715 = vunpack.c.l.b16 %v2539
    %v2716 = vunpack.c.h.b16 %v2539
    %v2717 = vunpack.c.l.b16 %v2540
    %v2718 = vunpack.c.h.b16 %v2540
    %v2719 = vunpack.c.l.b16 %v2541
    %v2720 = vunpack.c.h.b16 %v2541
    %v2721 = vunpack.c.l.b16 %v2542
    %v2722 = vunpack.c.h.b16 %v2542
    %v2723 = vunpack.c.l.b16 %v2543
    %v2724 = vunpack.c.h.b16 %v2543
    %v2725 = vunpack.c.l.b16 %v2544
    %v2726 = vunpack.c.h.b16 %v2544
    %v2727 = vunpack.c.l.b16 %v2545
    %v2728 = vunpack.c.h.b16 %v2545
    %v2729 = vunpack.c.l.b16 %v2546
    %v2730 = vunpack.c.h.b16 %v2546
    %v2731 = vunpack.c.l.b16 %v2547
    %v2732 = vunpack.c.h.b16 %v2547
    %v2733 = vunpack.c.l.b16 %v2548
    %v2734 = vunpack.c.h.b16 %v2548
    %v2735 = vunpack.c.l.b16 %v2549
    %v2736 = vunpack.c.h.b16 %v2549
    %v2737 = vunpack.c.l.b16 %v2550
    %v2738 = vunpack.c.h.b16 %v2550
    %v2739 = vunpack.c.l.b16 %v2551
    %v2740 = vunpack.c.h.b16 %v2551
    %v2741 = vunpack.c.l.b16 %v2552
    %v2742 = vunpack.c.h.b16 %v2552
    %v2743 = vunpack.c.l.b16 %v2553
    %v2744 = vunpack.c.h.b16 %v2553
    %v2745 = vunpack.c.l.b16 %v2554
    %v2746 = vunpack.c.h.b16 %v2554
    %v2747 = vunpack.c.l.b16 %v2555
    %v2748 = vunpack.c.h.b16 %v2555
    %v2749 = vunpack.c.l.b16 %v2556
    %v2750 = vunpack.c.h.b16 %v2556
    %v2751 = vunpack.c.l.b16 %v2557
    %v2752 = vunpack.c.h.b16 %v2557
    %v2753 = vunpack.c.l.b16 %v2558
    %v2754 = vunpack.c.h.b16 %v2558
    %v2755 = vunpack.c.l.b16 %v2559
    %v2756 = vunpack.c.h.b16 %v2559
    %v2757 = vunpack.c.l.b16 %v2560
    %v2758 = vunpack.c.h.b16 %v2560
    %v2759 = vunpack.c.l.b16 %v2561
    %v2760 = vunpack.c.h.b16 %v2561
    %v2761 = vunpack.c.l.b16 %v2562
    %v2762 = vunpack.c.h.b16 %v2562
    %v2763 = vunpack.c.l.b16 %v2563
    %v2764 = vunpack.c.h.b16 %v2563
    %v2765 = vunpack.c.l.b16 %v2564
    %v2766 = vunpack.c.h.b16 %v2564
    %v2767 = vpack.c.b16 %v2643, %v2639
    %v2768 = vpack.c.b16 %v2644, %v2640
    %v2769 = vpack.c.b16 %v2645, %v2641
    %v2770 = vpack.c.b16 %v2646, %v2642
    %v2771 = vpack.c.b16 %v2651, %v2647
    %v2772 = vpack.c.b16 %v2652, %v2648
    %v2773 = vpack.c.b16 %v2653, %v2649
    %v2774 = vpack.c.b16 %v2654, %v2650
    %v2775 = vpack.c.b16 %v2659, %v2655
    %v2776 = vpack.c.b16 %v2660, %v2656
    %v2777 = vpack.c.b16 %v2661, %v2657
    %v2778 = vpack.c.b16 %v2662, %v2658
    %v2779 = vpack.c.b16 %v2667, %v2663
    %v2780 = vpack.c.b16 %v2668, %v2664
    %v2781 = vpack.c.b16 %v2669, %v2665
    %v2782 = vpack.c.b16 %v2670, %v2666
    %v2783 = vpack.c.b16 %v2675, %v2671
    %v2784 = vpack.c.b16 %v2676, %v2672
    %v2785 = vpack.c.b16 %v2677, %v2673
    %v2786 = vpack.c.b16 %v2678, %v2674
    %v2787 = vpack.c.b16 %v2683, %v2679
    %v2788 = vpack.c.b16 %v2684, %v2680
    %v2789 = vpack.c.b16 %v2685, %v2681
    %v2790 = vpack.c.b16 %v2686, %v2682
    %v2791 = vpack.c.b16 %v2691, %v2687
    %v2792 = vpack.c.b16 %v2692, %v2688
    %v2793 = vpack.c.b16 %v2693, %v2689
    %v2794 = vpack.c.b16 %v2694, %v2690
    %v2795 = vpack.c.b16 %v2699, %v2695
    %v2796 = vpack.c.b16 %v2700, %v2696
    %v2797 = vpack.c.b16 %v2701, %v2697
    %v2798 = vpack.c.b16 %v2702, %v2698
    %v2799 = vpack.c.b16 %v2707, %v2703
    %v2800 = vpack.c.b16 %v2708, %v2704
    %v2801 = vpack.c.b16 %v2709, %v2705
    %v2802 = vpack.c.b16 %v2710, %v2706
    %v2803 = vpack.c.b16 %v2715, %v2711
    %v2804 = vpack.c.b16 %v2716, %v2712
    %v2805 = vpack.c.b16 %v2717, %v2713
    %v2806 = vpack.c.b16 %v2718, %v2714
    %v2807 = vpack.c.b16 %v2723, %v2719
    %v2808 = vpack.c.b16 %v2724, %v2720
    %v2809 = vpack.c.b16 %v2725, %v2721
    %v2810 = vpack.c.b16 %v2726, %v2722
    %v2811 = vpack.c.b16 %v2731, %v2727
    %v2812 = vpack.c.b16 %v2732, %v2728
    %v2813 = vpack.c.b16 %v2733, %v2729
    %v2814 = vpack.c.b16 %v2734, %v2730
    %v2815 = vpack.c.b16 %v2739, %v2735
    %v2816 = vpack.c.b16 %v2740, %v2736
    %v2817 = vpack.c.b16 %v2741, %v2737
    %v2818 = vpack.c.b16 %v2742, %v2738
    %v2819 = vpack.c.b16 %v2747, %v2743
    %v2820 = vpack.c.b16 %v2748, %v2744
    %v2821 = vpack.c.b16 %v2749, %v2745
    %v2822 = vpack.c.b16 %v2750, %v2746
    %v2823 = vpack.c.b16 %v2755, %v2751
    %v2824 = vpack.c.b16 %v2756, %v2752
    %v2825 = vpack.c.b16 %v2757, %v2753
    %v2826 = vpack.c.b16 %v2758, %v2754
    %v2827 = vpack.c.b16 %v2763, %v2759
    %v2828 = vpack.c.b16 %v2764, %v2760
    %v2829 = vpack.c.b16 %v2765, %v2761
    %v2830 = vpack.c.b16 %v2766, %v2762
    %2895 = vmatpush.bf16.msra.mxu0 %v2795
    %2896 = vmatpush.bf16.msra.mxu0 %v2791
    %2897 = vmatpush.bf16.msra.mxu0 %v2787
    %2898 = vmatpush.bf16.msra.mxu0 %v2783
    %2899 = vmatpush.bf16.msra.mxu0 %v2779
    %2900 = vmatpush.bf16.msra.mxu0 %v2775
    %2901 = vmatpush.bf16.msra.mxu0 %v2771
    %2902 = vmatpush.bf16.msra.mxu0 %v2767
    %2903 = vmatmul.bf16.gmra.mxu0 %v2499
    %v2904 = vpop.f32.mrf.mxu0
    %v2905 = vadd.f32 %v2567, %v2904
    %v2906 = vpop.f32.mrf.mxu0
    %2907 = vdwg.mxu0
    %2908 = vmatpush.bf16.msra.mxu0 %v2827
    %2909 = vmatpush.bf16.msra.mxu0 %v2823
    %2910 = vmatpush.bf16.msra.mxu0 %v2819
    %2911 = vmatpush.bf16.msra.mxu0 %v2815
    %2912 = vmatpush.bf16.msra.mxu0 %v2811
    %2913 = vmatpush.bf16.msra.mxu0 %v2807
    %2914 = vmatpush.bf16.msra.mxu0 %v2803
    %2915 = vmatpush.bf16.msra.mxu0 %v2799
    %2916 = vmatmul.bf16.gmra.mxu0 %v2500
    %v2917 = vpop.f32.mrf.mxu0
    %v2918 = vadd.f32 %v2905, %v2917
    %v2919 = vpop.f32.mrf.mxu0
    %2920 = vdwg.mxu0
    %2921 = vmatpush.bf16.msra.mxu0 %v2796
    %2922 = vmatpush.bf16.msra.mxu0 %v2792
    %2923 = vmatpush.bf16.msra.mxu0 %v2788
    %2924 = vmatpush.bf16.msra.mxu0 %v2784
    %2925 = vmatpush.bf16.msra.mxu0 %v2780
    %2926 = vmatpush.bf16.msra.mxu0 %v2776
    %2927 = vmatpush.bf16.msra.mxu0 %v2772
    %2928 = vmatpush.bf16.msra.mxu0 %v2768
    %2929 = vmatmul.bf16.gmra.mxu0 %v2499
    %v2930 = vpop.f32.mrf.mxu0
    %v2931 = vadd.f32 %v2568, %v2930
    %v2932 = vpop.f32.mrf.mxu0
    %2933 = vdwg.mxu0
    %2934 = vmatpush.bf16.msra.mxu0 %v2828
    %2935 = vmatpush.bf16.msra.mxu0 %v2824
    %2936 = vmatpush.bf16.msra.mxu0 %v2820
    %2937 = vmatpush.bf16.msra.mxu0 %v2816
    %2938 = vmatpush.bf16.msra.mxu0 %v2812
    %2939 = vmatpush.bf16.msra.mxu0 %v2808
    %2940 = vmatpush.bf16.msra.mxu0 %v2804
    %2941 = vmatpush.bf16.msra.mxu0 %v2800
    %2942 = vmatmul.bf16.gmra.mxu0 %v2500
    %v2943 = vpop.f32.mrf.mxu0
    %v2944 = vadd.f32 %v2931, %v2943
    %v2945 = vpop.f32.mrf.mxu0
    %2946 = vdwg.mxu0
    %2947 = vmatpush.bf16.msra.mxu0 %v2797
    %2948 = vmatpush.bf16.msra.mxu0 %v2793
    %2949 = vmatpush.bf16.msra.mxu0 %v2789
    %2950 = vmatpush.bf16.msra.mxu0 %v2785
    %2951 = vmatpush.bf16.msra.mxu0 %v2781
    %2952 = vmatpush.bf16.msra.mxu0 %v2777
    %2953 = vmatpush.bf16.msra.mxu0 %v2773
    %2954 = vmatpush.bf16.msra.mxu0 %v2769
    %2955 = vmatmul.bf16.gmra.mxu0 %v2499
    %v2956 = vpop.f32.mrf.mxu0
    %v2957 = vadd.f32 %v2569, %v2956
    %v2958 = vpop.f32.mrf.mxu0
    %2959 = vdwg.mxu0
    %2960 = vmatpush.bf16.msra.mxu0 %v2829
    %2961 = vmatpush.bf16.msra.mxu0 %v2825
    %2962 = vmatpush.bf16.msra.mxu0 %v2821
    %2963 = vmatpush.bf16.msra.mxu0 %v2817
    %2964 = vmatpush.bf16.msra.mxu0 %v2813
    %2965 = vmatpush.bf16.msra.mxu0 %v2809
    %2966 = vmatpush.bf16.msra.mxu0 %v2805
    %2967 = vmatpush.bf16.msra.mxu0 %v2801
    %2968 = vmatmul.bf16.gmra.mxu0 %v2500
    %v2969 = vpop.f32.mrf.mxu0
    %v2970 = vadd.f32 %v2957, %v2969
    %v2971 = vpop.f32.mrf.mxu0
    %2972 = vdwg.mxu0
    %2973 = vmatpush.bf16.msra.mxu0 %v2798
    %2974 = vmatpush.bf16.msra.mxu0 %v2794
    %2975 = vmatpush.bf16.msra.mxu0 %v2790
    %2976 = vmatpush.bf16.msra.mxu0 %v2786
    %2977 = vmatpush.bf16.msra.mxu0 %v2782
    %2978 = vmatpush.bf16.msra.mxu0 %v2778
    %2979 = vmatpush.bf16.msra.mxu0 %v2774
    %2980 = vmatpush.bf16.msra.mxu0 %v2770
    %2981 = vmatmul.bf16.gmra.mxu0 %v2499
    %v2982 = vpop.f32.mrf.mxu0
    %v2983 = vadd.f32 %v2570, %v2982
    %v2984 = vpop.f32.mrf.mxu0
    %2985 = vdwg.mxu0
    %2986 = vmatpush.bf16.msra.mxu0 %v2830
    %2987 = vmatpush.bf16.msra.mxu0 %v2826
    %2988 = vmatpush.bf16.msra.mxu0 %v2822
    %2989 = vmatpush.bf16.msra.mxu0 %v2818
    %2990 = vmatpush.bf16.msra.mxu0 %v2814
    %2991 = vmatpush.bf16.msra.mxu0 %v2810
    %2992 = vmatpush.bf16.msra.mxu0 %v2806
    %2993 = vmatpush.bf16.msra.mxu0 %v2802
    %2994 = vmatmul.bf16.gmra.mxu0 %v2500
    %v2995 = vpop.f32.mrf.mxu0
    %v2996 = vadd.f32 %v2983, %v2995
    %v2997 = vpop.f32.mrf.mxu0
    %2998 = vdwg.mxu0
    %v2999 = vmax.f32 %v2918, 0.0
    %v3000 = vmax.f32 %v2944, 0.0
    %v3001 = vmax.f32 %v2970, 0.0
    %v3002 = vmax.f32 %v2996, 0.0
    %v3003 = vpack.c.bf16 %v2999, %v2999
    %v3004 = vpack.c.bf16 %v3000, %v3000
    %v3005 = vpack.c.bf16 %v3001, %v3001
    %v3006 = vpack.c.bf16 %v3002, %v3002
    %v3007 = vld [vmem:[#allocation8] sm:$0xff]
    %v3008 = vld [vmem:[#allocation8 + $0x8] sm:$0xff]
    %v3009 = vld [vmem:[#allocation8 + $0x10] sm:$0xff]
    %v3010 = vld [vmem:[#allocation8 + $0x18] sm:$0xff]
    %v3011 = vld [vmem:[#allocation8 + $0x20] sm:$0xff]
    %v3012 = vld [vmem:[#allocation8 + $0x28] sm:$0xff]
    %v3013 = vld [vmem:[#allocation8 + $0x30] sm:$0xff]
    %v3014 = vld [vmem:[#allocation8 + $0x38] sm:$0xff]
    %v3015 = vld [vmem:[#allocation8 + $0x40] sm:$0xff]
    %v3016 = vld [vmem:[#allocation8 + $0x48] sm:$0xff]
    %v3017 = vld [vmem:[#allocation8 + $0x50] sm:$0xff]
    %v3018 = vld [vmem:[#allocation8 + $0x58] sm:$0xff]
    %v3019 = vld [vmem:[#allocation8 + $0x60] sm:$0xff]
    %v3020 = vld [vmem:[#allocation8 + $0x68] sm:$0xff]
    %v3021 = vld [vmem:[#allocation8 + $0x70] sm:$0xff]
    %v3022 = vld [vmem:[#allocation8 + $0x78] sm:$0xff]
    %v3023 = vld [vmem:[#allocation8 + $0x80] sm:$0xff]
    %v3024 = vld [vmem:[#allocation8 + $0x88] sm:$0xff]
    %v3025 = vld [vmem:[#allocation8 + $0x90] sm:$0xff]
    %v3026 = vld [vmem:[#allocation8 + $0x98] sm:$0xff]
    %v3027 = vld [vmem:[#allocation8 + $0xa0] sm:$0xff]
    %v3028 = vld [vmem:[#allocation8 + $0xa8] sm:$0xff]
    %v3029 = vld [vmem:[#allocation8 + $0xb0] sm:$0xff]
    %v3030 = vld [vmem:[#allocation8 + $0xb8] sm:$0xff]
    %v3031 = vld [vmem:[#allocation8 + $0xc0] sm:$0xff]
    %v3032 = vld [vmem:[#allocation8 + $0xc8] sm:$0xff]
    %v3033 = vld [vmem:[#allocation8 + $0xd0] sm:$0xff]
    %v3034 = vld [vmem:[#allocation8 + $0xd8] sm:$0xff]
    %v3035 = vld [vmem:[#allocation8 + $0xe0] sm:$0xff]
    %v3036 = vld [vmem:[#allocation8 + $0xe8] sm:$0xff]
    %v3037 = vld [vmem:[#allocation8 + $0xf0] sm:$0xff]
    %v3038 = vld [vmem:[#allocation8 + $0xf8] sm:$0xff]
    %v3039 = vld [vmem:[#allocation8 + $0x100] sm:$0xff]
    %v3040 = vld [vmem:[#allocation8 + $0x108] sm:$0xff]
    %v3041 = vld [vmem:[#allocation8 + $0x110] sm:$0xff]
    %v3042 = vld [vmem:[#allocation8 + $0x118] sm:$0xff]
    %v3043 = vld [vmem:[#allocation8 + $0x120] sm:$0xff]
    %v3044 = vld [vmem:[#allocation8 + $0x128] sm:$0xff]
    %v3045 = vld [vmem:[#allocation8 + $0x130] sm:$0xff]
    %v3046 = vld [vmem:[#allocation8 + $0x138] sm:$0xff]
    %v3047 = vld [vmem:[#allocation8 + $0x140] sm:$0xff]
    %v3048 = vld [vmem:[#allocation8 + $0x148] sm:$0xff]
    %v3049 = vld [vmem:[#allocation8 + $0x150] sm:$0xff]
    %v3050 = vld [vmem:[#allocation8 + $0x158] sm:$0xff]
    %v3051 = vld [vmem:[#allocation8 + $0x160] sm:$0xff]
    %v3052 = vld [vmem:[#allocation8 + $0x168] sm:$0xff]
    %v3053 = vld [vmem:[#allocation8 + $0x170] sm:$0xff]
    %v3054 = vld [vmem:[#allocation8 + $0x178] sm:$0xff]
    %v3055 = vld [vmem:[#allocation8 + $0x180] sm:$0xff]
    %v3056 = vld [vmem:[#allocation8 + $0x188] sm:$0xff]
    %v3057 = vld [vmem:[#allocation8 + $0x190] sm:$0xff]
    %v3058 = vld [vmem:[#allocation8 + $0x198] sm:$0xff]
    %v3059 = vld [vmem:[#allocation8 + $0x1a0] sm:$0xff]
    %v3060 = vld [vmem:[#allocation8 + $0x1a8] sm:$0xff]
    %v3061 = vld [vmem:[#allocation8 + $0x1b0] sm:$0xff]
    %v3062 = vld [vmem:[#allocation8 + $0x1b8] sm:$0xff]
    %v3063 = vld [vmem:[#allocation8 + $0x1c0] sm:$0xff]
    %v3064 = vld [vmem:[#allocation8 + $0x1c8] sm:$0xff]
    %v3065 = vld [vmem:[#allocation8 + $0x1d0] sm:$0xff]
    %v3066 = vld [vmem:[#allocation8 + $0x1d8] sm:$0xff]
    %v3067 = vld [vmem:[#allocation8 + $0x1e0] sm:$0xff]
    %v3068 = vld [vmem:[#allocation8 + $0x1e8] sm:$0xff]
    %v3069 = vld [vmem:[#allocation8 + $0x1f0] sm:$0xff]
    %v3070 = vld [vmem:[#allocation8 + $0x1f8] sm:$0xff]
    %v3071 = vld [vmem:[#allocation8 + $0x200] sm:$0xff]
    %v3072 = vld [vmem:[#allocation8 + $0x208] sm:$0xff]
    %v3073 = vld [vmem:[#allocation8 + $0x210] sm:$0xff]
    %v3074 = vld [vmem:[#allocation8 + $0x218] sm:$0xff]
    %v3075 = vld [vmem:[#allocation8 + $0x220] sm:$0xff]
    %v3076 = vld [vmem:[#allocation8 + $0x228] sm:$0xff]
    %v3077 = vld [vmem:[#allocation8 + $0x230] sm:$0xff]
    %v3078 = vld [vmem:[#allocation8 + $0x238] sm:$0xff]
    %v3079 = vld [vmem:[#allocation8 + $0x240] sm:$0xff]
    %v3080 = vld [vmem:[#allocation8 + $0x248] sm:$0xff]
    %v3081 = vld [vmem:[#allocation8 + $0x250] sm:$0xff]
    %v3082 = vld [vmem:[#allocation8 + $0x258] sm:$0xff]
    %v3083 = vld [vmem:[#allocation8 + $0x260] sm:$0xff]
    %v3084 = vld [vmem:[#allocation8 + $0x268] sm:$0xff]
    %v3085 = vld [vmem:[#allocation8 + $0x270] sm:$0xff]
    %v3086 = vld [vmem:[#allocation8 + $0x278] sm:$0xff]
    %v3087 = vld [vmem:[#allocation8 + $0x280] sm:$0xff]
    %v3088 = vld [vmem:[#allocation8 + $0x288] sm:$0xff]
    %v3089 = vld [vmem:[#allocation8 + $0x290] sm:$0xff]
    %v3090 = vld [vmem:[#allocation8 + $0x298] sm:$0xff]
    %v3091 = vld [vmem:[#allocation8 + $0x2a0] sm:$0xff]
    %v3092 = vld [vmem:[#allocation8 + $0x2a8] sm:$0xff]
    %v3093 = vld [vmem:[#allocation8 + $0x2b0] sm:$0xff]
    %v3094 = vld [vmem:[#allocation8 + $0x2b8] sm:$0xff]
    %v3095 = vld [vmem:[#allocation8 + $0x2c0] sm:$0xff]
    %v3096 = vld [vmem:[#allocation8 + $0x2c8] sm:$0xff]
    %v3097 = vld [vmem:[#allocation8 + $0x2d0] sm:$0xff]
    %v3098 = vld [vmem:[#allocation8 + $0x2d8] sm:$0xff]
    %v3099 = vld [vmem:[#allocation8 + $0x2e0] sm:$0xff]
    %v3100 = vld [vmem:[#allocation8 + $0x2e8] sm:$0xff]
    %v3101 = vld [vmem:[#allocation8 + $0x2f0] sm:$0xff]
    %v3102 = vld [vmem:[#allocation8 + $0x2f8] sm:$0xff]
    %v3103 = vld [vmem:[#allocation8 + $0x300] sm:$0xff]
    %v3104 = vld [vmem:[#allocation8 + $0x308] sm:$0xff]
    %v3105 = vld [vmem:[#allocation8 + $0x310] sm:$0xff]
    %v3106 = vld [vmem:[#allocation8 + $0x318] sm:$0xff]
    %v3107 = vld [vmem:[#allocation8 + $0x320] sm:$0xff]
    %v3108 = vld [vmem:[#allocation8 + $0x328] sm:$0xff]
    %v3109 = vld [vmem:[#allocation8 + $0x330] sm:$0xff]
    %v3110 = vld [vmem:[#allocation8 + $0x338] sm:$0xff]
    %v3111 = vld [vmem:[#allocation8 + $0x340] sm:$0xff]
    %v3112 = vld [vmem:[#allocation8 + $0x348] sm:$0xff]
    %v3113 = vld [vmem:[#allocation8 + $0x350] sm:$0xff]
    %v3114 = vld [vmem:[#allocation8 + $0x358] sm:$0xff]
    %v3115 = vld [vmem:[#allocation8 + $0x360] sm:$0xff]
    %v3116 = vld [vmem:[#allocation8 + $0x368] sm:$0xff]
    %v3117 = vld [vmem:[#allocation8 + $0x370] sm:$0xff]
    %v3118 = vld [vmem:[#allocation8 + $0x378] sm:$0xff]
    %v3119 = vld [vmem:[#allocation8 + $0x380] sm:$0xff]
    %v3120 = vld [vmem:[#allocation8 + $0x388] sm:$0xff]
    %v3121 = vld [vmem:[#allocation8 + $0x390] sm:$0xff]
    %v3122 = vld [vmem:[#allocation8 + $0x398] sm:$0xff]
    %v3123 = vld [vmem:[#allocation8 + $0x3a0] sm:$0xff]
    %v3124 = vld [vmem:[#allocation8 + $0x3a8] sm:$0xff]
    %v3125 = vld [vmem:[#allocation8 + $0x3b0] sm:$0xff]
    %v3126 = vld [vmem:[#allocation8 + $0x3b8] sm:$0xff]
    %v3127 = vld [vmem:[#allocation8 + $0x3c0] sm:$0xff]
    %v3128 = vld [vmem:[#allocation8 + $0x3c8] sm:$0xff]
    %v3129 = vld [vmem:[#allocation8 + $0x3d0] sm:$0xff]
    %v3130 = vld [vmem:[#allocation8 + $0x3d8] sm:$0xff]
    %v3131 = vld [vmem:[#allocation8 + $0x3e0] sm:$0xff]
    %v3132 = vld [vmem:[#allocation8 + $0x3e8] sm:$0xff]
    %v3133 = vld [vmem:[#allocation8 + $0x3f0] sm:$0xff]
    %v3134 = vld [vmem:[#allocation8 + $0x3f8] sm:$0xff]
    %v3135 = vld [vmem:[#allocation8 + $0x400] sm:$0xff]
    %v3136 = vld [vmem:[#allocation8 + $0x408] sm:$0xff]
    %v3137 = vld [vmem:[#allocation8 + $0x410] sm:$0xff]
    %v3138 = vld [vmem:[#allocation8 + $0x418] sm:$0xff]
    %v3139 = vld [vmem:[#allocation8 + $0x420] sm:$0xff]
    %v3140 = vld [vmem:[#allocation8 + $0x428] sm:$0xff]
    %v3141 = vld [vmem:[#allocation8 + $0x430] sm:$0xff]
    %v3142 = vld [vmem:[#allocation8 + $0x438] sm:$0xff]
    %v3143 = vld [vmem:[#allocation8 + $0x440] sm:$0xff]
    %v3144 = vld [vmem:[#allocation8 + $0x448] sm:$0xff]
    %v3145 = vld [vmem:[#allocation8 + $0x450] sm:$0xff]
    %v3146 = vld [vmem:[#allocation8 + $0x458] sm:$0xff]
    %v3147 = vld [vmem:[#allocation8 + $0x460] sm:$0xff]
    %v3148 = vld [vmem:[#allocation8 + $0x468] sm:$0xff]
    %v3149 = vld [vmem:[#allocation8 + $0x470] sm:$0xff]
    %v3150 = vld [vmem:[#allocation8 + $0x478] sm:$0xff]
    %v3151 = vld [vmem:[#allocation8 + $0x480] sm:$0xff]
    %v3152 = vld [vmem:[#allocation8 + $0x488] sm:$0xff]
    %v3153 = vld [vmem:[#allocation8 + $0x490] sm:$0xff]
    %v3154 = vld [vmem:[#allocation8 + $0x498] sm:$0xff]
    %v3155 = vld [vmem:[#allocation8 + $0x4a0] sm:$0xff]
    %v3156 = vld [vmem:[#allocation8 + $0x4a8] sm:$0xff]
    %v3157 = vld [vmem:[#allocation8 + $0x4b0] sm:$0xff]
    %v3158 = vld [vmem:[#allocation8 + $0x4b8] sm:$0xff]
    %v3159 = vld [vmem:[#allocation8 + $0x4c0] sm:$0xff]
    %v3160 = vld [vmem:[#allocation8 + $0x4c8] sm:$0xff]
    %v3161 = vld [vmem:[#allocation8 + $0x4d0] sm:$0xff]
    %v3162 = vld [vmem:[#allocation8 + $0x4d8] sm:$0xff]
    %v3163 = vld [vmem:[#allocation8 + $0x4e0] sm:$0xff]
    %v3164 = vld [vmem:[#allocation8 + $0x4e8] sm:$0xff]
    %v3165 = vld [vmem:[#allocation8 + $0x4f0] sm:$0xff]
    %v3166 = vld [vmem:[#allocation8 + $0x4f8] sm:$0xff]
    %v3167 = vld [vmem:[#allocation8 + $0x500] sm:$0xff]
    %v3168 = vld [vmem:[#allocation8 + $0x508] sm:$0xff]
    %v3169 = vld [vmem:[#allocation8 + $0x510] sm:$0xff]
    %v3170 = vld [vmem:[#allocation8 + $0x518] sm:$0xff]
    %v3171 = vld [vmem:[#allocation8 + $0x520] sm:$0xff]
    %v3172 = vld [vmem:[#allocation8 + $0x528] sm:$0xff]
    %v3173 = vld [vmem:[#allocation8 + $0x530] sm:$0xff]
    %v3174 = vld [vmem:[#allocation8 + $0x538] sm:$0xff]
    %v3175 = vld [vmem:[#allocation8 + $0x540] sm:$0xff]
    %v3176 = vld [vmem:[#allocation8 + $0x548] sm:$0xff]
    %v3177 = vld [vmem:[#allocation8 + $0x550] sm:$0xff]
    %v3178 = vld [vmem:[#allocation8 + $0x558] sm:$0xff]
    %v3179 = vld [vmem:[#allocation8 + $0x560] sm:$0xff]
    %v3180 = vld [vmem:[#allocation8 + $0x568] sm:$0xff]
    %v3181 = vld [vmem:[#allocation8 + $0x570] sm:$0xff]
    %v3182 = vld [vmem:[#allocation8 + $0x578] sm:$0xff]
    %v3183 = vld [vmem:[#allocation8 + $0x580] sm:$0xff]
    %v3184 = vld [vmem:[#allocation8 + $0x588] sm:$0xff]
    %v3185 = vld [vmem:[#allocation8 + $0x590] sm:$0xff]
    %v3186 = vld [vmem:[#allocation8 + $0x598] sm:$0xff]
    %v3187 = vld [vmem:[#allocation8 + $0x5a0] sm:$0xff]
    %v3188 = vld [vmem:[#allocation8 + $0x5a8] sm:$0xff]
    %v3189 = vld [vmem:[#allocation8 + $0x5b0] sm:$0xff]
    %v3190 = vld [vmem:[#allocation8 + $0x5b8] sm:$0xff]
    %v3191 = vld [vmem:[#allocation8 + $0x5c0] sm:$0xff]
    %v3192 = vld [vmem:[#allocation8 + $0x5c8] sm:$0xff]
    %v3193 = vld [vmem:[#allocation8 + $0x5d0] sm:$0xff]
    %v3194 = vld [vmem:[#allocation8 + $0x5d8] sm:$0xff]
    %v3195 = vld [vmem:[#allocation8 + $0x5e0] sm:$0xff]
    %v3196 = vld [vmem:[#allocation8 + $0x5e8] sm:$0xff]
    %v3197 = vld [vmem:[#allocation8 + $0x5f0] sm:$0xff]
    %v3198 = vld [vmem:[#allocation8 + $0x5f8] sm:$0xff]
    %v3199 = vld [vmem:[%s15] sm:$0x3f]
    %v3201 = vperm.slane %v3199, 0
    %v3202 = vperm.slane %v3199, 1
    %v3203 = vperm.slane %v3199, 2
    %v3204 = vperm.slane %v3199, 3
    %v3205 = vperm.slane %v3199, 4
    %v3206 = vperm.slane %v3199, 5
    %v3405 = vunpack.c.l.b16 %v3007
    %v3406 = vunpack.c.h.b16 %v3007
    %v3407 = vunpack.c.l.b16 %v3008
    %v3408 = vunpack.c.h.b16 %v3008
    %v3409 = vunpack.c.l.b16 %v3009
    %v3410 = vunpack.c.h.b16 %v3009
    %v3411 = vunpack.c.l.b16 %v3010
    %v3412 = vunpack.c.h.b16 %v3010
    %v3413 = vunpack.c.l.b16 %v3011
    %v3414 = vunpack.c.h.b16 %v3011
    %v3415 = vunpack.c.l.b16 %v3012
    %v3416 = vunpack.c.h.b16 %v3012
    %v3417 = vunpack.c.l.b16 %v3013
    %v3418 = vunpack.c.h.b16 %v3013
    %v3419 = vunpack.c.l.b16 %v3014
    %v3420 = vunpack.c.h.b16 %v3014
    %v3421 = vunpack.c.l.b16 %v3015
    %v3422 = vunpack.c.h.b16 %v3015
    %v3423 = vunpack.c.l.b16 %v3016
    %v3424 = vunpack.c.h.b16 %v3016
    %v3425 = vunpack.c.l.b16 %v3017
    %v3426 = vunpack.c.h.b16 %v3017
    %v3427 = vunpack.c.l.b16 %v3018
    %v3428 = vunpack.c.h.b16 %v3018
    %v3429 = vunpack.c.l.b16 %v3019
    %v3430 = vunpack.c.h.b16 %v3019
    %v3431 = vunpack.c.l.b16 %v3020
    %v3432 = vunpack.c.h.b16 %v3020
    %v3433 = vunpack.c.l.b16 %v3021
    %v3434 = vunpack.c.h.b16 %v3021
    %v3435 = vunpack.c.l.b16 %v3022
    %v3436 = vunpack.c.h.b16 %v3022
    %v3437 = vunpack.c.l.b16 %v3023
    %v3438 = vunpack.c.h.b16 %v3023
    %v3439 = vunpack.c.l.b16 %v3024
    %v3440 = vunpack.c.h.b16 %v3024
    %v3441 = vunpack.c.l.b16 %v3025
    %v3442 = vunpack.c.h.b16 %v3025
    %v3443 = vunpack.c.l.b16 %v3026
    %v3444 = vunpack.c.h.b16 %v3026
    %v3445 = vunpack.c.l.b16 %v3027
    %v3446 = vunpack.c.h.b16 %v3027
    %v3447 = vunpack.c.l.b16 %v3028
    %v3448 = vunpack.c.h.b16 %v3028
    %v3449 = vunpack.c.l.b16 %v3029
    %v3450 = vunpack.c.h.b16 %v3029
    %v3451 = vunpack.c.l.b16 %v3030
    %v3452 = vunpack.c.h.b16 %v3030
    %v3453 = vunpack.c.l.b16 %v3031
    %v3454 = vunpack.c.h.b16 %v3031
    %v3455 = vunpack.c.l.b16 %v3032
    %v3456 = vunpack.c.h.b16 %v3032
    %v3457 = vunpack.c.l.b16 %v3033
    %v3458 = vunpack.c.h.b16 %v3033
    %v3459 = vunpack.c.l.b16 %v3034
    %v3460 = vunpack.c.h.b16 %v3034
    %v3461 = vunpack.c.l.b16 %v3035
    %v3462 = vunpack.c.h.b16 %v3035
    %v3463 = vunpack.c.l.b16 %v3036
    %v3464 = vunpack.c.h.b16 %v3036
    %v3465 = vunpack.c.l.b16 %v3037
    %v3466 = vunpack.c.h.b16 %v3037
    %v3467 = vunpack.c.l.b16 %v3038
    %v3468 = vunpack.c.h.b16 %v3038
    %v3469 = vunpack.c.l.b16 %v3039
    %v3470 = vunpack.c.h.b16 %v3039
    %v3471 = vunpack.c.l.b16 %v3040
    %v3472 = vunpack.c.h.b16 %v3040
    %v3473 = vunpack.c.l.b16 %v3041
    %v3474 = vunpack.c.h.b16 %v3041
    %v3475 = vunpack.c.l.b16 %v3042
    %v3476 = vunpack.c.h.b16 %v3042
    %v3477 = vunpack.c.l.b16 %v3043
    %v3478 = vunpack.c.h.b16 %v3043
    %v3479 = vunpack.c.l.b16 %v3044
    %v3480 = vunpack.c.h.b16 %v3044
    %v3481 = vunpack.c.l.b16 %v3045
    %v3482 = vunpack.c.h.b16 %v3045
    %v3483 = vunpack.c.l.b16 %v3046
    %v3484 = vunpack.c.h.b16 %v3046
    %v3485 = vunpack.c.l.b16 %v3047
    %v3486 = vunpack.c.h.b16 %v3047
    %v3487 = vunpack.c.l.b16 %v3048
    %v3488 = vunpack.c.h.b16 %v3048
    %v3489 = vunpack.c.l.b16 %v3049
    %v3490 = vunpack.c.h.b16 %v3049
    %v3491 = vunpack.c.l.b16 %v3050
    %v3492 = vunpack.c.h.b16 %v3050
    %v3493 = vunpack.c.l.b16 %v3051
    %v3494 = vunpack.c.h.b16 %v3051
    %v3495 = vunpack.c.l.b16 %v3052
    %v3496 = vunpack.c.h.b16 %v3052
    %v3497 = vunpack.c.l.b16 %v3053
    %v3498 = vunpack.c.h.b16 %v3053
    %v3499 = vunpack.c.l.b16 %v3054
    %v3500 = vunpack.c.h.b16 %v3054
    %v3501 = vunpack.c.l.b16 %v3055
    %v3502 = vunpack.c.h.b16 %v3055
    %v3503 = vunpack.c.l.b16 %v3056
    %v3504 = vunpack.c.h.b16 %v3056
    %v3505 = vunpack.c.l.b16 %v3057
    %v3506 = vunpack.c.h.b16 %v3057
    %v3507 = vunpack.c.l.b16 %v3058
    %v3508 = vunpack.c.h.b16 %v3058
    %v3509 = vunpack.c.l.b16 %v3059
    %v3510 = vunpack.c.h.b16 %v3059
    %v3511 = vunpack.c.l.b16 %v3060
    %v3512 = vunpack.c.h.b16 %v3060
    %v3513 = vunpack.c.l.b16 %v3061
    %v3514 = vunpack.c.h.b16 %v3061
    %v3515 = vunpack.c.l.b16 %v3062
    %v3516 = vunpack.c.h.b16 %v3062
    %v3517 = vunpack.c.l.b16 %v3063
    %v3518 = vunpack.c.h.b16 %v3063
    %v3519 = vunpack.c.l.b16 %v3064
    %v3520 = vunpack.c.h.b16 %v3064
    %v3521 = vunpack.c.l.b16 %v3065
    %v3522 = vunpack.c.h.b16 %v3065
    %v3523 = vunpack.c.l.b16 %v3066
    %v3524 = vunpack.c.h.b16 %v3066
    %v3525 = vunpack.c.l.b16 %v3067
    %v3526 = vunpack.c.h.b16 %v3067
    %v3527 = vunpack.c.l.b16 %v3068
    %v3528 = vunpack.c.h.b16 %v3068
    %v3529 = vunpack.c.l.b16 %v3069
    %v3530 = vunpack.c.h.b16 %v3069
    %v3531 = vunpack.c.l.b16 %v3070
    %v3532 = vunpack.c.h.b16 %v3070
    %v3533 = vunpack.c.l.b16 %v3071
    %v3534 = vunpack.c.h.b16 %v3071
    %v3535 = vunpack.c.l.b16 %v3072
    %v3536 = vunpack.c.h.b16 %v3072
    %v3537 = vunpack.c.l.b16 %v3073
    %v3538 = vunpack.c.h.b16 %v3073
    %v3539 = vunpack.c.l.b16 %v3074
    %v3540 = vunpack.c.h.b16 %v3074
    %v3541 = vunpack.c.l.b16 %v3075
    %v3542 = vunpack.c.h.b16 %v3075
    %v3543 = vunpack.c.l.b16 %v3076
    %v3544 = vunpack.c.h.b16 %v3076
    %v3545 = vunpack.c.l.b16 %v3077
    %v3546 = vunpack.c.h.b16 %v3077
    %v3547 = vunpack.c.l.b16 %v3078
    %v3548 = vunpack.c.h.b16 %v3078
    %v3549 = vunpack.c.l.b16 %v3079
    %v3550 = vunpack.c.h.b16 %v3079
    %v3551 = vunpack.c.l.b16 %v3080
    %v3552 = vunpack.c.h.b16 %v3080
    %v3553 = vunpack.c.l.b16 %v3081
    %v3554 = vunpack.c.h.b16 %v3081
    %v3555 = vunpack.c.l.b16 %v3082
    %v3556 = vunpack.c.h.b16 %v3082
    %v3557 = vunpack.c.l.b16 %v3083
    %v3558 = vunpack.c.h.b16 %v3083
    %v3559 = vunpack.c.l.b16 %v3084
    %v3560 = vunpack.c.h.b16 %v3084
    %v3561 = vunpack.c.l.b16 %v3085
    %v3562 = vunpack.c.h.b16 %v3085
    %v3563 = vunpack.c.l.b16 %v3086
    %v3564 = vunpack.c.h.b16 %v3086
    %v3565 = vunpack.c.l.b16 %v3087
    %v3566 = vunpack.c.h.b16 %v3087
    %v3567 = vunpack.c.l.b16 %v3088
    %v3568 = vunpack.c.h.b16 %v3088
    %v3569 = vunpack.c.l.b16 %v3089
    %v3570 = vunpack.c.h.b16 %v3089
    %v3571 = vunpack.c.l.b16 %v3090
    %v3572 = vunpack.c.h.b16 %v3090
    %v3573 = vunpack.c.l.b16 %v3091
    %v3574 = vunpack.c.h.b16 %v3091
    %v3575 = vunpack.c.l.b16 %v3092
    %v3576 = vunpack.c.h.b16 %v3092
    %v3577 = vunpack.c.l.b16 %v3093
    %v3578 = vunpack.c.h.b16 %v3093
    %v3579 = vunpack.c.l.b16 %v3094
    %v3580 = vunpack.c.h.b16 %v3094
    %v3581 = vunpack.c.l.b16 %v3095
    %v3582 = vunpack.c.h.b16 %v3095
    %v3583 = vunpack.c.l.b16 %v3096
    %v3584 = vunpack.c.h.b16 %v3096
    %v3585 = vunpack.c.l.b16 %v3097
    %v3586 = vunpack.c.h.b16 %v3097
    %v3587 = vunpack.c.l.b16 %v3098
    %v3588 = vunpack.c.h.b16 %v3098
    %v3589 = vunpack.c.l.b16 %v3099
    %v3590 = vunpack.c.h.b16 %v3099
    %v3591 = vunpack.c.l.b16 %v3100
    %v3592 = vunpack.c.h.b16 %v3100
    %v3593 = vunpack.c.l.b16 %v3101
    %v3594 = vunpack.c.h.b16 %v3101
    %v3595 = vunpack.c.l.b16 %v3102
    %v3596 = vunpack.c.h.b16 %v3102
    %v3597 = vunpack.c.l.b16 %v3103
    %v3598 = vunpack.c.h.b16 %v3103
    %v3599 = vunpack.c.l.b16 %v3104
    %v3600 = vunpack.c.h.b16 %v3104
    %v3601 = vunpack.c.l.b16 %v3105
    %v3602 = vunpack.c.h.b16 %v3105
    %v3603 = vunpack.c.l.b16 %v3106
    %v3604 = vunpack.c.h.b16 %v3106
    %v3605 = vunpack.c.l.b16 %v3107
    %v3606 = vunpack.c.h.b16 %v3107
    %v3607 = vunpack.c.l.b16 %v3108
    %v3608 = vunpack.c.h.b16 %v3108
    %v3609 = vunpack.c.l.b16 %v3109
    %v3610 = vunpack.c.h.b16 %v3109
    %v3611 = vunpack.c.l.b16 %v3110
    %v3612 = vunpack.c.h.b16 %v3110
    %v3613 = vunpack.c.l.b16 %v3111
    %v3614 = vunpack.c.h.b16 %v3111
    %v3615 = vunpack.c.l.b16 %v3112
    %v3616 = vunpack.c.h.b16 %v3112
    %v3617 = vunpack.c.l.b16 %v3113
    %v3618 = vunpack.c.h.b16 %v3113
    %v3619 = vunpack.c.l.b16 %v3114
    %v3620 = vunpack.c.h.b16 %v3114
    %v3621 = vunpack.c.l.b16 %v3115
    %v3622 = vunpack.c.h.b16 %v3115
    %v3623 = vunpack.c.l.b16 %v3116
    %v3624 = vunpack.c.h.b16 %v3116
    %v3625 = vunpack.c.l.b16 %v3117
    %v3626 = vunpack.c.h.b16 %v3117
    %v3627 = vunpack.c.l.b16 %v3118
    %v3628 = vunpack.c.h.b16 %v3118
    %v3629 = vunpack.c.l.b16 %v3119
    %v3630 = vunpack.c.h.b16 %v3119
    %v3631 = vunpack.c.l.b16 %v3120
    %v3632 = vunpack.c.h.b16 %v3120
    %v3633 = vunpack.c.l.b16 %v3121
    %v3634 = vunpack.c.h.b16 %v3121
    %v3635 = vunpack.c.l.b16 %v3122
    %v3636 = vunpack.c.h.b16 %v3122
    %v3637 = vunpack.c.l.b16 %v3123
    %v3638 = vunpack.c.h.b16 %v3123
    %v3639 = vunpack.c.l.b16 %v3124
    %v3640 = vunpack.c.h.b16 %v3124
    %v3641 = vunpack.c.l.b16 %v3125
    %v3642 = vunpack.c.h.b16 %v3125
    %v3643 = vunpack.c.l.b16 %v3126
    %v3644 = vunpack.c.h.b16 %v3126
    %v3645 = vunpack.c.l.b16 %v3127
    %v3646 = vunpack.c.h.b16 %v3127
    %v3647 = vunpack.c.l.b16 %v3128
    %v3648 = vunpack.c.h.b16 %v3128
    %v3649 = vunpack.c.l.b16 %v3129
    %v3650 = vunpack.c.h.b16 %v3129
    %v3651 = vunpack.c.l.b16 %v3130
    %v3652 = vunpack.c.h.b16 %v3130
    %v3653 = vunpack.c.l.b16 %v3131
    %v3654 = vunpack.c.h.b16 %v3131
    %v3655 = vunpack.c.l.b16 %v3132
    %v3656 = vunpack.c.h.b16 %v3132
    %v3657 = vunpack.c.l.b16 %v3133
    %v3658 = vunpack.c.h.b16 %v3133
    %v3659 = vunpack.c.l.b16 %v3134
    %v3660 = vunpack.c.h.b16 %v3134
    %v3661 = vunpack.c.l.b16 %v3135
    %v3662 = vunpack.c.h.b16 %v3135
    %v3663 = vunpack.c.l.b16 %v3136
    %v3664 = vunpack.c.h.b16 %v3136
    %v3665 = vunpack.c.l.b16 %v3137
    %v3666 = vunpack.c.h.b16 %v3137
    %v3667 = vunpack.c.l.b16 %v3138
    %v3668 = vunpack.c.h.b16 %v3138
    %v3669 = vunpack.c.l.b16 %v3139
    %v3670 = vunpack.c.h.b16 %v3139
    %v3671 = vunpack.c.l.b16 %v3140
    %v3672 = vunpack.c.h.b16 %v3140
    %v3673 = vunpack.c.l.b16 %v3141
    %v3674 = vunpack.c.h.b16 %v3141
    %v3675 = vunpack.c.l.b16 %v3142
    %v3676 = vunpack.c.h.b16 %v3142
    %v3677 = vunpack.c.l.b16 %v3143
    %v3678 = vunpack.c.h.b16 %v3143
    %v3679 = vunpack.c.l.b16 %v3144
    %v3680 = vunpack.c.h.b16 %v3144
    %v3681 = vunpack.c.l.b16 %v3145
    %v3682 = vunpack.c.h.b16 %v3145
    %v3683 = vunpack.c.l.b16 %v3146
    %v3684 = vunpack.c.h.b16 %v3146
    %v3685 = vunpack.c.l.b16 %v3147
    %v3686 = vunpack.c.h.b16 %v3147
    %v3687 = vunpack.c.l.b16 %v3148
    %v3688 = vunpack.c.h.b16 %v3148
    %v3689 = vunpack.c.l.b16 %v3149
    %v3690 = vunpack.c.h.b16 %v3149
    %v3691 = vunpack.c.l.b16 %v3150
    %v3692 = vunpack.c.h.b16 %v3150
    %v3693 = vunpack.c.l.b16 %v3151
    %v3694 = vunpack.c.h.b16 %v3151
    %v3695 = vunpack.c.l.b16 %v3152
    %v3696 = vunpack.c.h.b16 %v3152
    %v3697 = vunpack.c.l.b16 %v3153
    %v3698 = vunpack.c.h.b16 %v3153
    %v3699 = vunpack.c.l.b16 %v3154
    %v3700 = vunpack.c.h.b16 %v3154
    %v3701 = vunpack.c.l.b16 %v3155
    %v3702 = vunpack.c.h.b16 %v3155
    %v3703 = vunpack.c.l.b16 %v3156
    %v3704 = vunpack.c.h.b16 %v3156
    %v3705 = vunpack.c.l.b16 %v3157
    %v3706 = vunpack.c.h.b16 %v3157
    %v3707 = vunpack.c.l.b16 %v3158
    %v3708 = vunpack.c.h.b16 %v3158
    %v3709 = vunpack.c.l.b16 %v3159
    %v3710 = vunpack.c.h.b16 %v3159
    %v3711 = vunpack.c.l.b16 %v3160
    %v3712 = vunpack.c.h.b16 %v3160
    %v3713 = vunpack.c.l.b16 %v3161
    %v3714 = vunpack.c.h.b16 %v3161
    %v3715 = vunpack.c.l.b16 %v3162
    %v3716 = vunpack.c.h.b16 %v3162
    %v3717 = vunpack.c.l.b16 %v3163
    %v3718 = vunpack.c.h.b16 %v3163
    %v3719 = vunpack.c.l.b16 %v3164
    %v3720 = vunpack.c.h.b16 %v3164
    %v3721 = vunpack.c.l.b16 %v3165
    %v3722 = vunpack.c.h.b16 %v3165
    %v3723 = vunpack.c.l.b16 %v3166
    %v3724 = vunpack.c.h.b16 %v3166
    %v3725 = vunpack.c.l.b16 %v3167
    %v3726 = vunpack.c.h.b16 %v3167
    %v3727 = vunpack.c.l.b16 %v3168
    %v3728 = vunpack.c.h.b16 %v3168
    %v3729 = vunpack.c.l.b16 %v3169
    %v3730 = vunpack.c.h.b16 %v3169
    %v3731 = vunpack.c.l.b16 %v3170
    %v3732 = vunpack.c.h.b16 %v3170
    %v3733 = vunpack.c.l.b16 %v3171
    %v3734 = vunpack.c.h.b16 %v3171
    %v3735 = vunpack.c.l.b16 %v3172
    %v3736 = vunpack.c.h.b16 %v3172
    %v3737 = vunpack.c.l.b16 %v3173
    %v3738 = vunpack.c.h.b16 %v3173
    %v3739 = vunpack.c.l.b16 %v3174
    %v3740 = vunpack.c.h.b16 %v3174
    %v3741 = vunpack.c.l.b16 %v3175
    %v3742 = vunpack.c.h.b16 %v3175
    %v3743 = vunpack.c.l.b16 %v3176
    %v3744 = vunpack.c.h.b16 %v3176
    %v3745 = vunpack.c.l.b16 %v3177
    %v3746 = vunpack.c.h.b16 %v3177
    %v3747 = vunpack.c.l.b16 %v3178
    %v3748 = vunpack.c.h.b16 %v3178
    %v3749 = vunpack.c.l.b16 %v3179
    %v3750 = vunpack.c.h.b16 %v3179
    %v3751 = vunpack.c.l.b16 %v3180
    %v3752 = vunpack.c.h.b16 %v3180
    %v3753 = vunpack.c.l.b16 %v3181
    %v3754 = vunpack.c.h.b16 %v3181
    %v3755 = vunpack.c.l.b16 %v3182
    %v3756 = vunpack.c.h.b16 %v3182
    %v3757 = vunpack.c.l.b16 %v3183
    %v3758 = vunpack.c.h.b16 %v3183
    %v3759 = vunpack.c.l.b16 %v3184
    %v3760 = vunpack.c.h.b16 %v3184
    %v3761 = vunpack.c.l.b16 %v3185
    %v3762 = vunpack.c.h.b16 %v3185
    %v3763 = vunpack.c.l.b16 %v3186
    %v3764 = vunpack.c.h.b16 %v3186
    %v3765 = vunpack.c.l.b16 %v3187
    %v3766 = vunpack.c.h.b16 %v3187
    %v3767 = vunpack.c.l.b16 %v3188
    %v3768 = vunpack.c.h.b16 %v3188
    %v3769 = vunpack.c.l.b16 %v3189
    %v3770 = vunpack.c.h.b16 %v3189
    %v3771 = vunpack.c.l.b16 %v3190
    %v3772 = vunpack.c.h.b16 %v3190
    %v3773 = vunpack.c.l.b16 %v3191
    %v3774 = vunpack.c.h.b16 %v3191
    %v3775 = vunpack.c.l.b16 %v3192
    %v3776 = vunpack.c.h.b16 %v3192
    %v3777 = vunpack.c.l.b16 %v3193
    %v3778 = vunpack.c.h.b16 %v3193
    %v3779 = vunpack.c.l.b16 %v3194
    %v3780 = vunpack.c.h.b16 %v3194
    %v3781 = vunpack.c.l.b16 %v3195
    %v3782 = vunpack.c.h.b16 %v3195
    %v3783 = vunpack.c.l.b16 %v3196
    %v3784 = vunpack.c.h.b16 %v3196
    %v3785 = vunpack.c.l.b16 %v3197
    %v3786 = vunpack.c.h.b16 %v3197
    %v3787 = vunpack.c.l.b16 %v3198
    %v3788 = vunpack.c.h.b16 %v3198
    %v3789 = vpack.c.b16 %v3411, %v3405
    %v3790 = vpack.c.b16 %v3412, %v3406
    %v3791 = vpack.c.b16 %v3413, %v3407
    %v3792 = vpack.c.b16 %v3414, %v3408
    %v3793 = vpack.c.b16 %v3415, %v3409
    %v3794 = vpack.c.b16 %v3416, %v3410
    %v3795 = vpack.c.b16 %v3423, %v3417
    %v3796 = vpack.c.b16 %v3424, %v3418
    %v3797 = vpack.c.b16 %v3425, %v3419
    %v3798 = vpack.c.b16 %v3426, %v3420
    %v3799 = vpack.c.b16 %v3427, %v3421
    %v3800 = vpack.c.b16 %v3428, %v3422
    %v3801 = vpack.c.b16 %v3435, %v3429
    %v3802 = vpack.c.b16 %v3436, %v3430
    %v3803 = vpack.c.b16 %v3437, %v3431
    %v3804 = vpack.c.b16 %v3438, %v3432
    %v3805 = vpack.c.b16 %v3439, %v3433
    %v3806 = vpack.c.b16 %v3440, %v3434
    %v3807 = vpack.c.b16 %v3447, %v3441
    %v3808 = vpack.c.b16 %v3448, %v3442
    %v3809 = vpack.c.b16 %v3449, %v3443
    %v3810 = vpack.c.b16 %v3450, %v3444
    %v3811 = vpack.c.b16 %v3451, %v3445
    %v3812 = vpack.c.b16 %v3452, %v3446
    %v3813 = vpack.c.b16 %v3459, %v3453
    %v3814 = vpack.c.b16 %v3460, %v3454
    %v3815 = vpack.c.b16 %v3461, %v3455
    %v3816 = vpack.c.b16 %v3462, %v3456
    %v3817 = vpack.c.b16 %v3463, %v3457
    %v3818 = vpack.c.b16 %v3464, %v3458
    %v3819 = vpack.c.b16 %v3471, %v3465
    %v3820 = vpack.c.b16 %v3472, %v3466
    %v3821 = vpack.c.b16 %v3473, %v3467
    %v3822 = vpack.c.b16 %v3474, %v3468
    %v3823 = vpack.c.b16 %v3475, %v3469
    %v3824 = vpack.c.b16 %v3476, %v3470
    %v3825 = vpack.c.b16 %v3483, %v3477
    %v3826 = vpack.c.b16 %v3484, %v3478
    %v3827 = vpack.c.b16 %v3485, %v3479
    %v3828 = vpack.c.b16 %v3486, %v3480
    %v3829 = vpack.c.b16 %v3487, %v3481
    %v3830 = vpack.c.b16 %v3488, %v3482
    %v3831 = vpack.c.b16 %v3495, %v3489
    %v3832 = vpack.c.b16 %v3496, %v3490
    %v3833 = vpack.c.b16 %v3497, %v3491
    %v3834 = vpack.c.b16 %v3498, %v3492
    %v3835 = vpack.c.b16 %v3499, %v3493
    %v3836 = vpack.c.b16 %v3500, %v3494
    %v3837 = vpack.c.b16 %v3507, %v3501
    %v3838 = vpack.c.b16 %v3508, %v3502
    %v3839 = vpack.c.b16 %v3509, %v3503
    %v3840 = vpack.c.b16 %v3510, %v3504
    %v3841 = vpack.c.b16 %v3511, %v3505
    %v3842 = vpack.c.b16 %v3512, %v3506
    %v3843 = vpack.c.b16 %v3519, %v3513
    %v3844 = vpack.c.b16 %v3520, %v3514
    %v3845 = vpack.c.b16 %v3521, %v3515
    %v3846 = vpack.c.b16 %v3522, %v3516
    %v3847 = vpack.c.b16 %v3523, %v3517
    %v3848 = vpack.c.b16 %v3524, %v3518
    %v3849 = vpack.c.b16 %v3531, %v3525
    %v3850 = vpack.c.b16 %v3532, %v3526
    %v3851 = vpack.c.b16 %v3533, %v3527
    %v3852 = vpack.c.b16 %v3534, %v3528
    %v3853 = vpack.c.b16 %v3535, %v3529
    %v3854 = vpack.c.b16 %v3536, %v3530
    %v3855 = vpack.c.b16 %v3543, %v3537
    %v3856 = vpack.c.b16 %v3544, %v3538
    %v3857 = vpack.c.b16 %v3545, %v3539
    %v3858 = vpack.c.b16 %v3546, %v3540
    %v3859 = vpack.c.b16 %v3547, %v3541
    %v3860 = vpack.c.b16 %v3548, %v3542
    %v3861 = vpack.c.b16 %v3555, %v3549
    %v3862 = vpack.c.b16 %v3556, %v3550
    %v3863 = vpack.c.b16 %v3557, %v3551
    %v3864 = vpack.c.b16 %v3558, %v3552
    %v3865 = vpack.c.b16 %v3559, %v3553
    %v3866 = vpack.c.b16 %v3560, %v3554
    %v3867 = vpack.c.b16 %v3567, %v3561
    %v3868 = vpack.c.b16 %v3568, %v3562
    %v3869 = vpack.c.b16 %v3569, %v3563
    %v3870 = vpack.c.b16 %v3570, %v3564
    %v3871 = vpack.c.b16 %v3571, %v3565
    %v3872 = vpack.c.b16 %v3572, %v3566
    %v3873 = vpack.c.b16 %v3579, %v3573
    %v3874 = vpack.c.b16 %v3580, %v3574
    %v3875 = vpack.c.b16 %v3581, %v3575
    %v3876 = vpack.c.b16 %v3582, %v3576
    %v3877 = vpack.c.b16 %v3583, %v3577
    %v3878 = vpack.c.b16 %v3584, %v3578
    %v3879 = vpack.c.b16 %v3591, %v3585
    %v3880 = vpack.c.b16 %v3592, %v3586
    %v3881 = vpack.c.b16 %v3593, %v3587
    %v3882 = vpack.c.b16 %v3594, %v3588
    %v3883 = vpack.c.b16 %v3595, %v3589
    %v3884 = vpack.c.b16 %v3596, %v3590
    %v3885 = vpack.c.b16 %v3603, %v3597
    %v3886 = vpack.c.b16 %v3604, %v3598
    %v3887 = vpack.c.b16 %v3605, %v3599
    %v3888 = vpack.c.b16 %v3606, %v3600
    %v3889 = vpack.c.b16 %v3607, %v3601
    %v3890 = vpack.c.b16 %v3608, %v3602
    %v3891 = vpack.c.b16 %v3615, %v3609
    %v3892 = vpack.c.b16 %v3616, %v3610
    %v3893 = vpack.c.b16 %v3617, %v3611
    %v3894 = vpack.c.b16 %v3618, %v3612
    %v3895 = vpack.c.b16 %v3619, %v3613
    %v3896 = vpack.c.b16 %v3620, %v3614
    %v3897 = vpack.c.b16 %v3627, %v3621
    %v3898 = vpack.c.b16 %v3628, %v3622
    %v3899 = vpack.c.b16 %v3629, %v3623
    %v3900 = vpack.c.b16 %v3630, %v3624
    %v3901 = vpack.c.b16 %v3631, %v3625
    %v3902 = vpack.c.b16 %v3632, %v3626
    %v3903 = vpack.c.b16 %v3639, %v3633
    %v3904 = vpack.c.b16 %v3640, %v3634
    %v3905 = vpack.c.b16 %v3641, %v3635
    %v3906 = vpack.c.b16 %v3642, %v3636
    %v3907 = vpack.c.b16 %v3643, %v3637
    %v3908 = vpack.c.b16 %v3644, %v3638
    %v3909 = vpack.c.b16 %v3651, %v3645
    %v3910 = vpack.c.b16 %v3652, %v3646
    %v3911 = vpack.c.b16 %v3653, %v3647
    %v3912 = vpack.c.b16 %v3654, %v3648
    %v3913 = vpack.c.b16 %v3655, %v3649
    %v3914 = vpack.c.b16 %v3656, %v3650
    %v3915 = vpack.c.b16 %v3663, %v3657
    %v3916 = vpack.c.b16 %v3664, %v3658
    %v3917 = vpack.c.b16 %v3665, %v3659
    %v3918 = vpack.c.b16 %v3666, %v3660
    %v3919 = vpack.c.b16 %v3667, %v3661
    %v3920 = vpack.c.b16 %v3668, %v3662
    %v3921 = vpack.c.b16 %v3675, %v3669
    %v3922 = vpack.c.b16 %v3676, %v3670
    %v3923 = vpack.c.b16 %v3677, %v3671
    %v3924 = vpack.c.b16 %v3678, %v3672
    %v3925 = vpack.c.b16 %v3679, %v3673
    %v3926 = vpack.c.b16 %v3680, %v3674
    %v3927 = vpack.c.b16 %v3687, %v3681
    %v3928 = vpack.c.b16 %v3688, %v3682
    %v3929 = vpack.c.b16 %v3689, %v3683
    %v3930 = vpack.c.b16 %v3690, %v3684
    %v3931 = vpack.c.b16 %v3691, %v3685
    %v3932 = vpack.c.b16 %v3692, %v3686
    %v3933 = vpack.c.b16 %v3699, %v3693
    %v3934 = vpack.c.b16 %v3700, %v3694
    %v3935 = vpack.c.b16 %v3701, %v3695
    %v3936 = vpack.c.b16 %v3702, %v3696
    %v3937 = vpack.c.b16 %v3703, %v3697
    %v3938 = vpack.c.b16 %v3704, %v3698
    %v3939 = vpack.c.b16 %v3711, %v3705
    %v3940 = vpack.c.b16 %v3712, %v3706
    %v3941 = vpack.c.b16 %v3713, %v3707
    %v3942 = vpack.c.b16 %v3714, %v3708
    %v3943 = vpack.c.b16 %v3715, %v3709
    %v3944 = vpack.c.b16 %v3716, %v3710
    %v3945 = vpack.c.b16 %v3723, %v3717
    %v3946 = vpack.c.b16 %v3724, %v3718
    %v3947 = vpack.c.b16 %v3725, %v3719
    %v3948 = vpack.c.b16 %v3726, %v3720
    %v3949 = vpack.c.b16 %v3727, %v3721
    %v3950 = vpack.c.b16 %v3728, %v3722
    %v3951 = vpack.c.b16 %v3735, %v3729
    %v3952 = vpack.c.b16 %v3736, %v3730
    %v3953 = vpack.c.b16 %v3737, %v3731
    %v3954 = vpack.c.b16 %v3738, %v3732
    %v3955 = vpack.c.b16 %v3739, %v3733
    %v3956 = vpack.c.b16 %v3740, %v3734
    %v3957 = vpack.c.b16 %v3747, %v3741
    %v3958 = vpack.c.b16 %v3748, %v3742
    %v3959 = vpack.c.b16 %v3749, %v3743
    %v3960 = vpack.c.b16 %v3750, %v3744
    %v3961 = vpack.c.b16 %v3751, %v3745
    %v3962 = vpack.c.b16 %v3752, %v3746
    %v3963 = vpack.c.b16 %v3759, %v3753
    %v3964 = vpack.c.b16 %v3760, %v3754
    %v3965 = vpack.c.b16 %v3761, %v3755
    %v3966 = vpack.c.b16 %v3762, %v3756
    %v3967 = vpack.c.b16 %v3763, %v3757
    %v3968 = vpack.c.b16 %v3764, %v3758
    %v3969 = vpack.c.b16 %v3771, %v3765
    %v3970 = vpack.c.b16 %v3772, %v3766
    %v3971 = vpack.c.b16 %v3773, %v3767
    %v3972 = vpack.c.b16 %v3774, %v3768
    %v3973 = vpack.c.b16 %v3775, %v3769
    %v3974 = vpack.c.b16 %v3776, %v3770
    %v3975 = vpack.c.b16 %v3783, %v3777
    %v3976 = vpack.c.b16 %v3784, %v3778
    %v3977 = vpack.c.b16 %v3785, %v3779
    %v3978 = vpack.c.b16 %v3786, %v3780
    %v3979 = vpack.c.b16 %v3787, %v3781
    %v3980 = vpack.c.b16 %v3788, %v3782
    %4173 = vmatpush.bf16.msra.mxu0 %v3831
    %4174 = vmatpush.bf16.msra.mxu0 %v3825
    %4175 = vmatpush.bf16.msra.mxu0 %v3819
    %4176 = vmatpush.bf16.msra.mxu0 %v3813
    %4177 = vmatpush.bf16.msra.mxu0 %v3807
    %4178 = vmatpush.bf16.msra.mxu0 %v3801
    %4179 = vmatpush.bf16.msra.mxu0 %v3795
    %4180 = vmatpush.bf16.msra.mxu0 %v3789
    %4181 = vmatmul.bf16.gmra.mxu0 %v3003
    %v4182 = vpop.f32.mrf.mxu0
    %v4183 = vadd.f32 %v3201, %v4182
    %v4184 = vpop.f32.mrf.mxu0
    %4185 = vdwg.mxu0
    %4186 = vmatpush.bf16.msra.mxu0 %v3879
    %4187 = vmatpush.bf16.msra.mxu0 %v3873
    %4188 = vmatpush.bf16.msra.mxu0 %v3867
    %4189 = vmatpush.bf16.msra.mxu0 %v3861
    %4190 = vmatpush.bf16.msra.mxu0 %v3855
    %4191 = vmatpush.bf16.msra.mxu0 %v3849
    %4192 = vmatpush.bf16.msra.mxu0 %v3843
    %4193 = vmatpush.bf16.msra.mxu0 %v3837
    %4194 = vmatmul.bf16.gmra.mxu0 %v3004
    %v4195 = vpop.f32.mrf.mxu0
    %v4196 = vadd.f32 %v4183, %v4195
    %v4197 = vpop.f32.mrf.mxu0
    %4198 = vdwg.mxu0
    %4199 = vmatpush.bf16.msra.mxu0 %v3927
    %4200 = vmatpush.bf16.msra.mxu0 %v3921
    %4201 = vmatpush.bf16.msra.mxu0 %v3915
    %4202 = vmatpush.bf16.msra.mxu0 %v3909
    %4203 = vmatpush.bf16.msra.mxu0 %v3903
    %4204 = vmatpush.bf16.msra.mxu0 %v3897
    %4205 = vmatpush.bf16.msra.mxu0 %v3891
    %4206 = vmatpush.bf16.msra.mxu0 %v3885
    %4207 = vmatmul.bf16.gmra.mxu0 %v3005
    %v4208 = vpop.f32.mrf.mxu0
    %v4209 = vadd.f32 %v4196, %v4208
    %v4210 = vpop.f32.mrf.mxu0
    %4211 = vdwg.mxu0
    %4212 = vmatpush.bf16.msra.mxu0 %v3975
    %4213 = vmatpush.bf16.msra.mxu0 %v3969
    %4214 = vmatpush.bf16.msra.mxu0 %v3963
    %4215 = vmatpush.bf16.msra.mxu0 %v3957
    %4216 = vmatpush.bf16.msra.mxu0 %v3951
    %4217 = vmatpush.bf16.msra.mxu0 %v3945
    %4218 = vmatpush.bf16.msra.mxu0 %v3939
    %4219 = vmatpush.bf16.msra.mxu0 %v3933
    %4220 = vmatmul.bf16.gmra.mxu0 %v3006
    %v4221 = vpop.f32.mrf.mxu0
    %v4222 = vadd.f32 %v4209, %v4221
    %v4223 = vpop.f32.mrf.mxu0
    %4224 = vdwg.mxu0
    %4225 = vmatpush.bf16.msra.mxu0 %v3832
    %4226 = vmatpush.bf16.msra.mxu0 %v3826
    %4227 = vmatpush.bf16.msra.mxu0 %v3820
    %4228 = vmatpush.bf16.msra.mxu0 %v3814
    %4229 = vmatpush.bf16.msra.mxu0 %v3808
    %4230 = vmatpush.bf16.msra.mxu0 %v3802
    %4231 = vmatpush.bf16.msra.mxu0 %v3796
    %4232 = vmatpush.bf16.msra.mxu0 %v3790
    %4233 = vmatmul.bf16.gmra.mxu0 %v3003
    %v4234 = vpop.f32.mrf.mxu0
    %v4235 = vadd.f32 %v3202, %v4234
    %v4236 = vpop.f32.mrf.mxu0
    %4237 = vdwg.mxu0
    %4238 = vmatpush.bf16.msra.mxu0 %v3880
    %4239 = vmatpush.bf16.msra.mxu0 %v3874
    %4240 = vmatpush.bf16.msra.mxu0 %v3868
    %4241 = vmatpush.bf16.msra.mxu0 %v3862
    %4242 = vmatpush.bf16.msra.mxu0 %v3856
    %4243 = vmatpush.bf16.msra.mxu0 %v3850
    %4244 = vmatpush.bf16.msra.mxu0 %v3844
    %4245 = vmatpush.bf16.msra.mxu0 %v3838
    %4246 = vmatmul.bf16.gmra.mxu0 %v3004
    %v4247 = vpop.f32.mrf.mxu0
    %v4248 = vadd.f32 %v4235, %v4247
    %v4249 = vpop.f32.mrf.mxu0
    %4250 = vdwg.mxu0
    %4251 = vmatpush.bf16.msra.mxu0 %v3928
    %4252 = vmatpush.bf16.msra.mxu0 %v3922
    %4253 = vmatpush.bf16.msra.mxu0 %v3916
    %4254 = vmatpush.bf16.msra.mxu0 %v3910
    %4255 = vmatpush.bf16.msra.mxu0 %v3904
    %4256 = vmatpush.bf16.msra.mxu0 %v3898
    %4257 = vmatpush.bf16.msra.mxu0 %v3892
    %4258 = vmatpush.bf16.msra.mxu0 %v3886
    %4259 = vmatmul.bf16.gmra.mxu0 %v3005
    %v4260 = vpop.f32.mrf.mxu0
    %v4261 = vadd.f32 %v4248, %v4260
    %v4262 = vpop.f32.mrf.mxu0
    %4263 = vdwg.mxu0
    %4264 = vmatpush.bf16.msra.mxu0 %v3976
    %4265 = vmatpush.bf16.msra.mxu0 %v3970
    %4266 = vmatpush.bf16.msra.mxu0 %v3964
    %4267 = vmatpush.bf16.msra.mxu0 %v3958
    %4268 = vmatpush.bf16.msra.mxu0 %v3952
    %4269 = vmatpush.bf16.msra.mxu0 %v3946
    %4270 = vmatpush.bf16.msra.mxu0 %v3940
    %4271 = vmatpush.bf16.msra.mxu0 %v3934
    %4272 = vmatmul.bf16.gmra.mxu0 %v3006
    %v4273 = vpop.f32.mrf.mxu0
    %v4274 = vadd.f32 %v4261, %v4273
    %v4275 = vpop.f32.mrf.mxu0
    %4276 = vdwg.mxu0
    %4277 = vmatpush.bf16.msra.mxu0 %v3833
    %4278 = vmatpush.bf16.msra.mxu0 %v3827
    %4279 = vmatpush.bf16.msra.mxu0 %v3821
    %4280 = vmatpush.bf16.msra.mxu0 %v3815
    %4281 = vmatpush.bf16.msra.mxu0 %v3809
    %4282 = vmatpush.bf16.msra.mxu0 %v3803
    %4283 = vmatpush.bf16.msra.mxu0 %v3797
    %4284 = vmatpush.bf16.msra.mxu0 %v3791
    %4285 = vmatmul.bf16.gmra.mxu0 %v3003
    %v4286 = vpop.f32.mrf.mxu0
    %v4287 = vadd.f32 %v3203, %v4286
    %v4288 = vpop.f32.mrf.mxu0
    %4289 = vdwg.mxu0
    %4290 = vmatpush.bf16.msra.mxu0 %v3881
    %4291 = vmatpush.bf16.msra.mxu0 %v3875
    %4292 = vmatpush.bf16.msra.mxu0 %v3869
    %4293 = vmatpush.bf16.msra.mxu0 %v3863
    %4294 = vmatpush.bf16.msra.mxu0 %v3857
    %4295 = vmatpush.bf16.msra.mxu0 %v3851
    %4296 = vmatpush.bf16.msra.mxu0 %v3845
    %4297 = vmatpush.bf16.msra.mxu0 %v3839
    %4298 = vmatmul.bf16.gmra.mxu0 %v3004
    %v4299 = vpop.f32.mrf.mxu0
    %v4300 = vadd.f32 %v4287, %v4299
    %v4301 = vpop.f32.mrf.mxu0
    %4302 = vdwg.mxu0
    %4303 = vmatpush.bf16.msra.mxu0 %v3929
    %4304 = vmatpush.bf16.msra.mxu0 %v3923
    %4305 = vmatpush.bf16.msra.mxu0 %v3917
    %4306 = vmatpush.bf16.msra.mxu0 %v3911
    %4307 = vmatpush.bf16.msra.mxu0 %v3905
    %4308 = vmatpush.bf16.msra.mxu0 %v3899
    %4309 = vmatpush.bf16.msra.mxu0 %v3893
    %4310 = vmatpush.bf16.msra.mxu0 %v3887
    %4311 = vmatmul.bf16.gmra.mxu0 %v3005
    %v4312 = vpop.f32.mrf.mxu0
    %v4313 = vadd.f32 %v4300, %v4312
    %v4314 = vpop.f32.mrf.mxu0
    %4315 = vdwg.mxu0
    %4316 = vmatpush.bf16.msra.mxu0 %v3977
    %4317 = vmatpush.bf16.msra.mxu0 %v3971
    %4318 = vmatpush.bf16.msra.mxu0 %v3965
    %4319 = vmatpush.bf16.msra.mxu0 %v3959
    %4320 = vmatpush.bf16.msra.mxu0 %v3953
    %4321 = vmatpush.bf16.msra.mxu0 %v3947
    %4322 = vmatpush.bf16.msra.mxu0 %v3941
    %4323 = vmatpush.bf16.msra.mxu0 %v3935
    %4324 = vmatmul.bf16.gmra.mxu0 %v3006
    %v4325 = vpop.f32.mrf.mxu0
    %v4326 = vadd.f32 %v4313, %v4325
    %v4327 = vpop.f32.mrf.mxu0
    %4328 = vdwg.mxu0
    %4329 = vmatpush.bf16.msra.mxu0 %v3834
    %4330 = vmatpush.bf16.msra.mxu0 %v3828
    %4331 = vmatpush.bf16.msra.mxu0 %v3822
    %4332 = vmatpush.bf16.msra.mxu0 %v3816
    %4333 = vmatpush.bf16.msra.mxu0 %v3810
    %4334 = vmatpush.bf16.msra.mxu0 %v3804
    %4335 = vmatpush.bf16.msra.mxu0 %v3798
    %4336 = vmatpush.bf16.msra.mxu0 %v3792
    %4337 = vmatmul.bf16.gmra.mxu0 %v3003
    %v4338 = vpop.f32.mrf.mxu0
    %v4339 = vadd.f32 %v3204, %v4338
    %v4340 = vpop.f32.mrf.mxu0
    %4341 = vdwg.mxu0
    %4342 = vmatpush.bf16.msra.mxu0 %v3882
    %4343 = vmatpush.bf16.msra.mxu0 %v3876
    %4344 = vmatpush.bf16.msra.mxu0 %v3870
    %4345 = vmatpush.bf16.msra.mxu0 %v3864
    %4346 = vmatpush.bf16.msra.mxu0 %v3858
    %4347 = vmatpush.bf16.msra.mxu0 %v3852
    %4348 = vmatpush.bf16.msra.mxu0 %v3846
    %4349 = vmatpush.bf16.msra.mxu0 %v3840
    %4350 = vmatmul.bf16.gmra.mxu0 %v3004
    %v4351 = vpop.f32.mrf.mxu0
    %v4352 = vadd.f32 %v4339, %v4351
    %v4353 = vpop.f32.mrf.mxu0
    %4354 = vdwg.mxu0
    %4355 = vmatpush.bf16.msra.mxu0 %v3930
    %4356 = vmatpush.bf16.msra.mxu0 %v3924
    %4357 = vmatpush.bf16.msra.mxu0 %v3918
    %4358 = vmatpush.bf16.msra.mxu0 %v3912
    %4359 = vmatpush.bf16.msra.mxu0 %v3906
    %4360 = vmatpush.bf16.msra.mxu0 %v3900
    %4361 = vmatpush.bf16.msra.mxu0 %v3894
    %4362 = vmatpush.bf16.msra.mxu0 %v3888
    %4363 = vmatmul.bf16.gmra.mxu0 %v3005
    %v4364 = vpop.f32.mrf.mxu0
    %v4365 = vadd.f32 %v4352, %v4364
    %v4366 = vpop.f32.mrf.mxu0
    %4367 = vdwg.mxu0
    %4368 = vmatpush.bf16.msra.mxu0 %v3978
    %4369 = vmatpush.bf16.msra.mxu0 %v3972
    %4370 = vmatpush.bf16.msra.mxu0 %v3966
    %4371 = vmatpush.bf16.msra.mxu0 %v3960
    %4372 = vmatpush.bf16.msra.mxu0 %v3954
    %4373 = vmatpush.bf16.msra.mxu0 %v3948
    %4374 = vmatpush.bf16.msra.mxu0 %v3942
    %4375 = vmatpush.bf16.msra.mxu0 %v3936
    %4376 = vmatmul.bf16.gmra.mxu0 %v3006
    %v4377 = vpop.f32.mrf.mxu0
    %v4378 = vadd.f32 %v4365, %v4377
    %v4379 = vpop.f32.mrf.mxu0
    %4380 = vdwg.mxu0
    %4381 = vmatpush.bf16.msra.mxu0 %v3835
    %4382 = vmatpush.bf16.msra.mxu0 %v3829
    %4383 = vmatpush.bf16.msra.mxu0 %v3823
    %4384 = vmatpush.bf16.msra.mxu0 %v3817
    %4385 = vmatpush.bf16.msra.mxu0 %v3811
    %4386 = vmatpush.bf16.msra.mxu0 %v3805
    %4387 = vmatpush.bf16.msra.mxu0 %v3799
    %4388 = vmatpush.bf16.msra.mxu0 %v3793
    %4389 = vmatmul.bf16.gmra.mxu0 %v3003
    %v4390 = vpop.f32.mrf.mxu0
    %v4391 = vadd.f32 %v3205, %v4390
    %v4392 = vpop.f32.mrf.mxu0
    %4393 = vdwg.mxu0
    %4394 = vmatpush.bf16.msra.mxu0 %v3883
    %4395 = vmatpush.bf16.msra.mxu0 %v3877
    %4396 = vmatpush.bf16.msra.mxu0 %v3871
    %4397 = vmatpush.bf16.msra.mxu0 %v3865
    %4398 = vmatpush.bf16.msra.mxu0 %v3859
    %4399 = vmatpush.bf16.msra.mxu0 %v3853
    %4400 = vmatpush.bf16.msra.mxu0 %v3847
    %4401 = vmatpush.bf16.msra.mxu0 %v3841
    %4402 = vmatmul.bf16.gmra.mxu0 %v3004
    %v4403 = vpop.f32.mrf.mxu0
    %v4404 = vadd.f32 %v4391, %v4403
    %v4405 = vpop.f32.mrf.mxu0
    %4406 = vdwg.mxu0
    %4407 = vmatpush.bf16.msra.mxu0 %v3931
    %4408 = vmatpush.bf16.msra.mxu0 %v3925
    %4409 = vmatpush.bf16.msra.mxu0 %v3919
    %4410 = vmatpush.bf16.msra.mxu0 %v3913
    %4411 = vmatpush.bf16.msra.mxu0 %v3907
    %4412 = vmatpush.bf16.msra.mxu0 %v3901
    %4413 = vmatpush.bf16.msra.mxu0 %v3895
    %4414 = vmatpush.bf16.msra.mxu0 %v3889
    %4415 = vmatmul.bf16.gmra.mxu0 %v3005
    %v4416 = vpop.f32.mrf.mxu0
    %v4417 = vadd.f32 %v4404, %v4416
    %v4418 = vpop.f32.mrf.mxu0
    %4419 = vdwg.mxu0
    %4420 = vmatpush.bf16.msra.mxu0 %v3979
    %4421 = vmatpush.bf16.msra.mxu0 %v3973
    %4422 = vmatpush.bf16.msra.mxu0 %v3967
    %4423 = vmatpush.bf16.msra.mxu0 %v3961
    %4424 = vmatpush.bf16.msra.mxu0 %v3955
    %4425 = vmatpush.bf16.msra.mxu0 %v3949
    %4426 = vmatpush.bf16.msra.mxu0 %v3943
    %4427 = vmatpush.bf16.msra.mxu0 %v3937
    %4428 = vmatmul.bf16.gmra.mxu0 %v3006
    %v4429 = vpop.f32.mrf.mxu0
    %v4430 = vadd.f32 %v4417, %v4429
    %v4431 = vpop.f32.mrf.mxu0
    %4432 = vdwg.mxu0
    %4433 = vmatpush.bf16.msra.mxu0 %v3836
    %4434 = vmatpush.bf16.msra.mxu0 %v3830
    %4435 = vmatpush.bf16.msra.mxu0 %v3824
    %4436 = vmatpush.bf16.msra.mxu0 %v3818
    %4437 = vmatpush.bf16.msra.mxu0 %v3812
    %4438 = vmatpush.bf16.msra.mxu0 %v3806
    %4439 = vmatpush.bf16.msra.mxu0 %v3800
    %4440 = vmatpush.bf16.msra.mxu0 %v3794
    %4441 = vmatmul.bf16.gmra.mxu0 %v3003
    %v4442 = vpop.f32.mrf.mxu0
    %v4443 = vadd.f32 %v3206, %v4442
    %v4444 = vpop.f32.mrf.mxu0
    %4445 = vdwg.mxu0
    %4446 = vmatpush.bf16.msra.mxu0 %v3884
    %4447 = vmatpush.bf16.msra.mxu0 %v3878
    %4448 = vmatpush.bf16.msra.mxu0 %v3872
    %4449 = vmatpush.bf16.msra.mxu0 %v3866
    %4450 = vmatpush.bf16.msra.mxu0 %v3860
    %4451 = vmatpush.bf16.msra.mxu0 %v3854
    %4452 = vmatpush.bf16.msra.mxu0 %v3848
    %4453 = vmatpush.bf16.msra.mxu0 %v3842
    %4454 = vmatmul.bf16.gmra.mxu0 %v3004
    %v4455 = vpop.f32.mrf.mxu0
    %v4456 = vadd.f32 %v4443, %v4455
    %v4457 = vpop.f32.mrf.mxu0
    %4458 = vdwg.mxu0
    %4459 = vmatpush.bf16.msra.mxu0 %v3932
    %4460 = vmatpush.bf16.msra.mxu0 %v3926
    %4461 = vmatpush.bf16.msra.mxu0 %v3920
    %4462 = vmatpush.bf16.msra.mxu0 %v3914
    %4463 = vmatpush.bf16.msra.mxu0 %v3908
    %4464 = vmatpush.bf16.msra.mxu0 %v3902
    %4465 = vmatpush.bf16.msra.mxu0 %v3896
    %4466 = vmatpush.bf16.msra.mxu0 %v3890
    %4467 = vmatmul.bf16.gmra.mxu0 %v3005
    %v4468 = vpop.f32.mrf.mxu0
    %v4469 = vadd.f32 %v4456, %v4468
    %v4470 = vpop.f32.mrf.mxu0
    %4471 = vdwg.mxu0
    %4472 = vmatpush.bf16.msra.mxu0 %v3980
    %4473 = vmatpush.bf16.msra.mxu0 %v3974
    %4474 = vmatpush.bf16.msra.mxu0 %v3968
    %4475 = vmatpush.bf16.msra.mxu0 %v3962
    %4476 = vmatpush.bf16.msra.mxu0 %v3956
    %4477 = vmatpush.bf16.msra.mxu0 %v3950
    %4478 = vmatpush.bf16.msra.mxu0 %v3944
    %4479 = vmatpush.bf16.msra.mxu0 %v3938
    %4480 = vmatmul.bf16.gmra.mxu0 %v3006
    %v4481 = vpop.f32.mrf.mxu0
    %v4482 = vadd.f32 %v4469, %v4481
    %v4483 = vpop.f32.mrf.mxu0
    %4484 = vdwg.mxu0
    %v4485 = vxor.u32 %v4222, 2147483648
    %v4486 = vxor.u32 %v4274, 2147483648
    %v4487 = vxor.u32 %v4326, 2147483648
    %v4488 = vxor.u32 %v4378, 2147483648
    %v4489 = vxor.u32 %v4430, 2147483648
    %v4490 = vxor.u32 %v4482, 2147483648
    %v4491 = vmul.f32 %v4485, 1.442695
    %v4492 = vpow.pop %v4491
    %v4493 = vmul.f32 %v4486, 1.442695
    %v4494 = vpow.pop %v4493
    %v4495 = vmul.f32 %v4487, 1.442695
    %v4496 = vpow.pop %v4495
    %v4497 = vmul.f32 %v4488, 1.442695
    %v4498 = vpow.pop %v4497
    %v4499 = vmul.f32 %v4489, 1.442695
    %v4500 = vpow.pop %v4499
    %v4501 = vmul.f32 %v4490, 1.442695
    %v4502 = vpow.pop %v4501
    %v4503 = vadd.f32 %v4492, 1.0
    %v4504 = vadd.f32 %v4494, 1.0
    %v4505 = vadd.f32 %v4496, 1.0
    %v4506 = vadd.f32 %v4498, 1.0
    %v4507 = vadd.f32 %v4500, 1.0
    %v4508 = vadd.f32 %v4502, 1.0
    %v4509 = vrcp.pop %v4503
    %v4510 = vmul.f32 %v4503, %v4509
    %v4511 = vsub.f32 1.0, %v4510
    %v4512 = vmul.f32 %v4509, %v4511
    %v4513 = vadd.f32 %v4509, %v4512
    %vm4514 = vweird.f32 %v4503
    %vm4515 = vweird.f32 %v4509
    %vm4516 = vmor %vm4514, %vm4515
    %v4517 = vsel %vm4516, %v4509, %v4513
    %v4518 = vand.u32 2147483647, %v4503
    %vm4519 = vcmp.eq.f32.partialorder %v4518, 8.507059e+37
    %v4520 = vand.u32 %v4503, 2147483648
    %v4521 = vor.u32 1.1754944e-38, %v4520
    %v4522 = vsel %vm4519, %v4521, %v4517
    %v4523 = vmul.f32 1.0, %v4522
    %v4524 = vrcp.pop %v4504
    %v4525 = vmul.f32 %v4504, %v4524
    %v4526 = vsub.f32 1.0, %v4525
    %v4527 = vmul.f32 %v4524, %v4526
    %v4528 = vadd.f32 %v4524, %v4527
    %vm4529 = vweird.f32 %v4504
    %vm4530 = vweird.f32 %v4524
    %vm4531 = vmor %vm4529, %vm4530
    %v4532 = vsel %vm4531, %v4524, %v4528
    %v4533 = vand.u32 2147483647, %v4504
    %vm4534 = vcmp.eq.f32.partialorder %v4533, 8.507059e+37
    %v4535 = vand.u32 %v4504, 2147483648
    %v4536 = vor.u32 1.1754944e-38, %v4535
    %v4537 = vsel %vm4534, %v4536, %v4532
    %v4538 = vmul.f32 1.0, %v4537
    %v4539 = vrcp.pop %v4505
    %v4540 = vmul.f32 %v4505, %v4539
    %v4541 = vsub.f32 1.0, %v4540
    %v4542 = vmul.f32 %v4539, %v4541
    %v4543 = vadd.f32 %v4539, %v4542
    %vm4544 = vweird.f32 %v4505
    %vm4545 = vweird.f32 %v4539
    %vm4546 = vmor %vm4544, %vm4545
    %v4547 = vsel %vm4546, %v4539, %v4543
    %v4548 = vand.u32 2147483647, %v4505
    %vm4549 = vcmp.eq.f32.partialorder %v4548, 8.507059e+37
    %v4550 = vand.u32 %v4505, 2147483648
    %v4551 = vor.u32 1.1754944e-38, %v4550
    %v4552 = vsel %vm4549, %v4551, %v4547
    %v4553 = vmul.f32 1.0, %v4552
    %v4554 = vrcp.pop %v4506
    %v4555 = vmul.f32 %v4506, %v4554
    %v4556 = vsub.f32 1.0, %v4555
    %v4557 = vmul.f32 %v4554, %v4556
    %v4558 = vadd.f32 %v4554, %v4557
    %vm4559 = vweird.f32 %v4506
    %vm4560 = vweird.f32 %v4554
    %vm4561 = vmor %vm4559, %vm4560
    %v4562 = vsel %vm4561, %v4554, %v4558
    %v4563 = vand.u32 2147483647, %v4506
    %vm4564 = vcmp.eq.f32.partialorder %v4563, 8.507059e+37
    %v4565 = vand.u32 %v4506, 2147483648
    %v4566 = vor.u32 1.1754944e-38, %v4565
    %v4567 = vsel %vm4564, %v4566, %v4562
    %v4568 = vmul.f32 1.0, %v4567
    %v4569 = vrcp.pop %v4507
    %v4570 = vmul.f32 %v4507, %v4569
    %v4571 = vsub.f32 1.0, %v4570
    %v4572 = vmul.f32 %v4569, %v4571
    %v4573 = vadd.f32 %v4569, %v4572
    %vm4574 = vweird.f32 %v4507
    %vm4575 = vweird.f32 %v4569
    %vm4576 = vmor %vm4574, %vm4575
    %v4577 = vsel %vm4576, %v4569, %v4573
    %v4578 = vand.u32 2147483647, %v4507
    %vm4579 = vcmp.eq.f32.partialorder %v4578, 8.507059e+37
    %v4580 = vand.u32 %v4507, 2147483648
    %v4581 = vor.u32 1.1754944e-38, %v4580
    %v4582 = vsel %vm4579, %v4581, %v4577
    %v4583 = vmul.f32 1.0, %v4582
    %v4584 = vrcp.pop %v4508
    %v4585 = vmul.f32 %v4508, %v4584
    %v4586 = vsub.f32 1.0, %v4585
    %v4587 = vmul.f32 %v4584, %v4586
    %v4588 = vadd.f32 %v4584, %v4587
    %vm4589 = vweird.f32 %v4508
    %vm4590 = vweird.f32 %v4584
    %vm4591 = vmor %vm4589, %vm4590
    %v4592 = vsel %vm4591, %v4584, %v4588
    %v4593 = vand.u32 2147483647, %v4508
    %vm4594 = vcmp.eq.f32.partialorder %v4593, 8.507059e+37
    %v4595 = vand.u32 %v4508, 2147483648
    %v4596 = vor.u32 1.1754944e-38, %v4595
    %v4597 = vsel %vm4594, %v4596, %v4592
    %v4598 = vmul.f32 1.0, %v4597
    %v4605 = vrot.slane %v4538, 6
    %v4606 = vrot.slane %v4553, 4
    %v4607 = vrot.slane %v4568, 2
    %v4608 = vrot.slane %v4598, 6
    %vm4609 = vcmask 1041408
    %v4610 = vsel %vm4609, %v4523, %v4605
    %vm4611 = vcmask 1045508
    %v4612 = vsel %vm4611, %v4606, %v4607
    %v4613 = vsel %vm2466, %v4610, %v4612
    %v4614 = vsel %vm4609, %v4583, %v4608
    %4617 = vst [vmem:[%s16] sm:$0xff] %v4613
    %4618 = vst [vmem:[%s16 + $0x8] sm:$0xf] %v4614
    %vm4619 = vcmask 58368
    %4620 = vst.msk [vmem:[#allocation10] sm:$0x3] %vm4619, %v2282
    %4621 = vst.msk [vmem:[#allocation11] sm:$0x3] %vm4619, %v2440
    // Predicated region
    $region82: #{conv_vae_forward.1} parent=1 // pred_check
      _
    $region83: #{conv_vae_forward.1} parent=1 // pred_check_branch
      %4623 = sbr.rel (0) target = $region85
    $region84: #{conv_vae_forward.1} parent=1 // pred_region
      _
    $region85: #{conv_vae_forward.1} parent=1 // pred_fallthru
      _
    // Predicated region
    $region86: #{conv_vae_forward.1} parent=1 // pred_check
      _
    $region87: #{conv_vae_forward.1} parent=1 // pred_check_branch
      %4625 = sbr.rel (0) target = $region89
    $region88: #{conv_vae_forward.1} parent=1 // pred_region
      %4627 = vsyncadd [#allocation4], 0
      %s4629 = sshll.u32 [#allocation10], 4
      %s4630 = int_to_ptr.vmem [resolvable:$true] %s4629
      %s4631 = sshll.u32 %s17, 4
      %s4632 = int_to_ptr.hbm [resolvable:$true] %s4631
      %4634 = dma.vmem_to_hbm [thread:$0]  %s4630, 32, %s4632, [#allocation4]
    $region89: #{conv_vae_forward.1} parent=1 // pred_fallthru
      _
    // Predicated region
    $region90: #{conv_vae_forward.1} parent=1 // pred_check
      _
    $region91: #{conv_vae_forward.1} parent=1 // pred_check_branch
      %4636 = sbr.rel (0) target = $region93
    $region92: #{conv_vae_forward.1} parent=1 // pred_region
      %4638 = vsyncadd [#allocation12], 0
      %s4640 = sshll.u32 [#allocation11], 4
      %s4641 = int_to_ptr.vmem [resolvable:$true] %s4640
      %s4642 = sshll.u32 %s18, 4
      %s4643 = int_to_ptr.hbm [resolvable:$true] %s4642
      %4645 = dma.vmem_to_hbm [thread:$0]  %s4641, 32, %s4643, [#allocation12]
    $region93: #{conv_vae_forward.1} parent=1 // pred_fallthru
      _
    // Predicated region
    $region94: #{conv_vae_forward.1} parent=1 // pred_check
      _
    $region95: #{conv_vae_forward.1} parent=1 // pred_check_branch
      %4647 = sbr.rel (0) target = $region97
    $region96: #{conv_vae_forward.1} parent=1 // pred_region
      _
    $region97: #{conv_vae_forward.1} parent=1 // pred_fallthru
      _
    // Predicated region
    $region98: #{conv_vae_forward.1} parent=1 // pred_check
      _
    $region99: #{conv_vae_forward.1} parent=1 // pred_check_branch
      %4649 = sbr.rel (0) target = $region101
    $region100: #{conv_vae_forward.1} parent=1 // pred_region
      %4651 = dma.done [#allocation4], 32
    $region101: #{conv_vae_forward.1} parent=1 // pred_fallthru
      _
    // Predicated region
    $region102: #{conv_vae_forward.1} parent=1 // pred_check
      _
    $region103: #{conv_vae_forward.1} parent=1 // pred_check_branch
      %4653 = sbr.rel (0) target = $region105
    $region104: #{conv_vae_forward.1} parent=1 // pred_region
      %4655 = dma.done [#allocation12], 32
    $region105: #{conv_vae_forward.1} parent=1 // pred_fallthru
      _
    %4656 = vsyncpa [#allocation3], 1
    %4657 = vsyncpa [#allocation6], 1
    %4658 = vsyncpa [#allocation9], 1
    %4659 = vsyncpa [#allocation4], 1
    %4660 = vsyncpa [#allocation12], 1

</llo_original>
